<compile_context>
chip_gen: v6e
topology: v6e:2x2x1
jax: 0.10.0
libtpu: 0.0.40
codegen_flags: <defaults>
</compile_context>

<pallas_src>
import math

import jax
import jax.numpy as jnp
from jax.experimental import pallas as pl
from jax.experimental.pallas import tpu as pltpu

# ----------------------------- configuration ------------------------------
PATCH = 4
IMG = 16
NUM_LAYERS = 2
DIM = 32
MLP_DIM = 64
NUM_HEADS = 4
NUM_CLASSES = 10
BATCH = 2

NUM_PATCHES = (IMG // PATCH) ** 2          # 16
SEQ = NUM_PATCHES + 1                      # 17 (cls token + patches)
HEAD_DIM = DIM // NUM_HEADS                # 8
PATCH_FEAT = 3 * PATCH * PATCH             # 48
EPS = 1e-5                                 # PyTorch LayerNorm default
SCALE = DIM ** (-0.5)                      # reference module scales by full dim
BF = jnp.bfloat16
F32 = jnp.float32
_SQRT_2_OVER_PI = math.sqrt(2.0 / math.pi)


# ------------------------------ in-kernel math -----------------------------
def _layernorm(x, w, b):
    mu = jnp.mean(x, axis=-1, keepdims=True)
    var = jnp.mean((x - mu) ** 2, axis=-1, keepdims=True)
    return (x - mu) * jax.lax.rsqrt(var + EPS) * w + b


def _gelu(x):
    # tanh-approximate GELU (transcendental on the EUP slot).
    return 0.5 * x * (1.0 + jnp.tanh(_SQRT_2_OVER_PI * (x + 0.044715 * x * x * x)))


def _softmax_last(x):
    x = x - jnp.max(x, axis=-1, keepdims=True)
    e = jnp.exp(x)
    return e * pl.reciprocal(jnp.sum(e, axis=-1, keepdims=True), approx=True)


# -------------------------------- fused kernel ------------------------------
def vit_kernel(patches_ref, pw_ref, btok_ref,
               ln1w_ref, ln1b_ref, wqkv_ref, bqkv_ref, wproj_ref, bproj_ref,
               ln2w_ref, ln2b_ref, w1_ref, b1_ref, w2_ref, b2_ref,
               fc_lnw_ref, fc_lnb_ref, fc_w_ref, fc_b_ref,
               o_ref):
    # ---- patch embedding (row 0 of patches is zero => pure cls+pos row) ----
    # patches_ref: (1, SEQ, PATCH_FEAT) bf16, pw_ref: (PATCH_FEAT, DIM) bf16
    # btok_ref:    (1, SEQ, DIM) f32  (cls+pos on row 0, pos+conv-bias on 1:)
    tok = (jnp.dot(patches_ref[0], pw_ref[...],
                   preferred_element_type=F32) + btok_ref[0])          # (SEQ, DIM)

    # ---- transformer encoder layers (unrolled, stacked weights) ----
    for l in range(NUM_LAYERS):
        # LayerNorm 1 + multi-head self attention
        h = _layernorm(tok, ln1w_ref[l], ln1b_ref[l])
        qkv = (jnp.dot(h.astype(BF), wqkv_ref[l],
                       preferred_element_type=F32) + bqkv_ref[l])      # (SEQ, 3*DIM)
        q = qkv[:, 0 * DIM:1 * DIM]
        k = qkv[:, 1 * DIM:2 * DIM]
        v = qkv[:, 2 * DIM:3 * DIM]

        qh = jnp.stack([q[:, i * HEAD_DIM:(i + 1) * HEAD_DIM]
                        for i in range(NUM_HEADS)], axis=0).astype(BF)  # (H,S,hd)
        kh = jnp.stack([k[:, i * HEAD_DIM:(i + 1) * HEAD_DIM]
                        for i in range(NUM_HEADS)], axis=0).astype(BF)
        vh = jnp.stack([v[:, i * HEAD_DIM:(i + 1) * HEAD_DIM]
                        for i in range(NUM_HEADS)], axis=0).astype(BF)

        # batched scores / context over the head axis (2 MXU calls per layer)
        scores = jax.lax.dot_general(
            qh, kh, (((2,), (2,)), ((0,), (0,))),
            preferred_element_type=F32) * SCALE                        # (H,S,S)
        attn = _softmax_last(scores)
        ctx = jax.lax.dot_general(
            attn.astype(BF), vh, (((2,), (1,)), ((0,), (0,))),
            preferred_element_type=F32)                                # (H,S,hd)

        attn_out = jnp.concatenate([ctx[i] for i in range(NUM_HEADS)],
                                   axis=-1)                            # (S, DIM)
        attn_out = (jnp.dot(attn_out.astype(BF), wproj_ref[l],
                            preferred_element_type=F32) + bproj_ref[l])
        tok = tok + attn_out                                           # residual 1

        # LayerNorm 2 + MLP
        h2 = _layernorm(tok, ln2w_ref[l], ln2b_ref[l])
        m = (jnp.dot(h2.astype(BF), w1_ref[l],
                     preferred_element_type=F32) + b1_ref[l])
        m = _gelu(m)
        m = (jnp.dot(m.astype(BF), w2_ref[l],
                     preferred_element_type=F32) + b2_ref[l])
        tok = tok + m                                                  # residual 2

    # ---- classifier head on the cls token ----
    cls = tok[0:1, :]                                                  # (1, DIM)
    hc = _layernorm(cls, fc_lnw_ref[...], fc_lnb_ref[...])
    o_ref[0] = (jnp.dot(hc.astype(BF), fc_w_ref[...],
                        preferred_element_type=F32) + fc_b_ref[...])   # (1, NC)


# ------------------------------ pallas wrapper -------------------------------
def _full_spec(shape):
    return pl.BlockSpec(shape, lambda i: (0,) * len(shape))


@jax.jit
def vit_forward(x, params):
    B = x.shape[0]
    gh = IMG // PATCH

    # --- XLA glue: NCHW -> (B, NUM_PATCHES, C*ps*ps), then zero cls row ---
    patches = x.reshape(B, 3, gh, PATCH, gh, PATCH)
    patches = patches.transpose(0, 2, 4, 1, 3, 5).reshape(
        B, NUM_PATCHES, PATCH_FEAT)
    patches = jnp.pad(patches, ((0, 0), (1, 0), (0, 0))).astype(BF)    # (B,SEQ,PF)

    # cls token + position embedding + conv bias folded into one add term.
    bias_tok = params["pos_emb"] + jnp.concatenate(
        [params["cls_token"],
         jnp.broadcast_to(params["patch_b"][None], (1, NUM_PATCHES, DIM))],
        axis=1)                                                        # (1,SEQ,DIM)

    stack = lambda name: jnp.stack([lp[name] for lp in params["layers"]], axis=0)

    args = (
        patches,
        params["patch_w"].astype(BF),
        bias_tok,
        stack("ln1_w"), stack("ln1_b"),
        stack("wqkv").astype(BF), stack("bqkv"),
        stack("wproj").astype(BF), stack("bproj"),
        stack("ln2_w"), stack("ln2_b"),
        stack("w1").astype(BF), stack("b1"),
        stack("w2").astype(BF), stack("b2"),
        params["fc_lnw"], params["fc_lnb"],
        params["fc_w"].astype(BF), params["fc_b"],
    )

    in_specs = [
        pl.BlockSpec((1, SEQ, PATCH_FEAT), lambda i: (i, 0, 0)),
        _full_spec((PATCH_FEAT, DIM)),
        _full_spec((1, SEQ, DIM)),
        _full_spec((NUM_LAYERS, 1, DIM)), _full_spec((NUM_LAYERS, 1, DIM)),
        _full_spec((NUM_LAYERS, DIM, 3 * DIM)), _full_spec((NUM_LAYERS, 1, 3 * DIM)),
        _full_spec((NUM_LAYERS, DIM, DIM)), _full_spec((NUM_LAYERS, 1, DIM)),
        _full_spec((NUM_LAYERS, 1, DIM)), _full_spec((NUM_LAYERS, 1, DIM)),
        _full_spec((NUM_LAYERS, DIM, MLP_DIM)), _full_spec((NUM_LAYERS, 1, MLP_DIM)),
        _full_spec((NUM_LAYERS, MLP_DIM, DIM)), _full_spec((NUM_LAYERS, 1, DIM)),
        _full_spec((1, DIM)), _full_spec((1, DIM)),
        _full_spec((DIM, NUM_CLASSES)), _full_spec((1, NUM_CLASSES)),
    ]

    logits = pl.pallas_call(
        vit_kernel,
        out_shape=jax.ShapeDtypeStruct((B, 1, NUM_CLASSES), jnp.float32),
        grid=(B,),
        in_specs=in_specs,
        out_specs=pl.BlockSpec((1, 1, NUM_CLASSES), lambda i: (i, 0, 0)),
        compiler_params=pltpu.CompilerParams(
            dimension_semantics=("parallel",)),
    )(*args)
    return logits[:, 0, :]


# ------------------------------ parameter init ------------------------------
def _xavier(key, shape):
    fan_in, fan_out = shape
    lim = math.sqrt(6.0 / (fan_in + fan_out))
    return jax.random.uniform(key, shape, jnp.float32, -lim, lim)


def init_params(key):
    keys = iter(jax.random.split(key, 64))
    params = {}
    # patch embedding conv as matmul: Wm[(c,u,v), o] = Wconv[o, c, u, v]
    params["patch_w"] = _xavier(next(keys), (PATCH_FEAT, DIM))
    params["patch_b"] = jnp.zeros((1, DIM), jnp.float32)
    params["cls_token"] = jnp.zeros((1, 1, DIM), jnp.float32)
    params["pos_emb"] = 0.02 * jax.random.normal(
        next(keys), (1, SEQ, DIM), jnp.float32)
    layers = []
    for _ in range(NUM_LAYERS):
        lp = {
            "ln1_w": jnp.ones((1, DIM), jnp.float32),
            "ln1_b": jnp.zeros((1, DIM), jnp.float32),
            "wqkv": _xavier(next(keys), (DIM, 3 * DIM)),
            "bqkv": jnp.zeros((1, 3 * DIM), jnp.float32),
            "wproj": _xavier(next(keys), (DIM, DIM)),
            "bproj": jnp.zeros((1, DIM), jnp.float32),
            "ln2_w": jnp.ones((1, DIM), jnp.float32),
            "ln2_b": jnp.zeros((1, DIM), jnp.float32),
            "w1": _xavier(next(keys), (DIM, MLP_DIM)),
            "b1": jnp.zeros((1, MLP_DIM), jnp.float32),
            "w2": _xavier(next(keys), (MLP_DIM, DIM)),
            "b2": jnp.zeros((1, DIM), jnp.float32),
        }
        layers.append(lp)
    params["layers"] = layers
    params["fc_lnw"] = jnp.ones((1, DIM), jnp.float32)
    params["fc_lnb"] = jnp.zeros((1, DIM), jnp.float32)
    params["fc_w"] = _xavier(next(keys), (DIM, NUM_CLASSES))
    params["fc_b"] = jnp.zeros((1, NUM_CLASSES), jnp.float32)
    return params


# ----------------------------------- main ------------------------------------
if __name__ == "__main__":
    key = jax.random.PRNGKey(0)
    pkey, xkey = jax.random.split(key)
    params = init_params(pkey)
    x = jax.random.normal(xkey, (BATCH, 3, IMG, IMG), jnp.float32)

    logits = vit_forward(x, params)
    jax.block_until_ready(logits)
    assert logits.shape == (BATCH, NUM_CLASSES)
    assert bool(jnp.all(jnp.isfinite(logits)))
    print("KERNEL_OK")
</pallas_src>

<mosaic_0001>
module attributes {stable_mosaic.version = 11 : i64} {
  func.func @vit_kernel(%arg0: i32, %arg1: memref<1x17x48xbf16, #tpu.memory_space<vmem>>, %arg2: memref<48x32xbf16, #tpu.memory_space<vmem>>, %arg3: memref<1x17x32xf32, #tpu.memory_space<vmem>>, %arg4: memref<2x1x32xf32, #tpu.memory_space<vmem>>, %arg5: memref<2x1x32xf32, #tpu.memory_space<vmem>>, %arg6: memref<2x32x96xbf16, #tpu.memory_space<vmem>>, %arg7: memref<2x1x96xf32, #tpu.memory_space<vmem>>, %arg8: memref<2x32x32xbf16, #tpu.memory_space<vmem>>, %arg9: memref<2x1x32xf32, #tpu.memory_space<vmem>>, %arg10: memref<2x1x32xf32, #tpu.memory_space<vmem>>, %arg11: memref<2x1x32xf32, #tpu.memory_space<vmem>>, %arg12: memref<2x32x64xbf16, #tpu.memory_space<vmem>>, %arg13: memref<2x1x64xf32, #tpu.memory_space<vmem>>, %arg14: memref<2x64x32xbf16, #tpu.memory_space<vmem>>, %arg15: memref<2x1x32xf32, #tpu.memory_space<vmem>>, %arg16: memref<1x32xf32, #tpu.memory_space<vmem>>, %arg17: memref<1x32xf32, #tpu.memory_space<vmem>>, %arg18: memref<32x10xbf16, #tpu.memory_space<vmem>>, %arg19: memref<1x10xf32, #tpu.memory_space<vmem>>, %arg20: memref<1x1x10xf32, #tpu.memory_space<vmem>>) attributes {dimension_semantics = [#tpu.dimension_semantics<parallel>], iteration_bounds = array<i64: 2>, scalar_prefetch = 0 : i64, scratch_operands = 0 : i64, tpu.core_type = #tpu.core_type<tc>, window_params = [{transform_indices = @transform_0, window_bounds = array<i64: 1, 17, 48>}, {pipeline_mode = #tpu.pipeline_mode<synchronous>, transform_indices = @transform_1, window_bounds = array<i64: 48, 32>}, {pipeline_mode = #tpu.pipeline_mode<synchronous>, transform_indices = @transform_2, window_bounds = array<i64: 1, 17, 32>}, {pipeline_mode = #tpu.pipeline_mode<synchronous>, transform_indices = @transform_3, window_bounds = array<i64: 2, 1, 32>}, {pipeline_mode = #tpu.pipeline_mode<synchronous>, transform_indices = @transform_4, window_bounds = array<i64: 2, 1, 32>}, {pipeline_mode = #tpu.pipeline_mode<synchronous>, transform_indices = @transform_5, window_bounds = array<i64: 2, 32, 96>}, {pipeline_mode = #tpu.pipeline_mode<synchronous>, transform_indices = @transform_6, window_bounds = array<i64: 2, 1, 96>}, {pipeline_mode = #tpu.pipeline_mode<synchronous>, transform_indices = @transform_7, window_bounds = array<i64: 2, 32, 32>}, {pipeline_mode = #tpu.pipeline_mode<synchronous>, transform_indices = @transform_8, window_bounds = array<i64: 2, 1, 32>}, {pipeline_mode = #tpu.pipeline_mode<synchronous>, transform_indices = @transform_9, window_bounds = array<i64: 2, 1, 32>}, {pipeline_mode = #tpu.pipeline_mode<synchronous>, transform_indices = @transform_10, window_bounds = array<i64: 2, 1, 32>}, {pipeline_mode = #tpu.pipeline_mode<synchronous>, transform_indices = @transform_11, window_bounds = array<i64: 2, 32, 64>}, {pipeline_mode = #tpu.pipeline_mode<synchronous>, transform_indices = @transform_12, window_bounds = array<i64: 2, 1, 64>}, {pipeline_mode = #tpu.pipeline_mode<synchronous>, transform_indices = @transform_13, window_bounds = array<i64: 2, 64, 32>}, {pipeline_mode = #tpu.pipeline_mode<synchronous>, transform_indices = @transform_14, window_bounds = array<i64: 2, 1, 32>}, {pipeline_mode = #tpu.pipeline_mode<synchronous>, transform_indices = @transform_15, window_bounds = array<i64: 1, 32>}, {pipeline_mode = #tpu.pipeline_mode<synchronous>, transform_indices = @transform_16, window_bounds = array<i64: 1, 32>}, {pipeline_mode = #tpu.pipeline_mode<synchronous>, transform_indices = @transform_17, window_bounds = array<i64: 32, 10>}, {pipeline_mode = #tpu.pipeline_mode<synchronous>, transform_indices = @transform_18, window_bounds = array<i64: 1, 10>}, {transform_indices = @transform_19, window_bounds = array<i64: 1, 1, 10>}]} {
    %c0 = arith.constant 0 : index
    %c0_0 = arith.constant 0 : index
    %c0_1 = arith.constant 0 : index
    %0 = vector.load %arg1[%c0, %c0_0, %c0_1] : memref<1x17x48xbf16, #tpu.memory_space<vmem>>, vector<1x17x48xbf16>
    %1 = vector.shape_cast %0 : vector<1x17x48xbf16> to vector<17x48xbf16>
    %c0_2 = arith.constant 0 : index
    %c0_3 = arith.constant 0 : index
    %2 = vector.load %arg2[%c0_2, %c0_3] : memref<48x32xbf16, #tpu.memory_space<vmem>>, vector<48x32xbf16>
    %cst = arith.constant dense<0.000000e+00> : vector<17x32xf32>
    %3 = tpu.matmul %1, %2, %cst {dimension_numbers = #tpu.dot_dimension_numbers<[1], [0], [0], [1], [0, 0, 1, 1], [], []>} : vector<17x48xbf16>, vector<48x32xbf16>, vector<17x32xf32> -> vector<17x32xf32>
    %c0_4 = arith.constant 0 : index
    %c0_5 = arith.constant 0 : index
    %c0_6 = arith.constant 0 : index
    %4 = vector.load %arg3[%c0_4, %c0_5, %c0_6] : memref<1x17x32xf32, #tpu.memory_space<vmem>>, vector<1x17x32xf32>
    %5 = vector.shape_cast %4 : vector<1x17x32xf32> to vector<17x32xf32>
    %6 = arith.addf %3, %5 : vector<17x32xf32>
    %c0_7 = arith.constant 0 : index
    %c0_8 = arith.constant 0 : index
    %c0_9 = arith.constant 0 : index
    %7 = vector.load %arg4[%c0_7, %c0_8, %c0_9] : memref<2x1x32xf32, #tpu.memory_space<vmem>>, vector<1x1x32xf32>
    %8 = vector.shape_cast %7 : vector<1x1x32xf32> to vector<1x32xf32>
    %c0_10 = arith.constant 0 : index
    %c0_11 = arith.constant 0 : index
    %c0_12 = arith.constant 0 : index
    %9 = vector.load %arg5[%c0_10, %c0_11, %c0_12] : memref<2x1x32xf32, #tpu.memory_space<vmem>>, vector<1x1x32xf32>
    %10 = vector.shape_cast %9 : vector<1x1x32xf32> to vector<1x32xf32>
    %cst_13 = arith.constant dense<0.000000e+00> : vector<17xf32>
    %11 = vector.multi_reduction <add>, %6, %cst_13 [1] : vector<17x32xf32> to vector<17xf32>
    %12 = vector.shape_cast %11 : vector<17xf32> to vector<17x1xf32>
    %cst_14 = arith.constant 3.200000e+01 : f32
    %13 = vector.broadcast %cst_14 : f32 to vector<17x1xf32>
    %14 = arith.divf %12, %13 : vector<17x1xf32>
    %15 = vector.broadcast %14 : vector<17x1xf32> to vector<17x32xf32>
    %16 = arith.subf %6, %15 : vector<17x32xf32>
    %17 = arith.mulf %16, %16 : vector<17x32xf32>
    %cst_15 = arith.constant dense<0.000000e+00> : vector<17xf32>
    %18 = vector.multi_reduction <add>, %17, %cst_15 [1] : vector<17x32xf32> to vector<17xf32>
    %19 = vector.shape_cast %18 : vector<17xf32> to vector<17x1xf32>
    %cst_16 = arith.constant 3.200000e+01 : f32
    %20 = vector.broadcast %cst_16 : f32 to vector<17x1xf32>
    %21 = arith.divf %19, %20 : vector<17x1xf32>
    %22 = vector.broadcast %14 : vector<17x1xf32> to vector<17x32xf32>
    %23 = arith.subf %6, %22 : vector<17x32xf32>
    %cst_17 = arith.constant 9.99999974E-6 : f32
    %24 = vector.broadcast %cst_17 : f32 to vector<17x1xf32>
    %25 = arith.addf %21, %24 : vector<17x1xf32>
    %26 = math.rsqrt %25 : vector<17x1xf32>
    %27 = vector.broadcast %26 : vector<17x1xf32> to vector<17x32xf32>
    %28 = arith.mulf %23, %27 : vector<17x32xf32>
    %29 = vector.broadcast %8 : vector<1x32xf32> to vector<17x32xf32>
    %30 = arith.mulf %28, %29 : vector<17x32xf32>
    %31 = vector.broadcast %10 : vector<1x32xf32> to vector<17x32xf32>
    %32 = arith.addf %30, %31 : vector<17x32xf32>
    %33 = arith.truncf %32 : vector<17x32xf32> to vector<17x32xbf16>
    %c0_18 = arith.constant 0 : index
    %c0_19 = arith.constant 0 : index
    %c0_20 = arith.constant 0 : index
    %34 = vector.load %arg6[%c0_18, %c0_19, %c0_20] : memref<2x32x96xbf16, #tpu.memory_space<vmem>>, vector<1x32x96xbf16>
    %35 = vector.shape_cast %34 : vector<1x32x96xbf16> to vector<32x96xbf16>
    %cst_21 = arith.constant dense<0.000000e+00> : vector<17x96xf32>
    %36 = tpu.matmul %33, %35, %cst_21 {dimension_numbers = #tpu.dot_dimension_numbers<[1], [0], [0], [1], [0, 0, 1, 1], [], []>} : vector<17x32xbf16>, vector<32x96xbf16>, vector<17x96xf32> -> vector<17x96xf32>
    %c0_22 = arith.constant 0 : index
    %c0_23 = arith.constant 0 : index
    %c0_24 = arith.constant 0 : index
    %37 = vector.load %arg7[%c0_22, %c0_23, %c0_24] : memref<2x1x96xf32, #tpu.memory_space<vmem>>, vector<1x1x96xf32>
    %38 = vector.shape_cast %37 : vector<1x1x96xf32> to vector<1x96xf32>
    %39 = vector.broadcast %38 : vector<1x96xf32> to vector<17x96xf32>
    %40 = arith.addf %36, %39 : vector<17x96xf32>
    %41 = vector.extract_strided_slice %40 {offsets = [0, 0], sizes = [17, 32], strides = [1, 1]} : vector<17x96xf32> to vector<17x32xf32>
    %42 = vector.extract_strided_slice %40 {offsets = [0, 32], sizes = [17, 32], strides = [1, 1]} : vector<17x96xf32> to vector<17x32xf32>
    %43 = vector.extract_strided_slice %40 {offsets = [0, 64], sizes = [17, 32], strides = [1, 1]} : vector<17x96xf32> to vector<17x32xf32>
    %44 = vector.extract_strided_slice %41 {offsets = [0, 0], sizes = [17, 8], strides = [1, 1]} : vector<17x32xf32> to vector<17x8xf32>
    %45 = vector.extract_strided_slice %41 {offsets = [0, 8], sizes = [17, 8], strides = [1, 1]} : vector<17x32xf32> to vector<17x8xf32>
    %46 = vector.extract_strided_slice %41 {offsets = [0, 16], sizes = [17, 8], strides = [1, 1]} : vector<17x32xf32> to vector<17x8xf32>
    %47 = vector.extract_strided_slice %41 {offsets = [0, 24], sizes = [17, 8], strides = [1, 1]} : vector<17x32xf32> to vector<17x8xf32>
    %48 = vector.shape_cast %44 : vector<17x8xf32> to vector<1x17x8xf32>
    %49 = vector.shape_cast %45 : vector<17x8xf32> to vector<1x17x8xf32>
    %50 = vector.shape_cast %46 : vector<17x8xf32> to vector<1x17x8xf32>
    %51 = vector.shape_cast %47 : vector<17x8xf32> to vector<1x17x8xf32>
    %52 = tpu.concatenate %48, %49, %50, %51 in 0 : vector<1x17x8xf32>, vector<1x17x8xf32>, vector<1x17x8xf32>, vector<1x17x8xf32> -> vector<4x17x8xf32>
    %53 = arith.truncf %52 : vector<4x17x8xf32> to vector<4x17x8xbf16>
    %54 = vector.extract_strided_slice %42 {offsets = [0, 0], sizes = [17, 8], strides = [1, 1]} : vector<17x32xf32> to vector<17x8xf32>
    %55 = vector.extract_strided_slice %42 {offsets = [0, 8], sizes = [17, 8], strides = [1, 1]} : vector<17x32xf32> to vector<17x8xf32>
    %56 = vector.extract_strided_slice %42 {offsets = [0, 16], sizes = [17, 8], strides = [1, 1]} : vector<17x32xf32> to vector<17x8xf32>
    %57 = vector.extract_strided_slice %42 {offsets = [0, 24], sizes = [17, 8], strides = [1, 1]} : vector<17x32xf32> to vector<17x8xf32>
    %58 = vector.shape_cast %54 : vector<17x8xf32> to vector<1x17x8xf32>
    %59 = vector.shape_cast %55 : vector<17x8xf32> to vector<1x17x8xf32>
    %60 = vector.shape_cast %56 : vector<17x8xf32> to vector<1x17x8xf32>
    %61 = vector.shape_cast %57 : vector<17x8xf32> to vector<1x17x8xf32>
    %62 = tpu.concatenate %58, %59, %60, %61 in 0 : vector<1x17x8xf32>, vector<1x17x8xf32>, vector<1x17x8xf32>, vector<1x17x8xf32> -> vector<4x17x8xf32>
    %63 = arith.truncf %62 : vector<4x17x8xf32> to vector<4x17x8xbf16>
    %64 = vector.extract_strided_slice %43 {offsets = [0, 0], sizes = [17, 8], strides = [1, 1]} : vector<17x32xf32> to vector<17x8xf32>
    %65 = vector.extract_strided_slice %43 {offsets = [0, 8], sizes = [17, 8], strides = [1, 1]} : vector<17x32xf32> to vector<17x8xf32>
    %66 = vector.extract_strided_slice %43 {offsets = [0, 16], sizes = [17, 8], strides = [1, 1]} : vector<17x32xf32> to vector<17x8xf32>
    %67 = vector.extract_strided_slice %43 {offsets = [0, 24], sizes = [17, 8], strides = [1, 1]} : vector<17x32xf32> to vector<17x8xf32>
    %68 = vector.shape_cast %64 : vector<17x8xf32> to vector<1x17x8xf32>
    %69 = vector.shape_cast %65 : vector<17x8xf32> to vector<1x17x8xf32>
    %70 = vector.shape_cast %66 : vector<17x8xf32> to vector<1x17x8xf32>
    %71 = vector.shape_cast %67 : vector<17x8xf32> to vector<1x17x8xf32>
    %72 = tpu.concatenate %68, %69, %70, %71 in 0 : vector<1x17x8xf32>, vector<1x17x8xf32>, vector<1x17x8xf32>, vector<1x17x8xf32> -> vector<4x17x8xf32>
    %73 = arith.truncf %72 : vector<4x17x8xf32> to vector<4x17x8xbf16>
    %cst_25 = arith.constant dense<0.000000e+00> : vector<4x17x17xf32>
    %74 = tpu.matmul %53, %63, %cst_25 {dimension_numbers = #tpu.dot_dimension_numbers<[2], [2], [1], [1], [0, 0, 0, 1, 1, 1], [0], [0]>} : vector<4x17x8xbf16>, vector<4x17x8xbf16>, vector<4x17x17xf32> -> vector<4x17x17xf32>
    %cst_26 = arith.constant 0.176776692 : f32
    %75 = vector.broadcast %cst_26 : f32 to vector<4x17x17xf32>
    %76 = arith.mulf %74, %75 : vector<4x17x17xf32>
    %cst_27 = arith.constant dense<0xFF800000> : vector<4x17xf32>
    %77 = vector.multi_reduction <maximumf>, %76, %cst_27 [2] : vector<4x17x17xf32> to vector<4x17xf32>
    %78 = vector.shape_cast %77 : vector<4x17xf32> to vector<4x17x1xf32>
    %79 = vector.broadcast %78 : vector<4x17x1xf32> to vector<4x17x17xf32>
    %80 = arith.subf %76, %79 : vector<4x17x17xf32>
    %81 = math.exp %80 : vector<4x17x17xf32>
    %cst_28 = arith.constant dense<0.000000e+00> : vector<4x17xf32>
    %82 = vector.multi_reduction <add>, %81, %cst_28 [2] : vector<4x17x17xf32> to vector<4x17xf32>
    %83 = vector.shape_cast %82 : vector<4x17xf32> to vector<4x17x1xf32>
    %84 = tpu.reciprocal %83 {approx = true} : vector<4x17x1xf32> -> vector<4x17x1xf32>
    %85 = vector.broadcast %84 : vector<4x17x1xf32> to vector<4x17x17xf32>
    %86 = arith.mulf %81, %85 : vector<4x17x17xf32>
    %87 = arith.truncf %86 : vector<4x17x17xf32> to vector<4x17x17xbf16>
    %cst_29 = arith.constant dense<0.000000e+00> : vector<4x17x8xf32>
    %88 = tpu.matmul %87, %73, %cst_29 {dimension_numbers = #tpu.dot_dimension_numbers<[2], [1], [1], [2], [0, 0, 0, 1, 1, 2], [0], [0]>} : vector<4x17x17xbf16>, vector<4x17x8xbf16>, vector<4x17x8xf32> -> vector<4x17x8xf32>
    %89 = vector.extract_strided_slice %88 {offsets = [0, 0, 0], sizes = [1, 17, 8], strides = [1, 1, 1]} : vector<4x17x8xf32> to vector<1x17x8xf32>
    %90 = vector.shape_cast %89 : vector<1x17x8xf32> to vector<17x8xf32>
    %91 = vector.extract_strided_slice %88 {offsets = [1, 0, 0], sizes = [1, 17, 8], strides = [1, 1, 1]} : vector<4x17x8xf32> to vector<1x17x8xf32>
    %92 = vector.shape_cast %91 : vector<1x17x8xf32> to vector<17x8xf32>
    %93 = vector.extract_strided_slice %88 {offsets = [2, 0, 0], sizes = [1, 17, 8], strides = [1, 1, 1]} : vector<4x17x8xf32> to vector<1x17x8xf32>
    %94 = vector.shape_cast %93 : vector<1x17x8xf32> to vector<17x8xf32>
    %95 = vector.extract_strided_slice %88 {offsets = [3, 0, 0], sizes = [1, 17, 8], strides = [1, 1, 1]} : vector<4x17x8xf32> to vector<1x17x8xf32>
    %96 = vector.shape_cast %95 : vector<1x17x8xf32> to vector<17x8xf32>
    %97 = tpu.concatenate %90, %92, %94, %96 in 1 : vector<17x8xf32>, vector<17x8xf32>, vector<17x8xf32>, vector<17x8xf32> -> vector<17x32xf32>
    %98 = arith.truncf %97 : vector<17x32xf32> to vector<17x32xbf16>
    %c0_30 = arith.constant 0 : index
    %c0_31 = arith.constant 0 : index
    %c0_32 = arith.constant 0 : index
    %99 = vector.load %arg8[%c0_30, %c0_31, %c0_32] : memref<2x32x32xbf16, #tpu.memory_space<vmem>>, vector<1x32x32xbf16>
    %100 = vector.shape_cast %99 : vector<1x32x32xbf16> to vector<32x32xbf16>
    %cst_33 = arith.constant dense<0.000000e+00> : vector<17x32xf32>
    %101 = tpu.matmul %98, %100, %cst_33 {dimension_numbers = #tpu.dot_dimension_numbers<[1], [0], [0], [1], [0, 0, 1, 1], [], []>} : vector<17x32xbf16>, vector<32x32xbf16>, vector<17x32xf32> -> vector<17x32xf32>
    %c0_34 = arith.constant 0 : index
    %c0_35 = arith.constant 0 : index
    %c0_36 = arith.constant 0 : index
    %102 = vector.load %arg9[%c0_34, %c0_35, %c0_36] : memref<2x1x32xf32, #tpu.memory_space<vmem>>, vector<1x1x32xf32>
    %103 = vector.shape_cast %102 : vector<1x1x32xf32> to vector<1x32xf32>
    %104 = vector.broadcast %103 : vector<1x32xf32> to vector<17x32xf32>
    %105 = arith.addf %101, %104 : vector<17x32xf32>
    %106 = arith.addf %6, %105 : vector<17x32xf32>
    %c0_37 = arith.constant 0 : index
    %c0_38 = arith.constant 0 : index
    %c0_39 = arith.constant 0 : index
    %107 = vector.load %arg10[%c0_37, %c0_38, %c0_39] : memref<2x1x32xf32, #tpu.memory_space<vmem>>, vector<1x1x32xf32>
    %108 = vector.shape_cast %107 : vector<1x1x32xf32> to vector<1x32xf32>
    %c0_40 = arith.constant 0 : index
    %c0_41 = arith.constant 0 : index
    %c0_42 = arith.constant 0 : index
    %109 = vector.load %arg11[%c0_40, %c0_41, %c0_42] : memref<2x1x32xf32, #tpu.memory_space<vmem>>, vector<1x1x32xf32>
    %110 = vector.shape_cast %109 : vector<1x1x32xf32> to vector<1x32xf32>
    %cst_43 = arith.constant dense<0.000000e+00> : vector<17xf32>
    %111 = vector.multi_reduction <add>, %106, %cst_43 [1] : vector<17x32xf32> to vector<17xf32>
    %112 = vector.shape_cast %111 : vector<17xf32> to vector<17x1xf32>
    %cst_44 = arith.constant 3.200000e+01 : f32
    %113 = vector.broadcast %cst_44 : f32 to vector<17x1xf32>
    %114 = arith.divf %112, %113 : vector<17x1xf32>
    %115 = vector.broadcast %114 : vector<17x1xf32> to vector<17x32xf32>
    %116 = arith.subf %106, %115 : vector<17x32xf32>
    %117 = arith.mulf %116, %116 : vector<17x32xf32>
    %cst_45 = arith.constant dense<0.000000e+00> : vector<17xf32>
    %118 = vector.multi_reduction <add>, %117, %cst_45 [1] : vector<17x32xf32> to vector<17xf32>
    %119 = vector.shape_cast %118 : vector<17xf32> to vector<17x1xf32>
    %cst_46 = arith.constant 3.200000e+01 : f32
    %120 = vector.broadcast %cst_46 : f32 to vector<17x1xf32>
    %121 = arith.divf %119, %120 : vector<17x1xf32>
    %122 = vector.broadcast %114 : vector<17x1xf32> to vector<17x32xf32>
    %123 = arith.subf %106, %122 : vector<17x32xf32>
    %cst_47 = arith.constant 9.99999974E-6 : f32
    %124 = vector.broadcast %cst_47 : f32 to vector<17x1xf32>
    %125 = arith.addf %121, %124 : vector<17x1xf32>
    %126 = math.rsqrt %125 : vector<17x1xf32>
    %127 = vector.broadcast %126 : vector<17x1xf32> to vector<17x32xf32>
    %128 = arith.mulf %123, %127 : vector<17x32xf32>
    %129 = vector.broadcast %108 : vector<1x32xf32> to vector<17x32xf32>
    %130 = arith.mulf %128, %129 : vector<17x32xf32>
    %131 = vector.broadcast %110 : vector<1x32xf32> to vector<17x32xf32>
    %132 = arith.addf %130, %131 : vector<17x32xf32>
    %133 = arith.truncf %132 : vector<17x32xf32> to vector<17x32xbf16>
    %c0_48 = arith.constant 0 : index
    %c0_49 = arith.constant 0 : index
    %c0_50 = arith.constant 0 : index
    %134 = vector.load %arg12[%c0_48, %c0_49, %c0_50] : memref<2x32x64xbf16, #tpu.memory_space<vmem>>, vector<1x32x64xbf16>
    %135 = vector.shape_cast %134 : vector<1x32x64xbf16> to vector<32x64xbf16>
    %cst_51 = arith.constant dense<0.000000e+00> : vector<17x64xf32>
    %136 = tpu.matmul %133, %135, %cst_51 {dimension_numbers = #tpu.dot_dimension_numbers<[1], [0], [0], [1], [0, 0, 1, 1], [], []>} : vector<17x32xbf16>, vector<32x64xbf16>, vector<17x64xf32> -> vector<17x64xf32>
    %c0_52 = arith.constant 0 : index
    %c0_53 = arith.constant 0 : index
    %c0_54 = arith.constant 0 : index
    %137 = vector.load %arg13[%c0_52, %c0_53, %c0_54] : memref<2x1x64xf32, #tpu.memory_space<vmem>>, vector<1x1x64xf32>
    %138 = vector.shape_cast %137 : vector<1x1x64xf32> to vector<1x64xf32>
    %139 = vector.broadcast %138 : vector<1x64xf32> to vector<17x64xf32>
    %140 = arith.addf %136, %139 : vector<17x64xf32>
    %cst_55 = arith.constant 5.000000e-01 : f32
    %141 = vector.broadcast %cst_55 : f32 to vector<17x64xf32>
    %142 = arith.mulf %141, %140 : vector<17x64xf32>
    %cst_56 = arith.constant 4.471500e-02 : f32
    %143 = vector.broadcast %cst_56 : f32 to vector<17x64xf32>
    %144 = arith.mulf %143, %140 : vector<17x64xf32>
    %145 = arith.mulf %144, %140 : vector<17x64xf32>
    %146 = arith.mulf %145, %140 : vector<17x64xf32>
    %147 = arith.addf %140, %146 : vector<17x64xf32>
    %cst_57 = arith.constant 0.797884583 : f32
    %148 = vector.broadcast %cst_57 : f32 to vector<17x64xf32>
    %149 = arith.mulf %148, %147 : vector<17x64xf32>
    %150 = math.tanh %149 : vector<17x64xf32>
    %cst_58 = arith.constant 1.000000e+00 : f32
    %151 = vector.broadcast %cst_58 : f32 to vector<17x64xf32>
    %152 = arith.addf %151, %150 : vector<17x64xf32>
    %153 = arith.mulf %142, %152 : vector<17x64xf32>
    %154 = arith.truncf %153 : vector<17x64xf32> to vector<17x64xbf16>
    %c0_59 = arith.constant 0 : index
    %c0_60 = arith.constant 0 : index
    %c0_61 = arith.constant 0 : index
    %155 = vector.load %arg14[%c0_59, %c0_60, %c0_61] : memref<2x64x32xbf16, #tpu.memory_space<vmem>>, vector<1x64x32xbf16>
    %156 = vector.shape_cast %155 : vector<1x64x32xbf16> to vector<64x32xbf16>
    %cst_62 = arith.constant dense<0.000000e+00> : vector<17x32xf32>
    %157 = tpu.matmul %154, %156, %cst_62 {dimension_numbers = #tpu.dot_dimension_numbers<[1], [0], [0], [1], [0, 0, 1, 1], [], []>} : vector<17x64xbf16>, vector<64x32xbf16>, vector<17x32xf32> -> vector<17x32xf32>
    %c0_63 = arith.constant 0 : index
    %c0_64 = arith.constant 0 : index
    %c0_65 = arith.constant 0 : index
    %158 = vector.load %arg15[%c0_63, %c0_64, %c0_65] : memref<2x1x32xf32, #tpu.memory_space<vmem>>, vector<1x1x32xf32>
    %159 = vector.shape_cast %158 : vector<1x1x32xf32> to vector<1x32xf32>
    %160 = vector.broadcast %159 : vector<1x32xf32> to vector<17x32xf32>
    %161 = arith.addf %157, %160 : vector<17x32xf32>
    %162 = arith.addf %106, %161 : vector<17x32xf32>
    %c1 = arith.constant 1 : index
    %c0_66 = arith.constant 0 : index
    %c0_67 = arith.constant 0 : index
    %163 = vector.load %arg4[%c1, %c0_66, %c0_67] : memref<2x1x32xf32, #tpu.memory_space<vmem>>, vector<1x1x32xf32>
    %164 = vector.shape_cast %163 : vector<1x1x32xf32> to vector<1x32xf32>
    %c1_68 = arith.constant 1 : index
    %c0_69 = arith.constant 0 : index
    %c0_70 = arith.constant 0 : index
    %165 = vector.load %arg5[%c1_68, %c0_69, %c0_70] : memref<2x1x32xf32, #tpu.memory_space<vmem>>, vector<1x1x32xf32>
    %166 = vector.shape_cast %165 : vector<1x1x32xf32> to vector<1x32xf32>
    %cst_71 = arith.constant dense<0.000000e+00> : vector<17xf32>
    %167 = vector.multi_reduction <add>, %162, %cst_71 [1] : vector<17x32xf32> to vector<17xf32>
    %168 = vector.shape_cast %167 : vector<17xf32> to vector<17x1xf32>
    %cst_72 = arith.constant 3.200000e+01 : f32
    %169 = vector.broadcast %cst_72 : f32 to vector<17x1xf32>
    %170 = arith.divf %168, %169 : vector<17x1xf32>
    %171 = vector.broadcast %170 : vector<17x1xf32> to vector<17x32xf32>
    %172 = arith.subf %162, %171 : vector<17x32xf32>
    %173 = arith.mulf %172, %172 : vector<17x32xf32>
    %cst_73 = arith.constant dense<0.000000e+00> : vector<17xf32>
    %174 = vector.multi_reduction <add>, %173, %cst_73 [1] : vector<17x32xf32> to vector<17xf32>
    %175 = vector.shape_cast %174 : vector<17xf32> to vector<17x1xf32>
    %cst_74 = arith.constant 3.200000e+01 : f32
    %176 = vector.broadcast %cst_74 : f32 to vector<17x1xf32>
    %177 = arith.divf %175, %176 : vector<17x1xf32>
    %178 = vector.broadcast %170 : vector<17x1xf32> to vector<17x32xf32>
    %179 = arith.subf %162, %178 : vector<17x32xf32>
    %cst_75 = arith.constant 9.99999974E-6 : f32
    %180 = vector.broadcast %cst_75 : f32 to vector<17x1xf32>
    %181 = arith.addf %177, %180 : vector<17x1xf32>
    %182 = math.rsqrt %181 : vector<17x1xf32>
    %183 = vector.broadcast %182 : vector<17x1xf32> to vector<17x32xf32>
    %184 = arith.mulf %179, %183 : vector<17x32xf32>
    %185 = vector.broadcast %164 : vector<1x32xf32> to vector<17x32xf32>
    %186 = arith.mulf %184, %185 : vector<17x32xf32>
    %187 = vector.broadcast %166 : vector<1x32xf32> to vector<17x32xf32>
    %188 = arith.addf %186, %187 : vector<17x32xf32>
    %189 = arith.truncf %188 : vector<17x32xf32> to vector<17x32xbf16>
    %c1_76 = arith.constant 1 : index
    %c0_77 = arith.constant 0 : index
    %c0_78 = arith.constant 0 : index
    %190 = vector.load %arg6[%c1_76, %c0_77, %c0_78] : memref<2x32x96xbf16, #tpu.memory_space<vmem>>, vector<1x32x96xbf16>
    %191 = vector.shape_cast %190 : vector<1x32x96xbf16> to vector<32x96xbf16>
    %cst_79 = arith.constant dense<0.000000e+00> : vector<17x96xf32>
    %192 = tpu.matmul %189, %191, %cst_79 {dimension_numbers = #tpu.dot_dimension_numbers<[1], [0], [0], [1], [0, 0, 1, 1], [], []>} : vector<17x32xbf16>, vector<32x96xbf16>, vector<17x96xf32> -> vector<17x96xf32>
    %c1_80 = arith.constant 1 : index
    %c0_81 = arith.constant 0 : index
    %c0_82 = arith.constant 0 : index
    %193 = vector.load %arg7[%c1_80, %c0_81, %c0_82] : memref<2x1x96xf32, #tpu.memory_space<vmem>>, vector<1x1x96xf32>
    %194 = vector.shape_cast %193 : vector<1x1x96xf32> to vector<1x96xf32>
    %195 = vector.broadcast %194 : vector<1x96xf32> to vector<17x96xf32>
    %196 = arith.addf %192, %195 : vector<17x96xf32>
    %197 = vector.extract_strided_slice %196 {offsets = [0, 0], sizes = [17, 32], strides = [1, 1]} : vector<17x96xf32> to vector<17x32xf32>
    %198 = vector.extract_strided_slice %196 {offsets = [0, 32], sizes = [17, 32], strides = [1, 1]} : vector<17x96xf32> to vector<17x32xf32>
    %199 = vector.extract_strided_slice %196 {offsets = [0, 64], sizes = [17, 32], strides = [1, 1]} : vector<17x96xf32> to vector<17x32xf32>
    %200 = vector.extract_strided_slice %197 {offsets = [0, 0], sizes = [17, 8], strides = [1, 1]} : vector<17x32xf32> to vector<17x8xf32>
    %201 = vector.extract_strided_slice %197 {offsets = [0, 8], sizes = [17, 8], strides = [1, 1]} : vector<17x32xf32> to vector<17x8xf32>
    %202 = vector.extract_strided_slice %197 {offsets = [0, 16], sizes = [17, 8], strides = [1, 1]} : vector<17x32xf32> to vector<17x8xf32>
    %203 = vector.extract_strided_slice %197 {offsets = [0, 24], sizes = [17, 8], strides = [1, 1]} : vector<17x32xf32> to vector<17x8xf32>
    %204 = vector.shape_cast %200 : vector<17x8xf32> to vector<1x17x8xf32>
    %205 = vector.shape_cast %201 : vector<17x8xf32> to vector<1x17x8xf32>
    %206 = vector.shape_cast %202 : vector<17x8xf32> to vector<1x17x8xf32>
    %207 = vector.shape_cast %203 : vector<17x8xf32> to vector<1x17x8xf32>
    %208 = tpu.concatenate %204, %205, %206, %207 in 0 : vector<1x17x8xf32>, vector<1x17x8xf32>, vector<1x17x8xf32>, vector<1x17x8xf32> -> vector<4x17x8xf32>
    %209 = arith.truncf %208 : vector<4x17x8xf32> to vector<4x17x8xbf16>
    %210 = vector.extract_strided_slice %198 {offsets = [0, 0], sizes = [17, 8], strides = [1, 1]} : vector<17x32xf32> to vector<17x8xf32>
    %211 = vector.extract_strided_slice %198 {offsets = [0, 8], sizes = [17, 8], strides = [1, 1]} : vector<17x32xf32> to vector<17x8xf32>
    %212 = vector.extract_strided_slice %198 {offsets = [0, 16], sizes = [17, 8], strides = [1, 1]} : vector<17x32xf32> to vector<17x8xf32>
    %213 = vector.extract_strided_slice %198 {offsets = [0, 24], sizes = [17, 8], strides = [1, 1]} : vector<17x32xf32> to vector<17x8xf32>
    %214 = vector.shape_cast %210 : vector<17x8xf32> to vector<1x17x8xf32>
    %215 = vector.shape_cast %211 : vector<17x8xf32> to vector<1x17x8xf32>
    %216 = vector.shape_cast %212 : vector<17x8xf32> to vector<1x17x8xf32>
    %217 = vector.shape_cast %213 : vector<17x8xf32> to vector<1x17x8xf32>
    %218 = tpu.concatenate %214, %215, %216, %217 in 0 : vector<1x17x8xf32>, vector<1x17x8xf32>, vector<1x17x8xf32>, vector<1x17x8xf32> -> vector<4x17x8xf32>
    %219 = arith.truncf %218 : vector<4x17x8xf32> to vector<4x17x8xbf16>
    %220 = vector.extract_strided_slice %199 {offsets = [0, 0], sizes = [17, 8], strides = [1, 1]} : vector<17x32xf32> to vector<17x8xf32>
    %221 = vector.extract_strided_slice %199 {offsets = [0, 8], sizes = [17, 8], strides = [1, 1]} : vector<17x32xf32> to vector<17x8xf32>
    %222 = vector.extract_strided_slice %199 {offsets = [0, 16], sizes = [17, 8], strides = [1, 1]} : vector<17x32xf32> to vector<17x8xf32>
    %223 = vector.extract_strided_slice %199 {offsets = [0, 24], sizes = [17, 8], strides = [1, 1]} : vector<17x32xf32> to vector<17x8xf32>
    %224 = vector.shape_cast %220 : vector<17x8xf32> to vector<1x17x8xf32>
    %225 = vector.shape_cast %221 : vector<17x8xf32> to vector<1x17x8xf32>
    %226 = vector.shape_cast %222 : vector<17x8xf32> to vector<1x17x8xf32>
    %227 = vector.shape_cast %223 : vector<17x8xf32> to vector<1x17x8xf32>
    %228 = tpu.concatenate %224, %225, %226, %227 in 0 : vector<1x17x8xf32>, vector<1x17x8xf32>, vector<1x17x8xf32>, vector<1x17x8xf32> -> vector<4x17x8xf32>
    %229 = arith.truncf %228 : vector<4x17x8xf32> to vector<4x17x8xbf16>
    %cst_83 = arith.constant dense<0.000000e+00> : vector<4x17x17xf32>
    %230 = tpu.matmul %209, %219, %cst_83 {dimension_numbers = #tpu.dot_dimension_numbers<[2], [2], [1], [1], [0, 0, 0, 1, 1, 1], [0], [0]>} : vector<4x17x8xbf16>, vector<4x17x8xbf16>, vector<4x17x17xf32> -> vector<4x17x17xf32>
    %cst_84 = arith.constant 0.176776692 : f32
    %231 = vector.broadcast %cst_84 : f32 to vector<4x17x17xf32>
    %232 = arith.mulf %230, %231 : vector<4x17x17xf32>
    %cst_85 = arith.constant dense<0xFF800000> : vector<4x17xf32>
    %233 = vector.multi_reduction <maximumf>, %232, %cst_85 [2] : vector<4x17x17xf32> to vector<4x17xf32>
    %234 = vector.shape_cast %233 : vector<4x17xf32> to vector<4x17x1xf32>
    %235 = vector.broadcast %234 : vector<4x17x1xf32> to vector<4x17x17xf32>
    %236 = arith.subf %232, %235 : vector<4x17x17xf32>
    %237 = math.exp %236 : vector<4x17x17xf32>
    %cst_86 = arith.constant dense<0.000000e+00> : vector<4x17xf32>
    %238 = vector.multi_reduction <add>, %237, %cst_86 [2] : vector<4x17x17xf32> to vector<4x17xf32>
    %239 = vector.shape_cast %238 : vector<4x17xf32> to vector<4x17x1xf32>
    %240 = tpu.reciprocal %239 {approx = true} : vector<4x17x1xf32> -> vector<4x17x1xf32>
    %241 = vector.broadcast %240 : vector<4x17x1xf32> to vector<4x17x17xf32>
    %242 = arith.mulf %237, %241 : vector<4x17x17xf32>
    %243 = arith.truncf %242 : vector<4x17x17xf32> to vector<4x17x17xbf16>
    %cst_87 = arith.constant dense<0.000000e+00> : vector<4x17x8xf32>
    %244 = tpu.matmul %243, %229, %cst_87 {dimension_numbers = #tpu.dot_dimension_numbers<[2], [1], [1], [2], [0, 0, 0, 1, 1, 2], [0], [0]>} : vector<4x17x17xbf16>, vector<4x17x8xbf16>, vector<4x17x8xf32> -> vector<4x17x8xf32>
    %245 = vector.extract_strided_slice %244 {offsets = [0, 0, 0], sizes = [1, 17, 8], strides = [1, 1, 1]} : vector<4x17x8xf32> to vector<1x17x8xf32>
    %246 = vector.shape_cast %245 : vector<1x17x8xf32> to vector<17x8xf32>
    %247 = vector.extract_strided_slice %244 {offsets = [1, 0, 0], sizes = [1, 17, 8], strides = [1, 1, 1]} : vector<4x17x8xf32> to vector<1x17x8xf32>
    %248 = vector.shape_cast %247 : vector<1x17x8xf32> to vector<17x8xf32>
    %249 = vector.extract_strided_slice %244 {offsets = [2, 0, 0], sizes = [1, 17, 8], strides = [1, 1, 1]} : vector<4x17x8xf32> to vector<1x17x8xf32>
    %250 = vector.shape_cast %249 : vector<1x17x8xf32> to vector<17x8xf32>
    %251 = vector.extract_strided_slice %244 {offsets = [3, 0, 0], sizes = [1, 17, 8], strides = [1, 1, 1]} : vector<4x17x8xf32> to vector<1x17x8xf32>
    %252 = vector.shape_cast %251 : vector<1x17x8xf32> to vector<17x8xf32>
    %253 = tpu.concatenate %246, %248, %250, %252 in 1 : vector<17x8xf32>, vector<17x8xf32>, vector<17x8xf32>, vector<17x8xf32> -> vector<17x32xf32>
    %254 = arith.truncf %253 : vector<17x32xf32> to vector<17x32xbf16>
    %c1_88 = arith.constant 1 : index
    %c0_89 = arith.constant 0 : index
    %c0_90 = arith.constant 0 : index
    %255 = vector.load %arg8[%c1_88, %c0_89, %c0_90] : memref<2x32x32xbf16, #tpu.memory_space<vmem>>, vector<1x32x32xbf16>
    %256 = vector.shape_cast %255 : vector<1x32x32xbf16> to vector<32x32xbf16>
    %cst_91 = arith.constant dense<0.000000e+00> : vector<17x32xf32>
    %257 = tpu.matmul %254, %256, %cst_91 {dimension_numbers = #tpu.dot_dimension_numbers<[1], [0], [0], [1], [0, 0, 1, 1], [], []>} : vector<17x32xbf16>, vector<32x32xbf16>, vector<17x32xf32> -> vector<17x32xf32>
    %c1_92 = arith.constant 1 : index
    %c0_93 = arith.constant 0 : index
    %c0_94 = arith.constant 0 : index
    %258 = vector.load %arg9[%c1_92, %c0_93, %c0_94] : memref<2x1x32xf32, #tpu.memory_space<vmem>>, vector<1x1x32xf32>
    %259 = vector.shape_cast %258 : vector<1x1x32xf32> to vector<1x32xf32>
    %260 = vector.broadcast %259 : vector<1x32xf32> to vector<17x32xf32>
    %261 = arith.addf %257, %260 : vector<17x32xf32>
    %262 = arith.addf %162, %261 : vector<17x32xf32>
    %c1_95 = arith.constant 1 : index
    %c0_96 = arith.constant 0 : index
    %c0_97 = arith.constant 0 : index
    %263 = vector.load %arg10[%c1_95, %c0_96, %c0_97] : memref<2x1x32xf32, #tpu.memory_space<vmem>>, vector<1x1x32xf32>
    %264 = vector.shape_cast %263 : vector<1x1x32xf32> to vector<1x32xf32>
    %c1_98 = arith.constant 1 : index
    %c0_99 = arith.constant 0 : index
    %c0_100 = arith.constant 0 : index
    %265 = vector.load %arg11[%c1_98, %c0_99, %c0_100] : memref<2x1x32xf32, #tpu.memory_space<vmem>>, vector<1x1x32xf32>
    %266 = vector.shape_cast %265 : vector<1x1x32xf32> to vector<1x32xf32>
    %cst_101 = arith.constant dense<0.000000e+00> : vector<17xf32>
    %267 = vector.multi_reduction <add>, %262, %cst_101 [1] : vector<17x32xf32> to vector<17xf32>
    %268 = vector.shape_cast %267 : vector<17xf32> to vector<17x1xf32>
    %cst_102 = arith.constant 3.200000e+01 : f32
    %269 = vector.broadcast %cst_102 : f32 to vector<17x1xf32>
    %270 = arith.divf %268, %269 : vector<17x1xf32>
    %271 = vector.broadcast %270 : vector<17x1xf32> to vector<17x32xf32>
    %272 = arith.subf %262, %271 : vector<17x32xf32>
    %273 = arith.mulf %272, %272 : vector<17x32xf32>
    %cst_103 = arith.constant dense<0.000000e+00> : vector<17xf32>
    %274 = vector.multi_reduction <add>, %273, %cst_103 [1] : vector<17x32xf32> to vector<17xf32>
    %275 = vector.shape_cast %274 : vector<17xf32> to vector<17x1xf32>
    %cst_104 = arith.constant 3.200000e+01 : f32
    %276 = vector.broadcast %cst_104 : f32 to vector<17x1xf32>
    %277 = arith.divf %275, %276 : vector<17x1xf32>
    %278 = vector.broadcast %270 : vector<17x1xf32> to vector<17x32xf32>
    %279 = arith.subf %262, %278 : vector<17x32xf32>
    %cst_105 = arith.constant 9.99999974E-6 : f32
    %280 = vector.broadcast %cst_105 : f32 to vector<17x1xf32>
    %281 = arith.addf %277, %280 : vector<17x1xf32>
    %282 = math.rsqrt %281 : vector<17x1xf32>
    %283 = vector.broadcast %282 : vector<17x1xf32> to vector<17x32xf32>
    %284 = arith.mulf %279, %283 : vector<17x32xf32>
    %285 = vector.broadcast %264 : vector<1x32xf32> to vector<17x32xf32>
    %286 = arith.mulf %284, %285 : vector<17x32xf32>
    %287 = vector.broadcast %266 : vector<1x32xf32> to vector<17x32xf32>
    %288 = arith.addf %286, %287 : vector<17x32xf32>
    %289 = arith.truncf %288 : vector<17x32xf32> to vector<17x32xbf16>
    %c1_106 = arith.constant 1 : index
    %c0_107 = arith.constant 0 : index
    %c0_108 = arith.constant 0 : index
    %290 = vector.load %arg12[%c1_106, %c0_107, %c0_108] : memref<2x32x64xbf16, #tpu.memory_space<vmem>>, vector<1x32x64xbf16>
    %291 = vector.shape_cast %290 : vector<1x32x64xbf16> to vector<32x64xbf16>
    %cst_109 = arith.constant dense<0.000000e+00> : vector<17x64xf32>
    %292 = tpu.matmul %289, %291, %cst_109 {dimension_numbers = #tpu.dot_dimension_numbers<[1], [0], [0], [1], [0, 0, 1, 1], [], []>} : vector<17x32xbf16>, vector<32x64xbf16>, vector<17x64xf32> -> vector<17x64xf32>
    %c1_110 = arith.constant 1 : index
    %c0_111 = arith.constant 0 : index
    %c0_112 = arith.constant 0 : index
    %293 = vector.load %arg13[%c1_110, %c0_111, %c0_112] : memref<2x1x64xf32, #tpu.memory_space<vmem>>, vector<1x1x64xf32>
    %294 = vector.shape_cast %293 : vector<1x1x64xf32> to vector<1x64xf32>
    %295 = vector.broadcast %294 : vector<1x64xf32> to vector<17x64xf32>
    %296 = arith.addf %292, %295 : vector<17x64xf32>
    %cst_113 = arith.constant 5.000000e-01 : f32
    %297 = vector.broadcast %cst_113 : f32 to vector<17x64xf32>
    %298 = arith.mulf %297, %296 : vector<17x64xf32>
    %cst_114 = arith.constant 4.471500e-02 : f32
    %299 = vector.broadcast %cst_114 : f32 to vector<17x64xf32>
    %300 = arith.mulf %299, %296 : vector<17x64xf32>
    %301 = arith.mulf %300, %296 : vector<17x64xf32>
    %302 = arith.mulf %301, %296 : vector<17x64xf32>
    %303 = arith.addf %296, %302 : vector<17x64xf32>
    %cst_115 = arith.constant 0.797884583 : f32
    %304 = vector.broadcast %cst_115 : f32 to vector<17x64xf32>
    %305 = arith.mulf %304, %303 : vector<17x64xf32>
    %306 = math.tanh %305 : vector<17x64xf32>
    %cst_116 = arith.constant 1.000000e+00 : f32
    %307 = vector.broadcast %cst_116 : f32 to vector<17x64xf32>
    %308 = arith.addf %307, %306 : vector<17x64xf32>
    %309 = arith.mulf %298, %308 : vector<17x64xf32>
    %310 = arith.truncf %309 : vector<17x64xf32> to vector<17x64xbf16>
    %c1_117 = arith.constant 1 : index
    %c0_118 = arith.constant 0 : index
    %c0_119 = arith.constant 0 : index
    %311 = vector.load %arg14[%c1_117, %c0_118, %c0_119] : memref<2x64x32xbf16, #tpu.memory_space<vmem>>, vector<1x64x32xbf16>
    %312 = vector.shape_cast %311 : vector<1x64x32xbf16> to vector<64x32xbf16>
    %cst_120 = arith.constant dense<0.000000e+00> : vector<17x32xf32>
    %313 = tpu.matmul %310, %312, %cst_120 {dimension_numbers = #tpu.dot_dimension_numbers<[1], [0], [0], [1], [0, 0, 1, 1], [], []>} : vector<17x64xbf16>, vector<64x32xbf16>, vector<17x32xf32> -> vector<17x32xf32>
    %c1_121 = arith.constant 1 : index
    %c0_122 = arith.constant 0 : index
    %c0_123 = arith.constant 0 : index
    %314 = vector.load %arg15[%c1_121, %c0_122, %c0_123] : memref<2x1x32xf32, #tpu.memory_space<vmem>>, vector<1x1x32xf32>
    %315 = vector.shape_cast %314 : vector<1x1x32xf32> to vector<1x32xf32>
    %316 = vector.broadcast %315 : vector<1x32xf32> to vector<17x32xf32>
    %317 = arith.addf %313, %316 : vector<17x32xf32>
    %318 = arith.addf %262, %317 : vector<17x32xf32>
    %319 = vector.extract_strided_slice %318 {offsets = [0, 0], sizes = [1, 32], strides = [1, 1]} : vector<17x32xf32> to vector<1x32xf32>
    %c0_124 = arith.constant 0 : index
    %c0_125 = arith.constant 0 : index
    %320 = vector.load %arg16[%c0_124, %c0_125] : memref<1x32xf32, #tpu.memory_space<vmem>>, vector<1x32xf32>
    %c0_126 = arith.constant 0 : index
    %c0_127 = arith.constant 0 : index
    %321 = vector.load %arg17[%c0_126, %c0_127] : memref<1x32xf32, #tpu.memory_space<vmem>>, vector<1x32xf32>
    %cst_128 = arith.constant dense<0.000000e+00> : vector<1xf32>
    %322 = vector.multi_reduction <add>, %319, %cst_128 [1] : vector<1x32xf32> to vector<1xf32>
    %323 = vector.shape_cast %322 : vector<1xf32> to vector<1x1xf32>
    %cst_129 = arith.constant 3.200000e+01 : f32
    %324 = vector.broadcast %cst_129 : f32 to vector<1x1xf32>
    %325 = arith.divf %323, %324 : vector<1x1xf32>
    %326 = vector.broadcast %325 : vector<1x1xf32> to vector<1x32xf32>
    %327 = arith.subf %319, %326 : vector<1x32xf32>
    %328 = arith.mulf %327, %327 : vector<1x32xf32>
    %cst_130 = arith.constant dense<0.000000e+00> : vector<1xf32>
    %329 = vector.multi_reduction <add>, %328, %cst_130 [1] : vector<1x32xf32> to vector<1xf32>
    %330 = vector.shape_cast %329 : vector<1xf32> to vector<1x1xf32>
    %cst_131 = arith.constant 3.200000e+01 : f32
    %331 = vector.broadcast %cst_131 : f32 to vector<1x1xf32>
    %332 = arith.divf %330, %331 : vector<1x1xf32>
    %333 = vector.broadcast %325 : vector<1x1xf32> to vector<1x32xf32>
    %334 = arith.subf %319, %333 : vector<1x32xf32>
    %cst_132 = arith.constant 9.99999974E-6 : f32
    %335 = vector.broadcast %cst_132 : f32 to vector<1x1xf32>
    %336 = arith.addf %332, %335 : vector<1x1xf32>
    %337 = math.rsqrt %336 : vector<1x1xf32>
    %338 = vector.broadcast %337 : vector<1x1xf32> to vector<1x32xf32>
    %339 = arith.mulf %334, %338 : vector<1x32xf32>
    %340 = arith.mulf %339, %320 : vector<1x32xf32>
    %341 = arith.addf %340, %321 : vector<1x32xf32>
    %342 = arith.truncf %341 : vector<1x32xf32> to vector<1x32xbf16>
    %c0_133 = arith.constant 0 : index
    %c0_134 = arith.constant 0 : index
    %343 = vector.load %arg18[%c0_133, %c0_134] : memref<32x10xbf16, #tpu.memory_space<vmem>>, vector<32x10xbf16>
    %cst_135 = arith.constant dense<0.000000e+00> : vector<1x10xf32>
    %344 = tpu.matmul %342, %343, %cst_135 {dimension_numbers = #tpu.dot_dimension_numbers<[1], [0], [0], [1], [0, 0, 1, 1], [], []>} : vector<1x32xbf16>, vector<32x10xbf16>, vector<1x10xf32> -> vector<1x10xf32>
    %c0_136 = arith.constant 0 : index
    %c0_137 = arith.constant 0 : index
    %345 = vector.load %arg19[%c0_136, %c0_137] : memref<1x10xf32, #tpu.memory_space<vmem>>, vector<1x10xf32>
    %346 = arith.addf %344, %345 : vector<1x10xf32>
    %c0_138 = arith.constant 0 : index
    %c0_139 = arith.constant 0 : index
    %c0_140 = arith.constant 0 : index
    %347 = vector.load %arg20[%c0_138, %c0_139, %c0_140] : memref<1x1x10xf32, #tpu.memory_space<vmem>>, vector<1x1x10xf32>
    %348 = vector.shape_cast %347 : vector<1x1x10xf32> to vector<1x10xf32>
    %349 = vector.shape_cast %346 : vector<1x10xf32> to vector<1x1x10xf32>
    tpu.vector_store %arg20[%c0_138, %c0_139, %c0_140], %349 {strides = array<i32>} : memref<1x1x10xf32, #tpu.memory_space<vmem>>, vector<1x1x10xf32>,
    return
  }
  func.func @transform_0(%arg0: i32) -> (i32, i32, i32) {
    %c0_i32 = arith.constant 0 : i32
    %c0_i32_0 = arith.constant 0 : i32
    %c0_i32_1 = arith.constant 0 : i32
    return %arg0, %c0_i32, %c0_i32_0 : i32, i32, i32
  }
  func.func @transform_1(%arg0: i32) -> (i32, i32) {
    %c0_i32 = arith.constant 0 : i32
    %c0_i32_0 = arith.constant 0 : i32
    %c0_i32_1 = arith.constant 0 : i32
    return %c0_i32, %c0_i32_0 : i32, i32
  }
  func.func @transform_2(%arg0: i32) -> (i32, i32, i32) {
    %c0_i32 = arith.constant 0 : i32
    %c0_i32_0 = arith.constant 0 : i32
    %c0_i32_1 = arith.constant 0 : i32
    %c0_i32_2 = arith.constant 0 : i32
    return %c0_i32, %c0_i32_0, %c0_i32_1 : i32, i32, i32
  }
  func.func @transform_3(%arg0: i32) -> (i32, i32, i32) {
    %c0_i32 = arith.constant 0 : i32
    %c0_i32_0 = arith.constant 0 : i32
    %c0_i32_1 = arith.constant 0 : i32
    %c0_i32_2 = arith.constant 0 : i32
    return %c0_i32, %c0_i32_0, %c0_i32_1 : i32, i32, i32
  }
  func.func @transform_4(%arg0: i32) -> (i32, i32, i32) {
    %c0_i32 = arith.constant 0 : i32
    %c0_i32_0 = arith.constant 0 : i32
    %c0_i32_1 = arith.constant 0 : i32
    %c0_i32_2 = arith.constant 0 : i32
    return %c0_i32, %c0_i32_0, %c0_i32_1 : i32, i32, i32
  }
  func.func @transform_5(%arg0: i32) -> (i32, i32, i32) {
    %c0_i32 = arith.constant 0 : i32
    %c0_i32_0 = arith.constant 0 : i32
    %c0_i32_1 = arith.constant 0 : i32
    %c0_i32_2 = arith.constant 0 : i32
    return %c0_i32, %c0_i32_0, %c0_i32_1 : i32, i32, i32
  }
  func.func @transform_6(%arg0: i32) -> (i32, i32, i32) {
    %c0_i32 = arith.constant 0 : i32
    %c0_i32_0 = arith.constant 0 : i32
    %c0_i32_1 = arith.constant 0 : i32
    %c0_i32_2 = arith.constant 0 : i32
    return %c0_i32, %c0_i32_0, %c0_i32_1 : i32, i32, i32
  }
  func.func @transform_7(%arg0: i32) -> (i32, i32, i32) {
    %c0_i32 = arith.constant 0 : i32
    %c0_i32_0 = arith.constant 0 : i32
    %c0_i32_1 = arith.constant 0 : i32
    %c0_i32_2 = arith.constant 0 : i32
    return %c0_i32, %c0_i32_0, %c0_i32_1 : i32, i32, i32
  }
  func.func @transform_8(%arg0: i32) -> (i32, i32, i32) {
    %c0_i32 = arith.constant 0 : i32
    %c0_i32_0 = arith.constant 0 : i32
    %c0_i32_1 = arith.constant 0 : i32
    %c0_i32_2 = arith.constant 0 : i32
    return %c0_i32, %c0_i32_0, %c0_i32_1 : i32, i32, i32
  }
  func.func @transform_9(%arg0: i32) -> (i32, i32, i32) {
    %c0_i32 = arith.constant 0 : i32
    %c0_i32_0 = arith.constant 0 : i32
    %c0_i32_1 = arith.constant 0 : i32
    %c0_i32_2 = arith.constant 0 : i32
    return %c0_i32, %c0_i32_0, %c0_i32_1 : i32, i32, i32
  }
  func.func @transform_10(%arg0: i32) -> (i32, i32, i32) {
    %c0_i32 = arith.constant 0 : i32
    %c0_i32_0 = arith.constant 0 : i32
    %c0_i32_1 = arith.constant 0 : i32
    %c0_i32_2 = arith.constant 0 : i32
    return %c0_i32, %c0_i32_0, %c0_i32_1 : i32, i32, i32
  }
  func.func @transform_11(%arg0: i32) -> (i32, i32, i32) {
    %c0_i32 = arith.constant 0 : i32
    %c0_i32_0 = arith.constant 0 : i32
    %c0_i32_1 = arith.constant 0 : i32
    %c0_i32_2 = arith.constant 0 : i32
    return %c0_i32, %c0_i32_0, %c0_i32_1 : i32, i32, i32
  }
  func.func @transform_12(%arg0: i32) -> (i32, i32, i32) {
    %c0_i32 = arith.constant 0 : i32
    %c0_i32_0 = arith.constant 0 : i32
    %c0_i32_1 = arith.constant 0 : i32
    %c0_i32_2 = arith.constant 0 : i32
    return %c0_i32, %c0_i32_0, %c0_i32_1 : i32, i32, i32
  }
  func.func @transform_13(%arg0: i32) -> (i32, i32, i32) {
    %c0_i32 = arith.constant 0 : i32
    %c0_i32_0 = arith.constant 0 : i32
    %c0_i32_1 = arith.constant 0 : i32
    %c0_i32_2 = arith.constant 0 : i32
    return %c0_i32, %c0_i32_0, %c0_i32_1 : i32, i32, i32
  }
  func.func @transform_14(%arg0: i32) -> (i32, i32, i32) {
    %c0_i32 = arith.constant 0 : i32
    %c0_i32_0 = arith.constant 0 : i32
    %c0_i32_1 = arith.constant 0 : i32
    %c0_i32_2 = arith.constant 0 : i32
    return %c0_i32, %c0_i32_0, %c0_i32_1 : i32, i32, i32
  }
  func.func @transform_15(%arg0: i32) -> (i32, i32) {
    %c0_i32 = arith.constant 0 : i32
    %c0_i32_0 = arith.constant 0 : i32
    %c0_i32_1 = arith.constant 0 : i32
    return %c0_i32, %c0_i32_0 : i32, i32
  }
  func.func @transform_16(%arg0: i32) -> (i32, i32) {
    %c0_i32 = arith.constant 0 : i32
    %c0_i32_0 = arith.constant 0 : i32
    %c0_i32_1 = arith.constant 0 : i32
    return %c0_i32, %c0_i32_0 : i32, i32
  }
  func.func @transform_17(%arg0: i32) -> (i32, i32) {
    %c0_i32 = arith.constant 0 : i32
    %c0_i32_0 = arith.constant 0 : i32
    %c0_i32_1 = arith.constant 0 : i32
    return %c0_i32, %c0_i32_0 : i32, i32
  }
  func.func @transform_18(%arg0: i32) -> (i32, i32) {
    %c0_i32 = arith.constant 0 : i32
    %c0_i32_0 = arith.constant 0 : i32
    %c0_i32_1 = arith.constant 0 : i32
    return %c0_i32, %c0_i32_0 : i32, i32
  }
  func.func @transform_19(%arg0: i32) -> (i32, i32, i32) {
    %c0_i32 = arith.constant 0 : i32
    %c0_i32_0 = arith.constant 0 : i32
    %c0_i32_1 = arith.constant 0 : i32
    return %arg0, %c0_i32, %c0_i32_0 : i32, i32, i32
  }
}

</mosaic_0001>

<llo_original>
// kernel: vit_forward.1
$region0: #{vit_forward.1}
  #allocation0 [shape = 'u32[]', space=smem, size = 0x4, offset = 0x4, fixed_abs, tag = 'smem constant byte address 0x4 - core index']
  #allocation1 [shape = 'u32[144,128]{1,0:T(1,128)}', space=vmem, size = 0x12000, scoped, tag = 'internal scratch']
  %s0 = inlined_call_operand.vmem [shape: bf16[2,17,48], index: 0, kind: input, shape index: {}]
  %s1 = inlined_call_operand.vmem [shape: bf16[48,32], index: 1, kind: input, shape index: {}]
  %s2 = inlined_call_operand.vmem [shape: f32[1,17,32], index: 2, kind: input, shape index: {}]
  %s3 = inlined_call_operand.vmem [shape: f32[2,1,32], index: 3, kind: input, shape index: {}]
  %s4 = inlined_call_operand.vmem [shape: f32[2,1,32], index: 4, kind: input, shape index: {}]
  %s5 = inlined_call_operand.vmem [shape: bf16[2,32,96], index: 5, kind: input, shape index: {}]
  %s6 = inlined_call_operand.vmem [shape: f32[2,1,96], index: 6, kind: input, shape index: {}]
  %s7 = inlined_call_operand.vmem [shape: bf16[2,32,32], index: 7, kind: input, shape index: {}]
  %s8 = inlined_call_operand.vmem [shape: f32[2,1,32], index: 8, kind: input, shape index: {}]
  %s9 = inlined_call_operand.vmem [shape: f32[2,1,32], index: 9, kind: input, shape index: {}]
  %s10 = inlined_call_operand.vmem [shape: f32[2,1,32], index: 10, kind: input, shape index: {}]
  %s11 = inlined_call_operand.vmem [shape: bf16[2,32,64], index: 11, kind: input, shape index: {}]
  %s12 = inlined_call_operand.vmem [shape: f32[2,1,64], index: 12, kind: input, shape index: {}]
  %s13 = inlined_call_operand.vmem [shape: bf16[2,64,32], index: 13, kind: input, shape index: {}]
  %s14 = inlined_call_operand.vmem [shape: f32[2,1,32], index: 14, kind: input, shape index: {}]
  %s15 = inlined_call_operand.vmem [shape: f32[1,32], index: 15, kind: input, shape index: {}]
  %s16 = inlined_call_operand.vmem [shape: f32[1,32], index: 16, kind: input, shape index: {}]
  %s17 = inlined_call_operand.vmem [shape: bf16[32,10], index: 17, kind: input, shape index: {}]
  %s18 = inlined_call_operand.vmem [shape: f32[1,10], index: 18, kind: input, shape index: {}]
  %s19 = inlined_call_operand.hbm [shape: f32[2,1,10], index: 19, kind: output, shape index: {}]
  %s20 = sld [smem:[#allocation0]]
  $region109: #{vit_forward.1} parent=0
    _
  %s22 = ssub.s32 1, %s20
  %s23 = scalar_select 0, %s22, %s20
  $region1: #{vit_forward.1} parent=0
    #allocation2 [shape = 'u8[1024]{0}', space=vmem, size = 0x400, scoped, tag = 'output window, operand 0']
    #allocation3 [shape = 's32[2]{0}', space=sflag, size = 0x8, scoped, tag = 'scoped memory for vit_forward.1']
    %24 = vsyncpa [#allocation3], 0
    %s25 = scalar_lea.sflag [#allocation3], 1
    %26 = vsyncpa %s25, 0
    loop: start=0, step=1, limit=4
    $region2: #{vit_forward.1} parent=1 // loop_pre_header
      _
    $region3: #{vit_forward.1} parent=1 // loop_header
      %s28 = sphi 0, %s32
      %p29 = scmp.ge.s32.totalorder %s28, 4
      %s38 = sphi 0, %s40
      %s41 = sphi 0, %s38
      %s42 = sphi 0, %s41
      %s58 = sphi 0, %s42
      %s62 = sphi 0, %s62
      %s64 = sphi 0, %s62
      %s65 = sphi 0, %s64
      %s79 = sphi 0, %s65
      %s83 = sphi 0, %s83
      %s85 = sphi 0, %s83
      %s86 = sphi 0, %s85
      %s100 = sphi 0, %s86
      %s104 = sphi 0, %s104
      %s106 = sphi 0, %s104
      %s107 = sphi 0, %s106
      %s121 = sphi 0, %s107
      %s125 = sphi 0, %s125
      %s127 = sphi 0, %s125
      %s128 = sphi 0, %s127
      %s142 = sphi 0, %s128
      %s146 = sphi 0, %s146
      %s148 = sphi 0, %s146
      %s149 = sphi 0, %s148
      %s163 = sphi 0, %s149
      %s167 = sphi 0, %s167
      %s169 = sphi 0, %s167
      %s170 = sphi 0, %s169
      %s184 = sphi 0, %s170
      %s188 = sphi 0, %s188
      %s190 = sphi 0, %s188
      %s191 = sphi 0, %s190
      %s205 = sphi 0, %s191
      %s209 = sphi 0, %s209
      %s211 = sphi 0, %s209
      %s212 = sphi 0, %s211
      %s226 = sphi 0, %s212
      %s230 = sphi 0, %s230
      %s232 = sphi 0, %s230
      %s233 = sphi 0, %s232
      %s247 = sphi 0, %s233
      %s251 = sphi 0, %s251
      %s253 = sphi 0, %s251
      %s254 = sphi 0, %s253
      %s268 = sphi 0, %s254
      %s272 = sphi 0, %s272
      %s274 = sphi 0, %s272
      %s275 = sphi 0, %s274
      %s289 = sphi 0, %s275
      %s293 = sphi 0, %s293
      %s295 = sphi 0, %s293
      %s296 = sphi 0, %s295
      %s310 = sphi 0, %s296
      %s314 = sphi 0, %s314
      %s316 = sphi 0, %s314
      %s317 = sphi 0, %s316
      %s331 = sphi 0, %s317
      %s335 = sphi 0, %s335
      %s337 = sphi 0, %s335
      %s338 = sphi 0, %s337
      %s352 = sphi 0, %s338
      %s356 = sphi 0, %s356
      %s358 = sphi 0, %s356
      %s359 = sphi 0, %s358
      %s373 = sphi 0, %s359
      %s377 = sphi 0, %s377
      %s379 = sphi 0, %s377
      %s380 = sphi 0, %s379
      %s394 = sphi 0, %s380
      %s398 = sphi 0, %s398
      %s400 = sphi 0, %s398
      %s401 = sphi 0, %s400
      %s415 = sphi 0, %s401
      %s419 = sphi 0, %s419
      %s421 = sphi 0, %s419
      %s422 = sphi 0, %s421
      %s436 = sphi 0, %s422
      %s442 = sphi 0, %s444
      %s445 = sphi 0, %s442
      %s446 = sphi 0, %s445
      %s462 = sphi 0, %s446
    $region4: #{vit_forward.1} parent=1 // loop_header_branch
      %31 = sbr.rel (%p29) target = $region8
    $region5: #{vit_forward.1} parent=1 // loop_body
      %s33 = ssub.s32 %s28, 1
      %s34 = ssub.s32 %s28, 2
      %s35 = sadd.s32 %s28, 1
      %s36 = ssub.s32 %s28, %s35
      %p37 = scmp.eq.s32.totalorder %s36, 0
      %s39 = sadd.s32 %s38, 1
      %s40 = scalar_select %p37, %s38, %s39
      %p43 = pneg %p37
      %p44 = scmp.eq.s32.totalorder %s28, 1
      %p45 = por %p43, %p44
      %p46 = scmp.ne.s32.totalorder %s38, %s41
      %p47 = scmp.eq.s32.totalorder %s28, 0
      %p48 = por %p46, %p47
      %p49 = scmp.ne.s32.totalorder %s38, %s41
      %p50 = scmp.eq.s32.totalorder %s33, 1
      %p51 = por %p49, %p50
      %p52 = scmp.ne.s32.totalorder %s41, %s42
      %p53 = scmp.eq.s32.totalorder %s33, 0
      %p54 = por %p52, %p53
      %p55 = scmp.ne.s32.totalorder %s41, %s42
      %p56 = scmp.eq.s32.totalorder %s34, 1
      %p57 = por %p55, %p56
      %p59 = scmp.ne.s32.totalorder %s42, %s58
      %p60 = scmp.eq.s32.totalorder %s34, 0
      %p61 = por %p59, %p60
      %s63 = sadd.s32 %s62, 1
      %p66 = scmp.eq.s32.totalorder %s28, 1
      %p67 = scmp.ne.s32.totalorder %s62, %s64
      %p68 = scmp.eq.s32.totalorder %s28, 0
      %p69 = por %p67, %p68
      %p70 = scmp.ne.s32.totalorder %s62, %s64
      %p71 = scmp.eq.s32.totalorder %s33, 1
      %p72 = por %p70, %p71
      %p73 = scmp.ne.s32.totalorder %s64, %s65
      %p74 = scmp.eq.s32.totalorder %s33, 0
      %p75 = por %p73, %p74
      %p76 = scmp.ne.s32.totalorder %s64, %s65
      %p77 = scmp.eq.s32.totalorder %s34, 1
      %p78 = por %p76, %p77
      %p80 = scmp.ne.s32.totalorder %s65, %s79
      %p81 = scmp.eq.s32.totalorder %s34, 0
      %p82 = por %p80, %p81
      %s84 = sadd.s32 %s83, 1
      %p87 = scmp.eq.s32.totalorder %s28, 1
      %p88 = scmp.ne.s32.totalorder %s83, %s85
      %p89 = scmp.eq.s32.totalorder %s28, 0
      %p90 = por %p88, %p89
      %p91 = scmp.ne.s32.totalorder %s83, %s85
      %p92 = scmp.eq.s32.totalorder %s33, 1
      %p93 = por %p91, %p92
      %p94 = scmp.ne.s32.totalorder %s85, %s86
      %p95 = scmp.eq.s32.totalorder %s33, 0
      %p96 = por %p94, %p95
      %p97 = scmp.ne.s32.totalorder %s85, %s86
      %p98 = scmp.eq.s32.totalorder %s34, 1
      %p99 = por %p97, %p98
      %p101 = scmp.ne.s32.totalorder %s86, %s100
      %p102 = scmp.eq.s32.totalorder %s34, 0
      %p103 = por %p101, %p102
      %s105 = sadd.s32 %s104, 1
      %p108 = scmp.eq.s32.totalorder %s28, 1
      %p109 = scmp.ne.s32.totalorder %s104, %s106
      %p110 = scmp.eq.s32.totalorder %s28, 0
      %p111 = por %p109, %p110
      %p112 = scmp.ne.s32.totalorder %s104, %s106
      %p113 = scmp.eq.s32.totalorder %s33, 1
      %p114 = por %p112, %p113
      %p115 = scmp.ne.s32.totalorder %s106, %s107
      %p116 = scmp.eq.s32.totalorder %s33, 0
      %p117 = por %p115, %p116
      %p118 = scmp.ne.s32.totalorder %s106, %s107
      %p119 = scmp.eq.s32.totalorder %s34, 1
      %p120 = por %p118, %p119
      %p122 = scmp.ne.s32.totalorder %s107, %s121
      %p123 = scmp.eq.s32.totalorder %s34, 0
      %p124 = por %p122, %p123
      %s126 = sadd.s32 %s125, 1
      %p129 = scmp.eq.s32.totalorder %s28, 1
      %p130 = scmp.ne.s32.totalorder %s125, %s127
      %p131 = scmp.eq.s32.totalorder %s28, 0
      %p132 = por %p130, %p131
      %p133 = scmp.ne.s32.totalorder %s125, %s127
      %p134 = scmp.eq.s32.totalorder %s33, 1
      %p135 = por %p133, %p134
      %p136 = scmp.ne.s32.totalorder %s127, %s128
      %p137 = scmp.eq.s32.totalorder %s33, 0
      %p138 = por %p136, %p137
      %p139 = scmp.ne.s32.totalorder %s127, %s128
      %p140 = scmp.eq.s32.totalorder %s34, 1
      %p141 = por %p139, %p140
      %p143 = scmp.ne.s32.totalorder %s128, %s142
      %p144 = scmp.eq.s32.totalorder %s34, 0
      %p145 = por %p143, %p144
      %s147 = sadd.s32 %s146, 1
      %p150 = scmp.eq.s32.totalorder %s28, 1
      %p151 = scmp.ne.s32.totalorder %s146, %s148
      %p152 = scmp.eq.s32.totalorder %s28, 0
      %p153 = por %p151, %p152
      %p154 = scmp.ne.s32.totalorder %s146, %s148
      %p155 = scmp.eq.s32.totalorder %s33, 1
      %p156 = por %p154, %p155
      %p157 = scmp.ne.s32.totalorder %s148, %s149
      %p158 = scmp.eq.s32.totalorder %s33, 0
      %p159 = por %p157, %p158
      %p160 = scmp.ne.s32.totalorder %s148, %s149
      %p161 = scmp.eq.s32.totalorder %s34, 1
      %p162 = por %p160, %p161
      %p164 = scmp.ne.s32.totalorder %s149, %s163
      %p165 = scmp.eq.s32.totalorder %s34, 0
      %p166 = por %p164, %p165
      %s168 = sadd.s32 %s167, 1
      %p171 = scmp.eq.s32.totalorder %s28, 1
      %p172 = scmp.ne.s32.totalorder %s167, %s169
      %p173 = scmp.eq.s32.totalorder %s28, 0
      %p174 = por %p172, %p173
      %p175 = scmp.ne.s32.totalorder %s167, %s169
      %p176 = scmp.eq.s32.totalorder %s33, 1
      %p177 = por %p175, %p176
      %p178 = scmp.ne.s32.totalorder %s169, %s170
      %p179 = scmp.eq.s32.totalorder %s33, 0
      %p180 = por %p178, %p179
      %p181 = scmp.ne.s32.totalorder %s169, %s170
      %p182 = scmp.eq.s32.totalorder %s34, 1
      %p183 = por %p181, %p182
      %p185 = scmp.ne.s32.totalorder %s170, %s184
      %p186 = scmp.eq.s32.totalorder %s34, 0
      %p187 = por %p185, %p186
      %s189 = sadd.s32 %s188, 1
      %p192 = scmp.eq.s32.totalorder %s28, 1
      %p193 = scmp.ne.s32.totalorder %s188, %s190
      %p194 = scmp.eq.s32.totalorder %s28, 0
      %p195 = por %p193, %p194
      %p196 = scmp.ne.s32.totalorder %s188, %s190
      %p197 = scmp.eq.s32.totalorder %s33, 1
      %p198 = por %p196, %p197
      %p199 = scmp.ne.s32.totalorder %s190, %s191
      %p200 = scmp.eq.s32.totalorder %s33, 0
      %p201 = por %p199, %p200
      %p202 = scmp.ne.s32.totalorder %s190, %s191
      %p203 = scmp.eq.s32.totalorder %s34, 1
      %p204 = por %p202, %p203
      %p206 = scmp.ne.s32.totalorder %s191, %s205
      %p207 = scmp.eq.s32.totalorder %s34, 0
      %p208 = por %p206, %p207
      %s210 = sadd.s32 %s209, 1
      %p213 = scmp.eq.s32.totalorder %s28, 1
      %p214 = scmp.ne.s32.totalorder %s209, %s211
      %p215 = scmp.eq.s32.totalorder %s28, 0
      %p216 = por %p214, %p215
      %p217 = scmp.ne.s32.totalorder %s209, %s211
      %p218 = scmp.eq.s32.totalorder %s33, 1
      %p219 = por %p217, %p218
      %p220 = scmp.ne.s32.totalorder %s211, %s212
      %p221 = scmp.eq.s32.totalorder %s33, 0
      %p222 = por %p220, %p221
      %p223 = scmp.ne.s32.totalorder %s211, %s212
      %p224 = scmp.eq.s32.totalorder %s34, 1
      %p225 = por %p223, %p224
      %p227 = scmp.ne.s32.totalorder %s212, %s226
      %p228 = scmp.eq.s32.totalorder %s34, 0
      %p229 = por %p227, %p228
      %s231 = sadd.s32 %s230, 1
      %p234 = scmp.eq.s32.totalorder %s28, 1
      %p235 = scmp.ne.s32.totalorder %s230, %s232
      %p236 = scmp.eq.s32.totalorder %s28, 0
      %p237 = por %p235, %p236
      %p238 = scmp.ne.s32.totalorder %s230, %s232
      %p239 = scmp.eq.s32.totalorder %s33, 1
      %p240 = por %p238, %p239
      %p241 = scmp.ne.s32.totalorder %s232, %s233
      %p242 = scmp.eq.s32.totalorder %s33, 0
      %p243 = por %p241, %p242
      %p244 = scmp.ne.s32.totalorder %s232, %s233
      %p245 = scmp.eq.s32.totalorder %s34, 1
      %p246 = por %p244, %p245
      %p248 = scmp.ne.s32.totalorder %s233, %s247
      %p249 = scmp.eq.s32.totalorder %s34, 0
      %p250 = por %p248, %p249
      %s252 = sadd.s32 %s251, 1
      %p255 = scmp.eq.s32.totalorder %s28, 1
      %p256 = scmp.ne.s32.totalorder %s251, %s253
      %p257 = scmp.eq.s32.totalorder %s28, 0
      %p258 = por %p256, %p257
      %p259 = scmp.ne.s32.totalorder %s251, %s253
      %p260 = scmp.eq.s32.totalorder %s33, 1
      %p261 = por %p259, %p260
      %p262 = scmp.ne.s32.totalorder %s253, %s254
      %p263 = scmp.eq.s32.totalorder %s33, 0
      %p264 = por %p262, %p263
      %p265 = scmp.ne.s32.totalorder %s253, %s254
      %p266 = scmp.eq.s32.totalorder %s34, 1
      %p267 = por %p265, %p266
      %p269 = scmp.ne.s32.totalorder %s254, %s268
      %p270 = scmp.eq.s32.totalorder %s34, 0
      %p271 = por %p269, %p270
      %s273 = sadd.s32 %s272, 1
      %p276 = scmp.eq.s32.totalorder %s28, 1
      %p277 = scmp.ne.s32.totalorder %s272, %s274
      %p278 = scmp.eq.s32.totalorder %s28, 0
      %p279 = por %p277, %p278
      %p280 = scmp.ne.s32.totalorder %s272, %s274
      %p281 = scmp.eq.s32.totalorder %s33, 1
      %p282 = por %p280, %p281
      %p283 = scmp.ne.s32.totalorder %s274, %s275
      %p284 = scmp.eq.s32.totalorder %s33, 0
      %p285 = por %p283, %p284
      %p286 = scmp.ne.s32.totalorder %s274, %s275
      %p287 = scmp.eq.s32.totalorder %s34, 1
      %p288 = por %p286, %p287
      %p290 = scmp.ne.s32.totalorder %s275, %s289
      %p291 = scmp.eq.s32.totalorder %s34, 0
      %p292 = por %p290, %p291
      %s294 = sadd.s32 %s293, 1
      %p297 = scmp.eq.s32.totalorder %s28, 1
      %p298 = scmp.ne.s32.totalorder %s293, %s295
      %p299 = scmp.eq.s32.totalorder %s28, 0
      %p300 = por %p298, %p299
      %p301 = scmp.ne.s32.totalorder %s293, %s295
      %p302 = scmp.eq.s32.totalorder %s33, 1
      %p303 = por %p301, %p302
      %p304 = scmp.ne.s32.totalorder %s295, %s296
      %p305 = scmp.eq.s32.totalorder %s33, 0
      %p306 = por %p304, %p305
      %p307 = scmp.ne.s32.totalorder %s295, %s296
      %p308 = scmp.eq.s32.totalorder %s34, 1
      %p309 = por %p307, %p308
      %p311 = scmp.ne.s32.totalorder %s296, %s310
      %p312 = scmp.eq.s32.totalorder %s34, 0
      %p313 = por %p311, %p312
      %s315 = sadd.s32 %s314, 1
      %p318 = scmp.eq.s32.totalorder %s28, 1
      %p319 = scmp.ne.s32.totalorder %s314, %s316
      %p320 = scmp.eq.s32.totalorder %s28, 0
      %p321 = por %p319, %p320
      %p322 = scmp.ne.s32.totalorder %s314, %s316
      %p323 = scmp.eq.s32.totalorder %s33, 1
      %p324 = por %p322, %p323
      %p325 = scmp.ne.s32.totalorder %s316, %s317
      %p326 = scmp.eq.s32.totalorder %s33, 0
      %p327 = por %p325, %p326
      %p328 = scmp.ne.s32.totalorder %s316, %s317
      %p329 = scmp.eq.s32.totalorder %s34, 1
      %p330 = por %p328, %p329
      %p332 = scmp.ne.s32.totalorder %s317, %s331
      %p333 = scmp.eq.s32.totalorder %s34, 0
      %p334 = por %p332, %p333
      %s336 = sadd.s32 %s335, 1
      %p339 = scmp.eq.s32.totalorder %s28, 1
      %p340 = scmp.ne.s32.totalorder %s335, %s337
      %p341 = scmp.eq.s32.totalorder %s28, 0
      %p342 = por %p340, %p341
      %p343 = scmp.ne.s32.totalorder %s335, %s337
      %p344 = scmp.eq.s32.totalorder %s33, 1
      %p345 = por %p343, %p344
      %p346 = scmp.ne.s32.totalorder %s337, %s338
      %p347 = scmp.eq.s32.totalorder %s33, 0
      %p348 = por %p346, %p347
      %p349 = scmp.ne.s32.totalorder %s337, %s338
      %p350 = scmp.eq.s32.totalorder %s34, 1
      %p351 = por %p349, %p350
      %p353 = scmp.ne.s32.totalorder %s338, %s352
      %p354 = scmp.eq.s32.totalorder %s34, 0
      %p355 = por %p353, %p354
      %s357 = sadd.s32 %s356, 1
      %p360 = scmp.eq.s32.totalorder %s28, 1
      %p361 = scmp.ne.s32.totalorder %s356, %s358
      %p362 = scmp.eq.s32.totalorder %s28, 0
      %p363 = por %p361, %p362
      %p364 = scmp.ne.s32.totalorder %s356, %s358
      %p365 = scmp.eq.s32.totalorder %s33, 1
      %p366 = por %p364, %p365
      %p367 = scmp.ne.s32.totalorder %s358, %s359
      %p368 = scmp.eq.s32.totalorder %s33, 0
      %p369 = por %p367, %p368
      %p370 = scmp.ne.s32.totalorder %s358, %s359
      %p371 = scmp.eq.s32.totalorder %s34, 1
      %p372 = por %p370, %p371
      %p374 = scmp.ne.s32.totalorder %s359, %s373
      %p375 = scmp.eq.s32.totalorder %s34, 0
      %p376 = por %p374, %p375
      %s378 = sadd.s32 %s377, 1
      %p381 = scmp.eq.s32.totalorder %s28, 1
      %p382 = scmp.ne.s32.totalorder %s377, %s379
      %p383 = scmp.eq.s32.totalorder %s28, 0
      %p384 = por %p382, %p383
      %p385 = scmp.ne.s32.totalorder %s377, %s379
      %p386 = scmp.eq.s32.totalorder %s33, 1
      %p387 = por %p385, %p386
      %p388 = scmp.ne.s32.totalorder %s379, %s380
      %p389 = scmp.eq.s32.totalorder %s33, 0
      %p390 = por %p388, %p389
      %p391 = scmp.ne.s32.totalorder %s379, %s380
      %p392 = scmp.eq.s32.totalorder %s34, 1
      %p393 = por %p391, %p392
      %p395 = scmp.ne.s32.totalorder %s380, %s394
      %p396 = scmp.eq.s32.totalorder %s34, 0
      %p397 = por %p395, %p396
      %s399 = sadd.s32 %s398, 1
      %p402 = scmp.eq.s32.totalorder %s28, 1
      %p403 = scmp.ne.s32.totalorder %s398, %s400
      %p404 = scmp.eq.s32.totalorder %s28, 0
      %p405 = por %p403, %p404
      %p406 = scmp.ne.s32.totalorder %s398, %s400
      %p407 = scmp.eq.s32.totalorder %s33, 1
      %p408 = por %p406, %p407
      %p409 = scmp.ne.s32.totalorder %s400, %s401
      %p410 = scmp.eq.s32.totalorder %s33, 0
      %p411 = por %p409, %p410
      %p412 = scmp.ne.s32.totalorder %s400, %s401
      %p413 = scmp.eq.s32.totalorder %s34, 1
      %p414 = por %p412, %p413
      %p416 = scmp.ne.s32.totalorder %s401, %s415
      %p417 = scmp.eq.s32.totalorder %s34, 0
      %p418 = por %p416, %p417
      %s420 = sadd.s32 %s419, 1
      %p423 = scmp.eq.s32.totalorder %s28, 1
      %p424 = scmp.ne.s32.totalorder %s419, %s421
      %p425 = scmp.eq.s32.totalorder %s28, 0
      %p426 = por %p424, %p425
      %p427 = scmp.ne.s32.totalorder %s419, %s421
      %p428 = scmp.eq.s32.totalorder %s33, 1
      %p429 = por %p427, %p428
      %p430 = scmp.ne.s32.totalorder %s421, %s422
      %p431 = scmp.eq.s32.totalorder %s33, 0
      %p432 = por %p430, %p431
      %p433 = scmp.ne.s32.totalorder %s421, %s422
      %p434 = scmp.eq.s32.totalorder %s34, 1
      %p435 = por %p433, %p434
      %p437 = scmp.ne.s32.totalorder %s422, %s436
      %p438 = scmp.eq.s32.totalorder %s34, 0
      %p439 = por %p437, %p438
      %s440 = ssub.s32 %s28, %s35
      %p441 = scmp.eq.s32.totalorder %s440, 0
      %s443 = sadd.s32 %s442, 1
      %s444 = scalar_select %p441, %s442, %s443
      %p447 = pneg %p441
      %p448 = scmp.eq.s32.totalorder %s28, 1
      %p449 = por %p447, %p448
      %p450 = scmp.ne.s32.totalorder %s442, %s445
      %p451 = scmp.eq.s32.totalorder %s28, 0
      %p452 = por %p450, %p451
      %p453 = scmp.ne.s32.totalorder %s442, %s445
      %p454 = scmp.eq.s32.totalorder %s33, 1
      %p455 = por %p453, %p454
      %p456 = scmp.ne.s32.totalorder %s445, %s446
      %p457 = scmp.eq.s32.totalorder %s33, 0
      %p458 = por %p456, %p457
      %p459 = scmp.ne.s32.totalorder %s445, %s446
      %p460 = scmp.eq.s32.totalorder %s34, 1
      %p461 = por %p459, %p460
      %p463 = scmp.ne.s32.totalorder %s446, %s462
      %p464 = scmp.eq.s32.totalorder %s34, 0
      %p465 = por %p463, %p464
      %p466 = scmp.le.s32.totalorder 1, %s28
      %p467 = scmp.lt.s32.totalorder %s28, 3
      %p468 = pnand %p466, %p467
      %p469 = pneg %p468
      // Predicated region
      $region9: #{vit_forward.1} parent=5 // pred_check
        _
      $region10: #{vit_forward.1} parent=5 // pred_check_branch
        %471 = sbr.rel (%p468) target = $region12
      $region11: #{vit_forward.1} parent=5 // pred_region
        %s472 = ssub.s32 %s28, 1
        // Predicated region
        $region13: #{vit_forward.1} parent=11 // pred_check
          %p473 = pneg %p75
        $region14: #{vit_forward.1} parent=11 // pred_check_branch
          %475 = sbr.rel (%p473) target = $region16
        $region15: #{vit_forward.1} parent=11 // pred_region
          _
        $region16: #{vit_forward.1} parent=11 // pred_fallthru
          _
        // Predicated region
        $region17: #{vit_forward.1} parent=11 // pred_check
          %p476 = pneg %p96
        $region18: #{vit_forward.1} parent=11 // pred_check_branch
          %478 = sbr.rel (%p476) target = $region20
        $region19: #{vit_forward.1} parent=11 // pred_region
          _
        $region20: #{vit_forward.1} parent=11 // pred_fallthru
          _
        // Predicated region
        $region21: #{vit_forward.1} parent=11 // pred_check
          %p479 = pneg %p117
        $region22: #{vit_forward.1} parent=11 // pred_check_branch
          %481 = sbr.rel (%p479) target = $region24
        $region23: #{vit_forward.1} parent=11 // pred_region
          _
        $region24: #{vit_forward.1} parent=11 // pred_fallthru
          _
        // Predicated region
        $region25: #{vit_forward.1} parent=11 // pred_check
          %p482 = pneg %p138
        $region26: #{vit_forward.1} parent=11 // pred_check_branch
          %484 = sbr.rel (%p482) target = $region28
        $region27: #{vit_forward.1} parent=11 // pred_region
          _
        $region28: #{vit_forward.1} parent=11 // pred_fallthru
          _
        // Predicated region
        $region29: #{vit_forward.1} parent=11 // pred_check
          %p485 = pneg %p159
        $region30: #{vit_forward.1} parent=11 // pred_check_branch
          %487 = sbr.rel (%p485) target = $region32
        $region31: #{vit_forward.1} parent=11 // pred_region
          _
        $region32: #{vit_forward.1} parent=11 // pred_fallthru
          _
        // Predicated region
        $region33: #{vit_forward.1} parent=11 // pred_check
          %p488 = pneg %p180
        $region34: #{vit_forward.1} parent=11 // pred_check_branch
          %490 = sbr.rel (%p488) target = $region36
        $region35: #{vit_forward.1} parent=11 // pred_region
          _
        $region36: #{vit_forward.1} parent=11 // pred_fallthru
          _
        // Predicated region
        $region37: #{vit_forward.1} parent=11 // pred_check
          %p491 = pneg %p201
        $region38: #{vit_forward.1} parent=11 // pred_check_branch
          %493 = sbr.rel (%p491) target = $region40
        $region39: #{vit_forward.1} parent=11 // pred_region
          _
        $region40: #{vit_forward.1} parent=11 // pred_fallthru
          _
        // Predicated region
        $region41: #{vit_forward.1} parent=11 // pred_check
          %p494 = pneg %p222
        $region42: #{vit_forward.1} parent=11 // pred_check_branch
          %496 = sbr.rel (%p494) target = $region44
        $region43: #{vit_forward.1} parent=11 // pred_region
          _
        $region44: #{vit_forward.1} parent=11 // pred_fallthru
          _
        // Predicated region
        $region45: #{vit_forward.1} parent=11 // pred_check
          %p497 = pneg %p243
        $region46: #{vit_forward.1} parent=11 // pred_check_branch
          %499 = sbr.rel (%p497) target = $region48
        $region47: #{vit_forward.1} parent=11 // pred_region
          _
        $region48: #{vit_forward.1} parent=11 // pred_fallthru
          _
        // Predicated region
        $region49: #{vit_forward.1} parent=11 // pred_check
          %p500 = pneg %p264
        $region50: #{vit_forward.1} parent=11 // pred_check_branch
          %502 = sbr.rel (%p500) target = $region52
        $region51: #{vit_forward.1} parent=11 // pred_region
          _
        $region52: #{vit_forward.1} parent=11 // pred_fallthru
          _
        // Predicated region
        $region53: #{vit_forward.1} parent=11 // pred_check
          %p503 = pneg %p285
        $region54: #{vit_forward.1} parent=11 // pred_check_branch
          %505 = sbr.rel (%p503) target = $region56
        $region55: #{vit_forward.1} parent=11 // pred_region
          _
        $region56: #{vit_forward.1} parent=11 // pred_fallthru
          _
        // Predicated region
        $region57: #{vit_forward.1} parent=11 // pred_check
          %p506 = pneg %p306
        $region58: #{vit_forward.1} parent=11 // pred_check_branch
          %508 = sbr.rel (%p506) target = $region60
        $region59: #{vit_forward.1} parent=11 // pred_region
          _
        $region60: #{vit_forward.1} parent=11 // pred_fallthru
          _
        // Predicated region
        $region61: #{vit_forward.1} parent=11 // pred_check
          %p509 = pneg %p327
        $region62: #{vit_forward.1} parent=11 // pred_check_branch
          %511 = sbr.rel (%p509) target = $region64
        $region63: #{vit_forward.1} parent=11 // pred_region
          _
        $region64: #{vit_forward.1} parent=11 // pred_fallthru
          _
        // Predicated region
        $region65: #{vit_forward.1} parent=11 // pred_check
          %p512 = pneg %p348
        $region66: #{vit_forward.1} parent=11 // pred_check_branch
          %514 = sbr.rel (%p512) target = $region68
        $region67: #{vit_forward.1} parent=11 // pred_region
          _
        $region68: #{vit_forward.1} parent=11 // pred_fallthru
          _
        // Predicated region
        $region69: #{vit_forward.1} parent=11 // pred_check
          %p515 = pneg %p369
        $region70: #{vit_forward.1} parent=11 // pred_check_branch
          %517 = sbr.rel (%p515) target = $region72
        $region71: #{vit_forward.1} parent=11 // pred_region
          _
        $region72: #{vit_forward.1} parent=11 // pred_fallthru
          _
        // Predicated region
        $region73: #{vit_forward.1} parent=11 // pred_check
          %p518 = pneg %p390
        $region74: #{vit_forward.1} parent=11 // pred_check_branch
          %520 = sbr.rel (%p518) target = $region76
        $region75: #{vit_forward.1} parent=11 // pred_region
          _
        $region76: #{vit_forward.1} parent=11 // pred_fallthru
          _
        // Predicated region
        $region77: #{vit_forward.1} parent=11 // pred_check
          %p521 = pneg %p411
        $region78: #{vit_forward.1} parent=11 // pred_check_branch
          %523 = sbr.rel (%p521) target = $region80
        $region79: #{vit_forward.1} parent=11 // pred_region
          _
        $region80: #{vit_forward.1} parent=11 // pred_fallthru
          _
        // Predicated region
        $region81: #{vit_forward.1} parent=11 // pred_check
          %p524 = pneg %p432
        $region82: #{vit_forward.1} parent=11 // pred_check_branch
          %526 = sbr.rel (%p524) target = $region84
        $region83: #{vit_forward.1} parent=11 // pred_region
          _
        $region84: #{vit_forward.1} parent=11 // pred_fallthru
          _
      $region12: #{vit_forward.1} parent=5 // pred_fallthru
        _
      %p527 = scmp.lt.s32.totalorder %s28, 2
      // Predicated region
      $region85: #{vit_forward.1} parent=5 // pred_check
        %p528 = pneg %p527
      $region86: #{vit_forward.1} parent=5 // pred_check_branch
        %530 = sbr.rel (%p528) target = $region88
      $region87: #{vit_forward.1} parent=5 // pred_region
        // Predicated region
        $region89: #{vit_forward.1} parent=87 // pred_check
          %p531 = pneg %p48
        $region90: #{vit_forward.1} parent=87 // pred_check_branch
          %533 = sbr.rel (%p531) target = $region92
        $region91: #{vit_forward.1} parent=87 // pred_region
          %p534 = scmp.lt.s32.totalorder %s28, 1
          %s535 = scalar_select %p534, %s28, 1
          %s536 = smul.addr %s535, 3
          %s537 = smul.addr %s536, 4
          %s538 = scalar_lea.vmem %s0, %s537
        $region92: #{vit_forward.1} parent=87 // pred_fallthru
          _
      $region88: #{vit_forward.1} parent=5 // pred_fallthru
        _
      %p539 = scmp.le.s32.totalorder 1, %s28
      %p540 = scmp.lt.s32.totalorder %s28, 3
      %p541 = pnand %p539, %p540
      %p542 = pneg %p541
      // Predicated region
      $region93: #{vit_forward.1} parent=5 // pred_check
        _
      $region94: #{vit_forward.1} parent=5 // pred_check_branch
        %544 = sbr.rel (%p541) target = $region96
      $region95: #{vit_forward.1} parent=5 // pred_region
        %s545 = ssub.s32 %s28, 1
        %p546 = scmp.lt.s32.totalorder %s33, 1
        %s547 = scalar_select %p546, %s33, 1
        %s548 = smul.addr %s547, 3
        %s549 = smul.addr %s548, 4
        %s550 = scalar_lea.vmem %s0, %s549
        %p551 = pneg %p54
        %p552 = pneg %p51
        %p553 = pneg %p75
        %p554 = pneg %p72
        %p555 = pneg %p96
        %p556 = pneg %p93
        %p557 = pneg %p117
        %p558 = pneg %p114
        %p559 = pneg %p138
        %p560 = pneg %p135
        %p561 = pneg %p159
        %p562 = pneg %p156
        %p563 = pneg %p180
        %p564 = pneg %p177
        %p565 = pneg %p201
        %p566 = pneg %p198
        %p567 = pneg %p222
        %p568 = pneg %p219
        %p569 = pneg %p243
        %p570 = pneg %p240
        %p571 = pneg %p264
        %p572 = pneg %p261
        %p573 = pneg %p285
        %p574 = pneg %p282
        %p575 = pneg %p306
        %p576 = pneg %p303
        %p577 = pneg %p327
        %p578 = pneg %p324
        %p579 = pneg %p348
        %p580 = pneg %p345
        %p581 = pneg %p369
        %p582 = pneg %p366
        %p583 = pneg %p390
        %p584 = pneg %p387
        %p585 = pneg %p411
        %p586 = pneg %p408
        %p587 = pneg %p432
        %p588 = pneg %p429
        %p589 = pneg %p458
        %p590 = pneg %p455
        %s591 = sand.u32 %s445, 1
        %s592 = scalar_lea.sflag [#allocation3], %s591
        %s593 = sand.u32 %s445, 1
        %s594 = scalar_lea.vmem [#allocation2], %s593
        %p595 = scmp.lt.s32.totalorder %s33, 1
        %s596 = scalar_select %p595, %s33, 1
        %s597 = smul.addr %s596, 3
        %s598 = smul.addr %s597, 4
        %s599 = scalar_lea.vmem %s0, %s598
        %v601 = vld [vmem:[%s599] sm:$0xf]
        %v602 = vld [vmem:[%s599 + $0x4] sm:$0xf]
        %v603 = vld [vmem:[%s599 + $0x8] sm:$0x1]
        %v604 = vld [vmem:[%s1] sm:$0xf]
        %v605 = vld [vmem:[%s1 + $0x4] sm:$0xf]
        %v606 = vld [vmem:[%s1 + $0x8] sm:$0xf]
        %v607 = vld [vmem:[%s1 + $0xc] sm:$0xf]
        %v608 = vld [vmem:[%s1 + $0x10] sm:$0xf]
        %v609 = vld [vmem:[%s1 + $0x14] sm:$0xf]
        %v610 = vld [vmem:[%s2] sm:$0xff]
        %v611 = vld [vmem:[%s2 + $0x8] sm:$0xff]
        %v612 = vld [vmem:[%s2 + $0x10] sm:$0x1]
        %v616 = vunpack.c.l.b16 %v601
        %v617 = vunpack.c.l.b16 %v602
        %v618 = vunpack.c.l.b16 %v603
        %v619 = vpack.c.b16 %v617, %v616
        %v620 = vpack.c.b16 %v618, %v618
        %v627 = vunpack.c.l.b16 %v604
        %v628 = vunpack.c.l.b16 %v605
        %v629 = vunpack.c.l.b16 %v606
        %v630 = vunpack.c.l.b16 %v607
        %v631 = vunpack.c.l.b16 %v608
        %v632 = vunpack.c.l.b16 %v609
        %v633 = vpack.c.b16 %v628, %v627
        %v634 = vpack.c.b16 %v630, %v629
        %v635 = vpack.c.b16 %v632, %v631
        %vm639 = vcmask 392192
        %v641 = vsel %vm639, %v619, 0
        %v644 = vsel %vm639, %v620, 0
        %646 = vmatprep.subr.bf16.mxu0 0
        %647 = vmatpush1.bf16.msra.mxu0 0
        %648 = vmatprep.subr.bf16.mxu0 0
        %649 = vmatpush1.bf16.msra.mxu0 0
        %650 = vmatprep.subr.bf16.mxu0 0
        %651 = vmatpush1.bf16.msra.mxu0 0
        %652 = vmatprep.subr.bf16.mxu0 0
        %653 = vmatpush1.bf16.msra.mxu0 0
        %654 = vmatprep.subr.bf16.mxu0 0
        %655 = vmatpush1.bf16.msra.mxu0 0
        %656 = vmatprep.subr.bf16.mxu0 0
        %657 = vmatpush1.bf16.msra.mxu0 %v635
        %658 = vmatprep.subr.bf16.mxu0 0
        %659 = vmatpush1.bf16.msra.mxu0 %v634
        %660 = vmatprep.subr.bf16.mxu0 0
        %661 = vmatpush1.bf16.msra.mxu0 %v633
        %662 = vmatprep.subr.bf16.mxu0 0
        %663 = vmatpush2.bf16.msra.mxu0 0
        %664 = vmatprep.subr.bf16.mxu0 0
        %665 = vmatpush2.bf16.msra.mxu0 0
        %666 = vmatprep.subr.bf16.mxu0 0
        %667 = vmatpush2.bf16.msra.mxu0 0
        %668 = vmatprep.subr.bf16.mxu0 0
        %669 = vmatpush2.bf16.msra.mxu0 0
        %670 = vmatprep.subr.bf16.mxu0 0
        %671 = vmatpush2.bf16.msra.mxu0 0
        %672 = vmatprep.subr.bf16.mxu0 0
        %673 = vmatpush2.bf16.msra.mxu0 0
        %674 = vmatprep.subr.bf16.mxu0 0
        %675 = vmatpush2.bf16.msra.mxu0 0
        %676 = vmatprep.subr.bf16.mxu0 0
        %677 = vmatpush2.bf16.msra.mxu0 0
        %678 = vmatprep.mubr.bf16.mxu0 0
        %679 = vmatmul.mubr.bf16.gmra.mxu0 %v641
        %v680 = vpop.f32.mrf.mxu0
        %v681 = vadd.f32 %v610, %v680
        %v682 = vpop.f32.mrf.mxu0
        %v683 = vpop.f32.mrf.mxu0
        %v684 = vadd.f32 %v611, %v683
        %v685 = vpop.f32.mrf.mxu0
        %686 = vmatprep.mubr.bf16.mxu0 0
        %687 = vmatmul.mubr.bf16.gmra.mxu0 %v644
        %v688 = vpop.f32.mrf.mxu0
        %v689 = vadd.f32 %v612, %v688
        %v690 = vpop.f32.mrf.mxu0
        %v691 = vpop.f32.mrf.mxu0
        %v692 = vpop.f32.mrf.mxu0
        %693 = vdwg.mxu0
        %v694 = vld [vmem:[%s3] sm:$0x1]
        %v695 = vld [vmem:[%s4] sm:$0x1]
        %vm696 = vcmask 261120
        %v697 = vsel %vm696, %v681, 0.0
        %698 = vadd.xlane.f32.xlu0 %v697
        %v699 = vpop.xlane.xlu0 %698
        %v700 = vsel %vm696, %v684, 0.0
        %701 = vadd.xlane.f32.xlu0 %v700
        %v702 = vpop.xlane.xlu0 %701
        %vm703 = vcmask 253952
        %v704 = vsel %vm703, %v689, 0.0
        %705 = vadd.xlane.f32.xlu0 %v704
        %v706 = vpop.xlane.xlu0 %705
        %v707 = vrcp.pop 32.0
        %v708 = vmul.f32 %v699, %v707
        %v709 = vmul.f32 %v702, %v707
        %v710 = vmul.f32 %v706, %v707
        %v711 = vsub.f32 %v681, %v708
        %v712 = vsub.f32 %v684, %v709
        %v713 = vsub.f32 %v689, %v710
        %v714 = vmul.f32 %v711, %v711
        %v715 = vmul.f32 %v712, %v712
        %v716 = vmul.f32 %v713, %v713
        %v717 = vsel %vm696, %v714, 0.0
        %718 = vadd.xlane.f32.xlu0 %v717
        %v719 = vpop.xlane.xlu0 %718
        %v720 = vsel %vm696, %v715, 0.0
        %721 = vadd.xlane.f32.xlu0 %v720
        %v722 = vpop.xlane.xlu0 %721
        %v723 = vsel %vm703, %v716, 0.0
        %724 = vadd.xlane.f32.xlu0 %v723
        %v725 = vpop.xlane.xlu0 %724
        %v726 = vmul.f32 %v719, %v707
        %v727 = vmul.f32 %v722, %v707
        %v728 = vmul.f32 %v725, %v707
        %v729 = vadd.f32 %v726, 1e-05
        %v730 = vadd.f32 %v727, 1e-05
        %v731 = vadd.f32 %v728, 1e-05
        %v732 = vrsqrt.pop %v729
        %v733 = vrsqrt.pop %v730
        %v734 = vrsqrt.pop %v731
        %v735 = vmul.f32 %v711, %v732
        %v736 = vmul.f32 %v712, %v733
        %v737 = vmul.f32 %v713, %v734
        %v739 = vlaneseq
        %v740 = vshrl.u32 %v739, 7
        %v741 = vsub.s32 0, %v740
        %v742 = vrot.slane %v694, %v741
        %v744 = vmul.f32 %v735, %v742
        %v745 = vmul.f32 %v736, %v742
        %v746 = vmul.f32 %v737, %v742
        %v748 = vlaneseq
        %v749 = vshrl.u32 %v748, 7
        %v750 = vsub.s32 0, %v749
        %v751 = vrot.slane %v695, %v750
        %v753 = vadd.f32 %v744, %v751
        %v754 = vadd.f32 %v745, %v751
        %v755 = vadd.f32 %v746, %v751
        %v756 = vpack.c.bf16 %v754, %v753
        %v757 = vpack.c.bf16 %v755, %v755
        %v758 = vld [vmem:[%s5] sm:$0xf]
        %v759 = vld [vmem:[%s5 + $0x4] sm:$0xf]
        %v760 = vld [vmem:[%s5 + $0x8] sm:$0xf]
        %v761 = vld [vmem:[%s5 + $0xc] sm:$0xf]
        %v762 = vld [vmem:[%s6] sm:$0x1]
        %v764 = vlaneseq
        %v765 = vshrl.u32 %v764, 7
        %v766 = vsub.s32 0, %v765
        %v767 = vrot.slane %v762, %v766
        %v773 = vunpack.c.l.b16 %v758
        %v774 = vunpack.c.l.b16 %v759
        %v775 = vunpack.c.l.b16 %v760
        %v776 = vunpack.c.l.b16 %v761
        %v777 = vpack.c.b16 %v774, %v773
        %v778 = vpack.c.b16 %v776, %v775
        %v782 = vsel %vm696, %v756, 0
        %v785 = vsel %vm696, %v757, 0
        %787 = vmatprep.subr.bf16.mxu0 0
        %788 = vmatpush1.bf16.msra.mxu0 0
        %789 = vmatprep.subr.bf16.mxu0 0
        %790 = vmatpush1.bf16.msra.mxu0 0
        %791 = vmatprep.subr.bf16.mxu0 0
        %792 = vmatpush1.bf16.msra.mxu0 0
        %793 = vmatprep.subr.bf16.mxu0 0
        %794 = vmatpush1.bf16.msra.mxu0 0
        %795 = vmatprep.subr.bf16.mxu0 0
        %796 = vmatpush1.bf16.msra.mxu0 0
        %797 = vmatprep.subr.bf16.mxu0 0
        %798 = vmatpush1.bf16.msra.mxu0 0
        %799 = vmatprep.subr.bf16.mxu0 0
        %800 = vmatpush1.bf16.msra.mxu0 %v778
        %801 = vmatprep.subr.bf16.mxu0 0
        %802 = vmatpush1.bf16.msra.mxu0 %v777
        %803 = vmatprep.subr.bf16.mxu0 0
        %804 = vmatpush2.bf16.msra.mxu0 0
        %805 = vmatprep.subr.bf16.mxu0 0
        %806 = vmatpush2.bf16.msra.mxu0 0
        %807 = vmatprep.subr.bf16.mxu0 0
        %808 = vmatpush2.bf16.msra.mxu0 0
        %809 = vmatprep.subr.bf16.mxu0 0
        %810 = vmatpush2.bf16.msra.mxu0 0
        %811 = vmatprep.subr.bf16.mxu0 0
        %812 = vmatpush2.bf16.msra.mxu0 0
        %813 = vmatprep.subr.bf16.mxu0 0
        %814 = vmatpush2.bf16.msra.mxu0 0
        %815 = vmatprep.subr.bf16.mxu0 0
        %816 = vmatpush2.bf16.msra.mxu0 0
        %817 = vmatprep.subr.bf16.mxu0 0
        %818 = vmatpush2.bf16.msra.mxu0 0
        %819 = vmatprep.mubr.bf16.mxu0 0
        %820 = vmatmul.mubr.bf16.gmra.mxu0 %v782
        %v821 = vpop.f32.mrf.mxu0
        %v822 = vadd.f32 %v767, %v821
        %v823 = vpop.f32.mrf.mxu0
        %v824 = vpop.f32.mrf.mxu0
        %v825 = vadd.f32 %v767, %v824
        %v826 = vpop.f32.mrf.mxu0
        %827 = vmatprep.mubr.bf16.mxu0 0
        %828 = vmatmul.mubr.bf16.gmra.mxu0 %v785
        %v829 = vpop.f32.mrf.mxu0
        %v830 = vadd.f32 %v767, %v829
        %v831 = vpop.f32.mrf.mxu0
        %v832 = vpop.f32.mrf.mxu0
        %v833 = vpop.f32.mrf.mxu0
        %834 = vdwg.mxu0
        %838 = vrot.lane.b32.xlu0 %v822, 120
        %v839 = vpop.permute.xlu0 %838
        %840 = vrot.lane.b32.xlu0 %v825, 120
        %v841 = vpop.permute.xlu0 %840
        %842 = vrot.lane.b32.xlu0 %v830, 120
        %v843 = vpop.permute.xlu0 %842
        %847 = vrot.lane.b32.xlu0 %v822, 112
        %v848 = vpop.permute.xlu0 %847
        %849 = vrot.lane.b32.xlu0 %v825, 112
        %v850 = vpop.permute.xlu0 %849
        %851 = vrot.lane.b32.xlu0 %v830, 112
        %v852 = vpop.permute.xlu0 %851
        %856 = vrot.lane.b32.xlu0 %v822, 104
        %v857 = vpop.permute.xlu0 %856
        %858 = vrot.lane.b32.xlu0 %v825, 104
        %v859 = vpop.permute.xlu0 %858
        %860 = vrot.lane.b32.xlu0 %v830, 104
        %v861 = vpop.permute.xlu0 %860
        %v865 = vpack.c.bf16 %v825, %v822
        %v866 = vpack.c.bf16 %v830, %v830
        %v867 = vpack.c.bf16 %v841, %v839
        %v868 = vpack.c.bf16 %v843, %v843
        %v869 = vpack.c.bf16 %v850, %v848
        %v870 = vpack.c.bf16 %v852, %v852
        %v871 = vpack.c.bf16 %v859, %v857
        %v872 = vpack.c.bf16 %v861, %v861
        %875 = vrot.lane.b32.xlu0 %v865, 96
        %v876 = vpop.permute.xlu0 %875
        %877 = vrot.lane.b32.xlu0 %v866, 96
        %v878 = vpop.permute.xlu0 %877
        %vm879 = vcmask 64512
        %v881 = vsel %vm879, %v865, 0
        %v884 = vsel %vm879, %v866, 0
        %v887 = vsel %vm879, %v876, 0
        %v890 = vsel %vm879, %v878, 0
        %892 = vmatprep.subr.bf16.mxu0 0
        %893 = vmatpush1.bf16.xpose.msra.mxu0 0
        %894 = vmatprep.subr.bf16.mxu0 0
        %895 = vmatpush1.bf16.xpose.msra.mxu0 0
        %896 = vmatprep.subr.bf16.mxu0 0
        %897 = vmatpush1.bf16.xpose.msra.mxu0 0
        %898 = vmatprep.subr.bf16.mxu0 0
        %899 = vmatpush1.bf16.xpose.msra.mxu0 0
        %900 = vmatprep.subr.bf16.mxu0 0
        %901 = vmatpush1.bf16.xpose.msra.mxu0 0
        %902 = vmatprep.subr.bf16.mxu0 0
        %903 = vmatpush1.bf16.xpose.msra.mxu0 0
        %904 = vmatprep.subr.bf16.mxu0 0
        %905 = vmatpush1.bf16.xpose.msra.mxu0 %v890
        %906 = vmatprep.subr.bf16.mxu0 0
        %907 = vmatpush1.bf16.xpose.msra.mxu0 %v887
        %908 = vmatprep.subr.bf16.mxu0 0
        %909 = vmatpush2.bf16.xpose.msra.mxu0 0
        %910 = vmatprep.subr.bf16.mxu0 0
        %911 = vmatpush2.bf16.xpose.msra.mxu0 0
        %912 = vmatprep.subr.bf16.mxu0 0
        %913 = vmatpush2.bf16.xpose.msra.mxu0 0
        %914 = vmatprep.subr.bf16.mxu0 0
        %915 = vmatpush2.bf16.xpose.msra.mxu0 0
        %916 = vmatprep.subr.bf16.mxu0 0
        %917 = vmatpush2.bf16.xpose.msra.mxu0 0
        %918 = vmatprep.subr.bf16.mxu0 0
        %919 = vmatpush2.bf16.xpose.msra.mxu0 0
        %920 = vmatprep.subr.bf16.mxu0 0
        %921 = vmatpush2.bf16.xpose.msra.mxu0 0
        %922 = vmatprep.subr.bf16.mxu0 0
        %923 = vmatpush2.bf16.xpose.msra.mxu0 0
        %924 = vmatprep.mubr.bf16.mxu0 0
        %925 = vmatmul.mubr.bf16.gmra.mxu0 %v881
        %v926 = vpop.f32.mrf.mxu0
        %v927 = vadd.f32 0.0, %v926
        %v928 = vpop.f32.mrf.mxu0
        %v929 = vpop.f32.mrf.mxu0
        %v930 = vadd.f32 0.0, %v929
        %v931 = vpop.f32.mrf.mxu0
        %932 = vmatprep.mubr.bf16.mxu0 0
        %933 = vmatmul.mubr.bf16.gmra.mxu0 %v884
        %v934 = vpop.f32.mrf.mxu0
        %v935 = vadd.f32 0.0, %v934
        %v936 = vpop.f32.mrf.mxu0
        %v937 = vpop.f32.mrf.mxu0
        %v938 = vpop.f32.mrf.mxu0
        %939 = vdwg.mxu0
        %942 = vrot.lane.b32.xlu0 %v867, 96
        %v943 = vpop.permute.xlu0 %942
        %944 = vrot.lane.b32.xlu0 %v868, 96
        %v945 = vpop.permute.xlu0 %944
        %v947 = vsel %vm879, %v867, 0
        %v950 = vsel %vm879, %v868, 0
        %v953 = vsel %vm879, %v943, 0
        %v956 = vsel %vm879, %v945, 0
        %958 = vmatprep.subr.bf16.mxu0 0
        %959 = vmatpush1.bf16.xpose.msra.mxu0 0
        %960 = vmatprep.subr.bf16.mxu0 0
        %961 = vmatpush1.bf16.xpose.msra.mxu0 0
        %962 = vmatprep.subr.bf16.mxu0 0
        %963 = vmatpush1.bf16.xpose.msra.mxu0 0
        %964 = vmatprep.subr.bf16.mxu0 0
        %965 = vmatpush1.bf16.xpose.msra.mxu0 0
        %966 = vmatprep.subr.bf16.mxu0 0
        %967 = vmatpush1.bf16.xpose.msra.mxu0 0
        %968 = vmatprep.subr.bf16.mxu0 0
        %969 = vmatpush1.bf16.xpose.msra.mxu0 0
        %970 = vmatprep.subr.bf16.mxu0 0
        %971 = vmatpush1.bf16.xpose.msra.mxu0 %v956
        %972 = vmatprep.subr.bf16.mxu0 0
        %973 = vmatpush1.bf16.xpose.msra.mxu0 %v953
        %974 = vmatprep.subr.bf16.mxu0 0
        %975 = vmatpush2.bf16.xpose.msra.mxu0 0
        %976 = vmatprep.subr.bf16.mxu0 0
        %977 = vmatpush2.bf16.xpose.msra.mxu0 0
        %978 = vmatprep.subr.bf16.mxu0 0
        %979 = vmatpush2.bf16.xpose.msra.mxu0 0
        %980 = vmatprep.subr.bf16.mxu0 0
        %981 = vmatpush2.bf16.xpose.msra.mxu0 0
        %982 = vmatprep.subr.bf16.mxu0 0
        %983 = vmatpush2.bf16.xpose.msra.mxu0 0
        %984 = vmatprep.subr.bf16.mxu0 0
        %985 = vmatpush2.bf16.xpose.msra.mxu0 0
        %986 = vmatprep.subr.bf16.mxu0 0
        %987 = vmatpush2.bf16.xpose.msra.mxu0 0
        %988 = vmatprep.subr.bf16.mxu0 0
        %989 = vmatpush2.bf16.xpose.msra.mxu0 0
        %990 = vmatprep.mubr.bf16.mxu0 0
        %991 = vmatmul.mubr.bf16.gmra.mxu0 %v947
        %v992 = vpop.f32.mrf.mxu0
        %v993 = vadd.f32 0.0, %v992
        %v994 = vpop.f32.mrf.mxu0
        %v995 = vpop.f32.mrf.mxu0
        %v996 = vadd.f32 0.0, %v995
        %v997 = vpop.f32.mrf.mxu0
        %998 = vmatprep.mubr.bf16.mxu0 0
        %999 = vmatmul.mubr.bf16.gmra.mxu0 %v950
        %v1000 = vpop.f32.mrf.mxu0
        %v1001 = vadd.f32 0.0, %v1000
        %v1002 = vpop.f32.mrf.mxu0
        %v1003 = vpop.f32.mrf.mxu0
        %v1004 = vpop.f32.mrf.mxu0
        %1005 = vdwg.mxu0
        %1008 = vrot.lane.b32.xlu0 %v869, 96
        %v1009 = vpop.permute.xlu0 %1008
        %1010 = vrot.lane.b32.xlu0 %v870, 96
        %v1011 = vpop.permute.xlu0 %1010
        %v1013 = vsel %vm879, %v869, 0
        %v1016 = vsel %vm879, %v870, 0
        %v1019 = vsel %vm879, %v1009, 0
        %v1022 = vsel %vm879, %v1011, 0
        %1024 = vmatprep.subr.bf16.mxu0 0
        %1025 = vmatpush1.bf16.xpose.msra.mxu0 0
        %1026 = vmatprep.subr.bf16.mxu0 0
        %1027 = vmatpush1.bf16.xpose.msra.mxu0 0
        %1028 = vmatprep.subr.bf16.mxu0 0
        %1029 = vmatpush1.bf16.xpose.msra.mxu0 0
        %1030 = vmatprep.subr.bf16.mxu0 0
        %1031 = vmatpush1.bf16.xpose.msra.mxu0 0
        %1032 = vmatprep.subr.bf16.mxu0 0
        %1033 = vmatpush1.bf16.xpose.msra.mxu0 0
        %1034 = vmatprep.subr.bf16.mxu0 0
        %1035 = vmatpush1.bf16.xpose.msra.mxu0 0
        %1036 = vmatprep.subr.bf16.mxu0 0
        %1037 = vmatpush1.bf16.xpose.msra.mxu0 %v1022
        %1038 = vmatprep.subr.bf16.mxu0 0
        %1039 = vmatpush1.bf16.xpose.msra.mxu0 %v1019
        %1040 = vmatprep.subr.bf16.mxu0 0
        %1041 = vmatpush2.bf16.xpose.msra.mxu0 0
        %1042 = vmatprep.subr.bf16.mxu0 0
        %1043 = vmatpush2.bf16.xpose.msra.mxu0 0
        %1044 = vmatprep.subr.bf16.mxu0 0
        %1045 = vmatpush2.bf16.xpose.msra.mxu0 0
        %1046 = vmatprep.subr.bf16.mxu0 0
        %1047 = vmatpush2.bf16.xpose.msra.mxu0 0
        %1048 = vmatprep.subr.bf16.mxu0 0
        %1049 = vmatpush2.bf16.xpose.msra.mxu0 0
        %1050 = vmatprep.subr.bf16.mxu0 0
        %1051 = vmatpush2.bf16.xpose.msra.mxu0 0
        %1052 = vmatprep.subr.bf16.mxu0 0
        %1053 = vmatpush2.bf16.xpose.msra.mxu0 0
        %1054 = vmatprep.subr.bf16.mxu0 0
        %1055 = vmatpush2.bf16.xpose.msra.mxu0 0
        %1056 = vmatprep.mubr.bf16.mxu0 0
        %1057 = vmatmul.mubr.bf16.gmra.mxu0 %v1013
        %v1058 = vpop.f32.mrf.mxu0
        %v1059 = vadd.f32 0.0, %v1058
        %v1060 = vpop.f32.mrf.mxu0
        %v1061 = vpop.f32.mrf.mxu0
        %v1062 = vadd.f32 0.0, %v1061
        %v1063 = vpop.f32.mrf.mxu0
        %1064 = vmatprep.mubr.bf16.mxu0 0
        %1065 = vmatmul.mubr.bf16.gmra.mxu0 %v1016
        %v1066 = vpop.f32.mrf.mxu0
        %v1067 = vadd.f32 0.0, %v1066
        %v1068 = vpop.f32.mrf.mxu0
        %v1069 = vpop.f32.mrf.mxu0
        %v1070 = vpop.f32.mrf.mxu0
        %1071 = vdwg.mxu0
        %1074 = vrot.lane.b32.xlu0 %v871, 96
        %v1075 = vpop.permute.xlu0 %1074
        %1076 = vrot.lane.b32.xlu0 %v872, 96
        %v1077 = vpop.permute.xlu0 %1076
        %v1079 = vsel %vm879, %v871, 0
        %v1082 = vsel %vm879, %v872, 0
        %v1085 = vsel %vm879, %v1075, 0
        %v1088 = vsel %vm879, %v1077, 0
        %1090 = vmatprep.subr.bf16.mxu0 0
        %1091 = vmatpush1.bf16.xpose.msra.mxu0 0
        %1092 = vmatprep.subr.bf16.mxu0 0
        %1093 = vmatpush1.bf16.xpose.msra.mxu0 0
        %1094 = vmatprep.subr.bf16.mxu0 0
        %1095 = vmatpush1.bf16.xpose.msra.mxu0 0
        %1096 = vmatprep.subr.bf16.mxu0 0
        %1097 = vmatpush1.bf16.xpose.msra.mxu0 0
        %1098 = vmatprep.subr.bf16.mxu0 0
        %1099 = vmatpush1.bf16.xpose.msra.mxu0 0
        %1100 = vmatprep.subr.bf16.mxu0 0
        %1101 = vmatpush1.bf16.xpose.msra.mxu0 0
        %1102 = vmatprep.subr.bf16.mxu0 0
        %1103 = vmatpush1.bf16.xpose.msra.mxu0 %v1088
        %1104 = vmatprep.subr.bf16.mxu0 0
        %1105 = vmatpush1.bf16.xpose.msra.mxu0 %v1085
        %1106 = vmatprep.subr.bf16.mxu0 0
        %1107 = vmatpush2.bf16.xpose.msra.mxu0 0
        %1108 = vmatprep.subr.bf16.mxu0 0
        %1109 = vmatpush2.bf16.xpose.msra.mxu0 0
        %1110 = vmatprep.subr.bf16.mxu0 0
        %1111 = vmatpush2.bf16.xpose.msra.mxu0 0
        %1112 = vmatprep.subr.bf16.mxu0 0
        %1113 = vmatpush2.bf16.xpose.msra.mxu0 0
        %1114 = vmatprep.subr.bf16.mxu0 0
        %1115 = vmatpush2.bf16.xpose.msra.mxu0 0
        %1116 = vmatprep.subr.bf16.mxu0 0
        %1117 = vmatpush2.bf16.xpose.msra.mxu0 0
        %1118 = vmatprep.subr.bf16.mxu0 0
        %1119 = vmatpush2.bf16.xpose.msra.mxu0 0
        %1120 = vmatprep.subr.bf16.mxu0 0
        %1121 = vmatpush2.bf16.xpose.msra.mxu0 0
        %1122 = vmatprep.mubr.bf16.mxu0 0
        %1123 = vmatmul.mubr.bf16.gmra.mxu0 %v1079
        %v1124 = vpop.f32.mrf.mxu0
        %v1125 = vadd.f32 0.0, %v1124
        %v1126 = vpop.f32.mrf.mxu0
        %v1127 = vpop.f32.mrf.mxu0
        %v1128 = vadd.f32 0.0, %v1127
        %v1129 = vpop.f32.mrf.mxu0
        %1130 = vmatprep.mubr.bf16.mxu0 0
        %1131 = vmatmul.mubr.bf16.gmra.mxu0 %v1082
        %v1132 = vpop.f32.mrf.mxu0
        %v1133 = vadd.f32 0.0, %v1132
        %v1134 = vpop.f32.mrf.mxu0
        %v1135 = vpop.f32.mrf.mxu0
        %v1136 = vpop.f32.mrf.mxu0
        %1137 = vdwg.mxu0
        %v1138 = vmul.f32 %v927, 0.17677669
        %v1139 = vmul.f32 %v930, 0.17677669
        %v1140 = vmul.f32 %v935, 0.17677669
        %v1141 = vmul.f32 %v993, 0.17677669
        %v1142 = vmul.f32 %v996, 0.17677669
        %v1143 = vmul.f32 %v1001, 0.17677669
        %v1144 = vmul.f32 %v1059, 0.17677669
        %v1145 = vmul.f32 %v1062, 0.17677669
        %v1146 = vmul.f32 %v1067, 0.17677669
        %v1147 = vmul.f32 %v1125, 0.17677669
        %v1148 = vmul.f32 %v1128, 0.17677669
        %v1149 = vmul.f32 %v1133, 0.17677669
        %vm1150 = vcmask 138240
        %v1151 = vsel %vm1150, %v1138, -inf
        %1152 = vmax.xlane.f32.xlu0 %v1151
        %v1153 = vpop.xlane.xlu0 %1152
        %v1154 = vsel %vm1150, %v1139, -inf
        %1155 = vmax.xlane.f32.xlu0 %v1154
        %v1156 = vpop.xlane.xlu0 %1155
        %vm1157 = vcmask 131072
        %v1158 = vsel %vm1157, %v1140, -inf
        %1159 = vmax.xlane.f32.xlu0 %v1158
        %v1160 = vpop.xlane.xlu0 %1159
        %v1161 = vsel %vm1150, %v1141, -inf
        %1162 = vmax.xlane.f32.xlu0 %v1161
        %v1163 = vpop.xlane.xlu0 %1162
        %v1164 = vsel %vm1150, %v1142, -inf
        %1165 = vmax.xlane.f32.xlu0 %v1164
        %v1166 = vpop.xlane.xlu0 %1165
        %v1167 = vsel %vm1157, %v1143, -inf
        %1168 = vmax.xlane.f32.xlu0 %v1167
        %v1169 = vpop.xlane.xlu0 %1168
        %v1170 = vsel %vm1150, %v1144, -inf
        %1171 = vmax.xlane.f32.xlu0 %v1170
        %v1172 = vpop.xlane.xlu0 %1171
        %v1173 = vsel %vm1150, %v1145, -inf
        %1174 = vmax.xlane.f32.xlu0 %v1173
        %v1175 = vpop.xlane.xlu0 %1174
        %v1176 = vsel %vm1157, %v1146, -inf
        %1177 = vmax.xlane.f32.xlu0 %v1176
        %v1178 = vpop.xlane.xlu0 %1177
        %v1179 = vsel %vm1150, %v1147, -inf
        %1180 = vmax.xlane.f32.xlu0 %v1179
        %v1181 = vpop.xlane.xlu0 %1180
        %v1182 = vsel %vm1150, %v1148, -inf
        %1183 = vmax.xlane.f32.xlu0 %v1182
        %v1184 = vpop.xlane.xlu0 %1183
        %v1185 = vsel %vm1157, %v1149, -inf
        %1186 = vmax.xlane.f32.xlu0 %v1185
        %v1187 = vpop.xlane.xlu0 %1186
        %v1188 = vsub.f32 %v1138, %v1153
        %v1189 = vsub.f32 %v1139, %v1156
        %v1190 = vsub.f32 %v1140, %v1160
        %v1191 = vsub.f32 %v1141, %v1163
        %v1192 = vsub.f32 %v1142, %v1166
        %v1193 = vsub.f32 %v1143, %v1169
        %v1194 = vsub.f32 %v1144, %v1172
        %v1195 = vsub.f32 %v1145, %v1175
        %v1196 = vsub.f32 %v1146, %v1178
        %v1197 = vsub.f32 %v1147, %v1181
        %v1198 = vsub.f32 %v1148, %v1184
        %v1199 = vsub.f32 %v1149, %v1187
        %v1200 = vmul.f32 %v1188, 1.442695
        %v1201 = vpow.pop %v1200
        %v1202 = vmul.f32 %v1189, 1.442695
        %v1203 = vpow.pop %v1202
        %v1204 = vmul.f32 %v1190, 1.442695
        %v1205 = vpow.pop %v1204
        %v1206 = vmul.f32 %v1191, 1.442695
        %v1207 = vpow.pop %v1206
        %v1208 = vmul.f32 %v1192, 1.442695
        %v1209 = vpow.pop %v1208
        %v1210 = vmul.f32 %v1193, 1.442695
        %v1211 = vpow.pop %v1210
        %v1212 = vmul.f32 %v1194, 1.442695
        %v1213 = vpow.pop %v1212
        %v1214 = vmul.f32 %v1195, 1.442695
        %v1215 = vpow.pop %v1214
        %v1216 = vmul.f32 %v1196, 1.442695
        %v1217 = vpow.pop %v1216
        %v1218 = vmul.f32 %v1197, 1.442695
        %v1219 = vpow.pop %v1218
        %v1220 = vmul.f32 %v1198, 1.442695
        %v1221 = vpow.pop %v1220
        %v1222 = vmul.f32 %v1199, 1.442695
        %v1223 = vpow.pop %v1222
        %v1224 = vsel %vm1150, %v1201, 0.0
        %1225 = vadd.xlane.f32.xlu0 %v1224
        %v1226 = vpop.xlane.xlu0 %1225
        %v1227 = vsel %vm1150, %v1203, 0.0
        %1228 = vadd.xlane.f32.xlu0 %v1227
        %v1229 = vpop.xlane.xlu0 %1228
        %v1230 = vsel %vm1157, %v1205, 0.0
        %1231 = vadd.xlane.f32.xlu0 %v1230
        %v1232 = vpop.xlane.xlu0 %1231
        %v1233 = vsel %vm1150, %v1207, 0.0
        %1234 = vadd.xlane.f32.xlu0 %v1233
        %v1235 = vpop.xlane.xlu0 %1234
        %v1236 = vsel %vm1150, %v1209, 0.0
        %1237 = vadd.xlane.f32.xlu0 %v1236
        %v1238 = vpop.xlane.xlu0 %1237
        %v1239 = vsel %vm1157, %v1211, 0.0
        %1240 = vadd.xlane.f32.xlu0 %v1239
        %v1241 = vpop.xlane.xlu0 %1240
        %v1242 = vsel %vm1150, %v1213, 0.0
        %1243 = vadd.xlane.f32.xlu0 %v1242
        %v1244 = vpop.xlane.xlu0 %1243
        %v1245 = vsel %vm1150, %v1215, 0.0
        %1246 = vadd.xlane.f32.xlu0 %v1245
        %v1247 = vpop.xlane.xlu0 %1246
        %v1248 = vsel %vm1157, %v1217, 0.0
        %1249 = vadd.xlane.f32.xlu0 %v1248
        %v1250 = vpop.xlane.xlu0 %1249
        %v1251 = vsel %vm1150, %v1219, 0.0
        %1252 = vadd.xlane.f32.xlu0 %v1251
        %v1253 = vpop.xlane.xlu0 %1252
        %v1254 = vsel %vm1150, %v1221, 0.0
        %1255 = vadd.xlane.f32.xlu0 %v1254
        %v1256 = vpop.xlane.xlu0 %1255
        %v1257 = vsel %vm1157, %v1223, 0.0
        %1258 = vadd.xlane.f32.xlu0 %v1257
        %v1259 = vpop.xlane.xlu0 %1258
        %v1260 = vrcp.pop %v1226
        %v1261 = vrcp.pop %v1229
        %v1262 = vrcp.pop %v1232
        %v1263 = vrcp.pop %v1235
        %v1264 = vrcp.pop %v1238
        %v1265 = vrcp.pop %v1241
        %v1266 = vrcp.pop %v1244
        %v1267 = vrcp.pop %v1247
        %v1268 = vrcp.pop %v1250
        %v1269 = vrcp.pop %v1253
        %v1270 = vrcp.pop %v1256
        %v1271 = vrcp.pop %v1259
        %v1272 = vmul.f32 %v1201, %v1260
        %v1273 = vmul.f32 %v1203, %v1261
        %v1274 = vmul.f32 %v1205, %v1262
        %v1275 = vmul.f32 %v1207, %v1263
        %v1276 = vmul.f32 %v1209, %v1264
        %v1277 = vmul.f32 %v1211, %v1265
        %v1278 = vmul.f32 %v1213, %v1266
        %v1279 = vmul.f32 %v1215, %v1267
        %v1280 = vmul.f32 %v1217, %v1268
        %v1281 = vmul.f32 %v1219, %v1269
        %v1282 = vmul.f32 %v1221, %v1270
        %v1283 = vmul.f32 %v1223, %v1271
        %v1284 = vpack.c.bf16 %v1273, %v1272
        %v1285 = vpack.c.bf16 %v1274, %v1274
        %v1286 = vpack.c.bf16 %v1276, %v1275
        %v1287 = vpack.c.bf16 %v1277, %v1277
        %v1288 = vpack.c.bf16 %v1279, %v1278
        %v1289 = vpack.c.bf16 %v1280, %v1280
        %v1290 = vpack.c.bf16 %v1282, %v1281
        %v1291 = vpack.c.bf16 %v1283, %v1283
        %1292 = vrot.lane.b32.xlu0 %v865, 64
        %v1293 = vpop.permute.xlu0 %1292
        %1294 = vrot.lane.b32.xlu0 %v866, 64
        %v1295 = vpop.permute.xlu0 %1294
        %v1298 = vsel %vm1150, %v1284, 0
        %v1301 = vsel %vm1150, %v1285, 0
        %vm1303 = vcmask 1040384
        %v1304 = vsel 0, 4294967295, 65535
        %v1305 = vsel %vm1303, %v1304, 0
        %v1307 = vand.u32 %v1295, %v1305
        %1309 = vmatprep.subr.bf16.mxu0 0
        %1310 = vmatpush1.bf16.msra.mxu0 0
        %1311 = vmatprep.subr.bf16.mxu0 0
        %1312 = vmatpush1.bf16.msra.mxu0 0
        %1313 = vmatprep.subr.bf16.mxu0 0
        %1314 = vmatpush1.bf16.msra.mxu0 0
        %1315 = vmatprep.subr.bf16.mxu0 0
        %1316 = vmatpush1.bf16.msra.mxu0 0
        %1317 = vmatprep.subr.bf16.mxu0 0
        %1318 = vmatpush1.bf16.msra.mxu0 0
        %1319 = vmatprep.subr.bf16.mxu0 0
        %1320 = vmatpush1.bf16.msra.mxu0 0
        %1321 = vmatprep.subr.bf16.mxu0 0
        %1322 = vmatpush1.bf16.msra.mxu0 %v1307
        %1323 = vmatprep.subr.bf16.mxu0 0
        %1324 = vmatpush1.bf16.msra.mxu0 %v1293
        %1325 = vmatprep.subr.bf16.mxu0 0
        %1326 = vmatpush2.bf16.msra.mxu0 0
        %1327 = vmatprep.subr.bf16.mxu0 0
        %1328 = vmatpush2.bf16.msra.mxu0 0
        %1329 = vmatprep.subr.bf16.mxu0 0
        %1330 = vmatpush2.bf16.msra.mxu0 0
        %1331 = vmatprep.subr.bf16.mxu0 0
        %1332 = vmatpush2.bf16.msra.mxu0 0
        %1333 = vmatprep.subr.bf16.mxu0 0
        %1334 = vmatpush2.bf16.msra.mxu0 0
        %1335 = vmatprep.subr.bf16.mxu0 0
        %1336 = vmatpush2.bf16.msra.mxu0 0
        %1337 = vmatprep.subr.bf16.mxu0 0
        %1338 = vmatpush2.bf16.msra.mxu0 0
        %1339 = vmatprep.subr.bf16.mxu0 0
        %1340 = vmatpush2.bf16.msra.mxu0 0
        %1341 = vmatprep.mubr.bf16.mxu0 0
        %1342 = vmatmul.mubr.bf16.gmra.mxu0 %v1298
        %v1343 = vpop.f32.mrf.mxu0
        %v1344 = vadd.f32 0.0, %v1343
        %v1345 = vpop.f32.mrf.mxu0
        %v1346 = vpop.f32.mrf.mxu0
        %v1347 = vadd.f32 0.0, %v1346
        %v1348 = vpop.f32.mrf.mxu0
        %1349 = vmatprep.mubr.bf16.mxu0 0
        %1350 = vmatmul.mubr.bf16.gmra.mxu0 %v1301
        %v1351 = vpop.f32.mrf.mxu0
        %v1352 = vadd.f32 0.0, %v1351
        %v1353 = vpop.f32.mrf.mxu0
        %v1354 = vpop.f32.mrf.mxu0
        %v1355 = vpop.f32.mrf.mxu0
        %1356 = vdwg.mxu0
        %1357 = vrot.lane.b32.xlu0 %v867, 64
        %v1358 = vpop.permute.xlu0 %1357
        %1359 = vrot.lane.b32.xlu0 %v868, 64
        %v1360 = vpop.permute.xlu0 %1359
        %v1363 = vsel %vm1150, %v1286, 0
        %v1366 = vsel %vm1150, %v1287, 0
        %v1369 = vand.u32 %v1360, %v1305
        %1371 = vmatprep.subr.bf16.mxu0 0
        %1372 = vmatpush1.bf16.msra.mxu0 0
        %1373 = vmatprep.subr.bf16.mxu0 0
        %1374 = vmatpush1.bf16.msra.mxu0 0
        %1375 = vmatprep.subr.bf16.mxu0 0
        %1376 = vmatpush1.bf16.msra.mxu0 0
        %1377 = vmatprep.subr.bf16.mxu0 0
        %1378 = vmatpush1.bf16.msra.mxu0 0
        %1379 = vmatprep.subr.bf16.mxu0 0
        %1380 = vmatpush1.bf16.msra.mxu0 0
        %1381 = vmatprep.subr.bf16.mxu0 0
        %1382 = vmatpush1.bf16.msra.mxu0 0
        %1383 = vmatprep.subr.bf16.mxu0 0
        %1384 = vmatpush1.bf16.msra.mxu0 %v1369
        %1385 = vmatprep.subr.bf16.mxu0 0
        %1386 = vmatpush1.bf16.msra.mxu0 %v1358
        %1387 = vmatprep.subr.bf16.mxu0 0
        %1388 = vmatpush2.bf16.msra.mxu0 0
        %1389 = vmatprep.subr.bf16.mxu0 0
        %1390 = vmatpush2.bf16.msra.mxu0 0
        %1391 = vmatprep.subr.bf16.mxu0 0
        %1392 = vmatpush2.bf16.msra.mxu0 0
        %1393 = vmatprep.subr.bf16.mxu0 0
        %1394 = vmatpush2.bf16.msra.mxu0 0
        %1395 = vmatprep.subr.bf16.mxu0 0
        %1396 = vmatpush2.bf16.msra.mxu0 0
        %1397 = vmatprep.subr.bf16.mxu0 0
        %1398 = vmatpush2.bf16.msra.mxu0 0
        %1399 = vmatprep.subr.bf16.mxu0 0
        %1400 = vmatpush2.bf16.msra.mxu0 0
        %1401 = vmatprep.subr.bf16.mxu0 0
        %1402 = vmatpush2.bf16.msra.mxu0 0
        %1403 = vmatprep.mubr.bf16.mxu0 0
        %1404 = vmatmul.mubr.bf16.gmra.mxu0 %v1363
        %v1405 = vpop.f32.mrf.mxu0
        %v1406 = vadd.f32 0.0, %v1405
        %v1407 = vpop.f32.mrf.mxu0
        %v1408 = vpop.f32.mrf.mxu0
        %v1409 = vadd.f32 0.0, %v1408
        %v1410 = vpop.f32.mrf.mxu0
        %1411 = vmatprep.mubr.bf16.mxu0 0
        %1412 = vmatmul.mubr.bf16.gmra.mxu0 %v1366
        %v1413 = vpop.f32.mrf.mxu0
        %v1414 = vadd.f32 0.0, %v1413
        %v1415 = vpop.f32.mrf.mxu0
        %v1416 = vpop.f32.mrf.mxu0
        %v1417 = vpop.f32.mrf.mxu0
        %1418 = vdwg.mxu0
        %1419 = vrot.lane.b32.xlu0 %v869, 64
        %v1420 = vpop.permute.xlu0 %1419
        %1421 = vrot.lane.b32.xlu0 %v870, 64
        %v1422 = vpop.permute.xlu0 %1421
        %v1425 = vsel %vm1150, %v1288, 0
        %v1428 = vsel %vm1150, %v1289, 0
        %v1431 = vand.u32 %v1422, %v1305
        %1433 = vmatprep.subr.bf16.mxu0 0
        %1434 = vmatpush1.bf16.msra.mxu0 0
        %1435 = vmatprep.subr.bf16.mxu0 0
        %1436 = vmatpush1.bf16.msra.mxu0 0
        %1437 = vmatprep.subr.bf16.mxu0 0
        %1438 = vmatpush1.bf16.msra.mxu0 0
        %1439 = vmatprep.subr.bf16.mxu0 0
        %1440 = vmatpush1.bf16.msra.mxu0 0
        %1441 = vmatprep.subr.bf16.mxu0 0
        %1442 = vmatpush1.bf16.msra.mxu0 0
        %1443 = vmatprep.subr.bf16.mxu0 0
        %1444 = vmatpush1.bf16.msra.mxu0 0
        %1445 = vmatprep.subr.bf16.mxu0 0
        %1446 = vmatpush1.bf16.msra.mxu0 %v1431
        %1447 = vmatprep.subr.bf16.mxu0 0
        %1448 = vmatpush1.bf16.msra.mxu0 %v1420
        %1449 = vmatprep.subr.bf16.mxu0 0
        %1450 = vmatpush2.bf16.msra.mxu0 0
        %1451 = vmatprep.subr.bf16.mxu0 0
        %1452 = vmatpush2.bf16.msra.mxu0 0
        %1453 = vmatprep.subr.bf16.mxu0 0
        %1454 = vmatpush2.bf16.msra.mxu0 0
        %1455 = vmatprep.subr.bf16.mxu0 0
        %1456 = vmatpush2.bf16.msra.mxu0 0
        %1457 = vmatprep.subr.bf16.mxu0 0
        %1458 = vmatpush2.bf16.msra.mxu0 0
        %1459 = vmatprep.subr.bf16.mxu0 0
        %1460 = vmatpush2.bf16.msra.mxu0 0
        %1461 = vmatprep.subr.bf16.mxu0 0
        %1462 = vmatpush2.bf16.msra.mxu0 0
        %1463 = vmatprep.subr.bf16.mxu0 0
        %1464 = vmatpush2.bf16.msra.mxu0 0
        %1465 = vmatprep.mubr.bf16.mxu0 0
        %1466 = vmatmul.mubr.bf16.gmra.mxu0 %v1425
        %v1467 = vpop.f32.mrf.mxu0
        %v1468 = vadd.f32 0.0, %v1467
        %v1469 = vpop.f32.mrf.mxu0
        %v1470 = vpop.f32.mrf.mxu0
        %v1471 = vadd.f32 0.0, %v1470
        %v1472 = vpop.f32.mrf.mxu0
        %1473 = vmatprep.mubr.bf16.mxu0 0
        %1474 = vmatmul.mubr.bf16.gmra.mxu0 %v1428
        %v1475 = vpop.f32.mrf.mxu0
        %v1476 = vadd.f32 0.0, %v1475
        %v1477 = vpop.f32.mrf.mxu0
        %v1478 = vpop.f32.mrf.mxu0
        %v1479 = vpop.f32.mrf.mxu0
        %1480 = vdwg.mxu0
        %1481 = vrot.lane.b32.xlu0 %v871, 64
        %v1482 = vpop.permute.xlu0 %1481
        %1483 = vrot.lane.b32.xlu0 %v872, 64
        %v1484 = vpop.permute.xlu0 %1483
        %v1487 = vsel %vm1150, %v1290, 0
        %v1490 = vsel %vm1150, %v1291, 0
        %v1493 = vand.u32 %v1484, %v1305
        %1495 = vmatprep.subr.bf16.mxu0 0
        %1496 = vmatpush1.bf16.msra.mxu0 0
        %1497 = vmatprep.subr.bf16.mxu0 0
        %1498 = vmatpush1.bf16.msra.mxu0 0
        %1499 = vmatprep.subr.bf16.mxu0 0
        %1500 = vmatpush1.bf16.msra.mxu0 0
        %1501 = vmatprep.subr.bf16.mxu0 0
        %1502 = vmatpush1.bf16.msra.mxu0 0
        %1503 = vmatprep.subr.bf16.mxu0 0
        %1504 = vmatpush1.bf16.msra.mxu0 0
        %1505 = vmatprep.subr.bf16.mxu0 0
        %1506 = vmatpush1.bf16.msra.mxu0 0
        %1507 = vmatprep.subr.bf16.mxu0 0
        %1508 = vmatpush1.bf16.msra.mxu0 %v1493
        %1509 = vmatprep.subr.bf16.mxu0 0
        %1510 = vmatpush1.bf16.msra.mxu0 %v1482
        %1511 = vmatprep.subr.bf16.mxu0 0
        %1512 = vmatpush2.bf16.msra.mxu0 0
        %1513 = vmatprep.subr.bf16.mxu0 0
        %1514 = vmatpush2.bf16.msra.mxu0 0
        %1515 = vmatprep.subr.bf16.mxu0 0
        %1516 = vmatpush2.bf16.msra.mxu0 0
        %1517 = vmatprep.subr.bf16.mxu0 0
        %1518 = vmatpush2.bf16.msra.mxu0 0
        %1519 = vmatprep.subr.bf16.mxu0 0
        %1520 = vmatpush2.bf16.msra.mxu0 0
        %1521 = vmatprep.subr.bf16.mxu0 0
        %1522 = vmatpush2.bf16.msra.mxu0 0
        %1523 = vmatprep.subr.bf16.mxu0 0
        %1524 = vmatpush2.bf16.msra.mxu0 0
        %1525 = vmatprep.subr.bf16.mxu0 0
        %1526 = vmatpush2.bf16.msra.mxu0 0
        %1527 = vmatprep.mubr.bf16.mxu0 0
        %1528 = vmatmul.mubr.bf16.gmra.mxu0 %v1487
        %v1529 = vpop.f32.mrf.mxu0
        %v1530 = vadd.f32 0.0, %v1529
        %v1531 = vpop.f32.mrf.mxu0
        %v1532 = vpop.f32.mrf.mxu0
        %v1533 = vadd.f32 0.0, %v1532
        %v1534 = vpop.f32.mrf.mxu0
        %1535 = vmatprep.mubr.bf16.mxu0 0
        %1536 = vmatmul.mubr.bf16.gmra.mxu0 %v1490
        %v1537 = vpop.f32.mrf.mxu0
        %v1538 = vadd.f32 0.0, %v1537
        %v1539 = vpop.f32.mrf.mxu0
        %v1540 = vpop.f32.mrf.mxu0
        %v1541 = vpop.f32.mrf.mxu0
        %1542 = vdwg.mxu0
        %1546 = vrot.lane.b32.xlu0 %v1406, 8
        %v1547 = vpop.permute.xlu0 %1546
        %1548 = vrot.lane.b32.xlu0 %v1409, 8
        %v1549 = vpop.permute.xlu0 %1548
        %1550 = vrot.lane.b32.xlu0 %v1414, 8
        %v1551 = vpop.permute.xlu0 %1550
        %1558 = vrot.lane.b32.xlu0 %v1468, 16
        %v1559 = vpop.permute.xlu0 %1558
        %1560 = vrot.lane.b32.xlu0 %v1471, 16
        %v1561 = vpop.permute.xlu0 %1560
        %1562 = vrot.lane.b32.xlu0 %v1476, 16
        %v1563 = vpop.permute.xlu0 %1562
        %1570 = vrot.lane.b32.xlu0 %v1530, 24
        %v1571 = vpop.permute.xlu0 %1570
        %1572 = vrot.lane.b32.xlu0 %v1533, 24
        %v1573 = vpop.permute.xlu0 %1572
        %1574 = vrot.lane.b32.xlu0 %v1538, 24
        %v1575 = vpop.permute.xlu0 %1574
        %v1579 = vsel %vm879, %v1344, %v1547
        %v1580 = vsel %vm879, %v1347, %v1549
        %v1581 = vsel %vm879, %v1352, %v1551
        %vm1582 = vcmask 130048
        %v1583 = vsel %vm1582, %v1579, %v1559
        %v1584 = vsel %vm1582, %v1580, %v1561
        %v1585 = vsel %vm1582, %v1581, %v1563
        %vm1586 = vcmask 195584
        %v1587 = vsel %vm1586, %v1583, %v1571
        %v1588 = vsel %vm1586, %v1584, %v1573
        %v1589 = vsel %vm1586, %v1585, %v1575
        %v1590 = vpack.c.bf16 %v1588, %v1587
        %v1591 = vpack.c.bf16 %v1589, %v1589
        %v1592 = vld [vmem:[%s7] sm:$0xf]
        %v1593 = vld [vmem:[%s7 + $0x4] sm:$0xf]
        %v1594 = vld [vmem:[%s7 + $0x8] sm:$0xf]
        %v1595 = vld [vmem:[%s7 + $0xc] sm:$0xf]
        %v1596 = vld [vmem:[%s8] sm:$0x1]
        %v1598 = vlaneseq
        %v1599 = vshrl.u32 %v1598, 7
        %v1600 = vsub.s32 0, %v1599
        %v1601 = vrot.slane %v1596, %v1600
        %v1607 = vunpack.c.l.b16 %v1592
        %v1608 = vunpack.c.l.b16 %v1593
        %v1609 = vunpack.c.l.b16 %v1594
        %v1610 = vunpack.c.l.b16 %v1595
        %v1611 = vpack.c.b16 %v1608, %v1607
        %v1612 = vpack.c.b16 %v1610, %v1609
        %v1616 = vsel %vm696, %v1590, 0
        %v1619 = vsel %vm696, %v1591, 0
        %1621 = vmatprep.subr.bf16.mxu0 0
        %1622 = vmatpush1.bf16.msra.mxu0 0
        %1623 = vmatprep.subr.bf16.mxu0 0
        %1624 = vmatpush1.bf16.msra.mxu0 0
        %1625 = vmatprep.subr.bf16.mxu0 0
        %1626 = vmatpush1.bf16.msra.mxu0 0
        %1627 = vmatprep.subr.bf16.mxu0 0
        %1628 = vmatpush1.bf16.msra.mxu0 0
        %1629 = vmatprep.subr.bf16.mxu0 0
        %1630 = vmatpush1.bf16.msra.mxu0 0
        %1631 = vmatprep.subr.bf16.mxu0 0
        %1632 = vmatpush1.bf16.msra.mxu0 0
        %1633 = vmatprep.subr.bf16.mxu0 0
        %1634 = vmatpush1.bf16.msra.mxu0 %v1612
        %1635 = vmatprep.subr.bf16.mxu0 0
        %1636 = vmatpush1.bf16.msra.mxu0 %v1611
        %1637 = vmatprep.subr.bf16.mxu0 0
        %1638 = vmatpush2.bf16.msra.mxu0 0
        %1639 = vmatprep.subr.bf16.mxu0 0
        %1640 = vmatpush2.bf16.msra.mxu0 0
        %1641 = vmatprep.subr.bf16.mxu0 0
        %1642 = vmatpush2.bf16.msra.mxu0 0
        %1643 = vmatprep.subr.bf16.mxu0 0
        %1644 = vmatpush2.bf16.msra.mxu0 0
        %1645 = vmatprep.subr.bf16.mxu0 0
        %1646 = vmatpush2.bf16.msra.mxu0 0
        %1647 = vmatprep.subr.bf16.mxu0 0
        %1648 = vmatpush2.bf16.msra.mxu0 0
        %1649 = vmatprep.subr.bf16.mxu0 0
        %1650 = vmatpush2.bf16.msra.mxu0 0
        %1651 = vmatprep.subr.bf16.mxu0 0
        %1652 = vmatpush2.bf16.msra.mxu0 0
        %1653 = vmatprep.mubr.bf16.mxu0 0
        %1654 = vmatmul.mubr.bf16.gmra.mxu0 %v1616
        %v1655 = vpop.f32.mrf.mxu0
        %v1656 = vadd.f32 %v1601, %v1655
        %v1657 = vpop.f32.mrf.mxu0
        %v1658 = vpop.f32.mrf.mxu0
        %v1659 = vadd.f32 %v1601, %v1658
        %v1660 = vpop.f32.mrf.mxu0
        %1661 = vmatprep.mubr.bf16.mxu0 0
        %1662 = vmatmul.mubr.bf16.gmra.mxu0 %v1619
        %v1663 = vpop.f32.mrf.mxu0
        %v1664 = vadd.f32 %v1601, %v1663
        %v1665 = vpop.f32.mrf.mxu0
        %v1666 = vpop.f32.mrf.mxu0
        %v1667 = vpop.f32.mrf.mxu0
        %1668 = vdwg.mxu0
        %v1669 = vadd.f32 %v681, %v1656
        %v1670 = vadd.f32 %v684, %v1659
        %v1671 = vadd.f32 %v689, %v1664
        %v1672 = vld [vmem:[%s9] sm:$0x1]
        %v1673 = vld [vmem:[%s10] sm:$0x1]
        %v1674 = vsel %vm696, %v1669, 0.0
        %1675 = vadd.xlane.f32.xlu0 %v1674
        %v1676 = vpop.xlane.xlu0 %1675
        %v1677 = vsel %vm696, %v1670, 0.0
        %1678 = vadd.xlane.f32.xlu0 %v1677
        %v1679 = vpop.xlane.xlu0 %1678
        %v1680 = vsel %vm703, %v1671, 0.0
        %1681 = vadd.xlane.f32.xlu0 %v1680
        %v1682 = vpop.xlane.xlu0 %1681
        %v1683 = vmul.f32 %v1676, %v707
        %v1684 = vmul.f32 %v1679, %v707
        %v1685 = vmul.f32 %v1682, %v707
        %v1686 = vsub.f32 %v1669, %v1683
        %v1687 = vsub.f32 %v1670, %v1684
        %v1688 = vsub.f32 %v1671, %v1685
        %v1689 = vmul.f32 %v1686, %v1686
        %v1690 = vmul.f32 %v1687, %v1687
        %v1691 = vmul.f32 %v1688, %v1688
        %v1692 = vsel %vm696, %v1689, 0.0
        %1693 = vadd.xlane.f32.xlu0 %v1692
        %v1694 = vpop.xlane.xlu0 %1693
        %v1695 = vsel %vm696, %v1690, 0.0
        %1696 = vadd.xlane.f32.xlu0 %v1695
        %v1697 = vpop.xlane.xlu0 %1696
        %v1698 = vsel %vm703, %v1691, 0.0
        %1699 = vadd.xlane.f32.xlu0 %v1698
        %v1700 = vpop.xlane.xlu0 %1699
        %v1701 = vmul.f32 %v1694, %v707
        %v1702 = vmul.f32 %v1697, %v707
        %v1703 = vmul.f32 %v1700, %v707
        %v1704 = vadd.f32 %v1701, 1e-05
        %v1705 = vadd.f32 %v1702, 1e-05
        %v1706 = vadd.f32 %v1703, 1e-05
        %v1707 = vrsqrt.pop %v1704
        %v1708 = vrsqrt.pop %v1705
        %v1709 = vrsqrt.pop %v1706
        %v1710 = vmul.f32 %v1686, %v1707
        %v1711 = vmul.f32 %v1687, %v1708
        %v1712 = vmul.f32 %v1688, %v1709
        %v1714 = vlaneseq
        %v1715 = vshrl.u32 %v1714, 7
        %v1716 = vsub.s32 0, %v1715
        %v1717 = vrot.slane %v1672, %v1716
        %v1719 = vmul.f32 %v1710, %v1717
        %v1720 = vmul.f32 %v1711, %v1717
        %v1721 = vmul.f32 %v1712, %v1717
        %v1723 = vlaneseq
        %v1724 = vshrl.u32 %v1723, 7
        %v1725 = vsub.s32 0, %v1724
        %v1726 = vrot.slane %v1673, %v1725
        %v1728 = vadd.f32 %v1719, %v1726
        %v1729 = vadd.f32 %v1720, %v1726
        %v1730 = vadd.f32 %v1721, %v1726
        %v1731 = vpack.c.bf16 %v1729, %v1728
        %v1732 = vpack.c.bf16 %v1730, %v1730
        %v1733 = vld [vmem:[%s11] sm:$0xf]
        %v1734 = vld [vmem:[%s11 + $0x4] sm:$0xf]
        %v1735 = vld [vmem:[%s11 + $0x8] sm:$0xf]
        %v1736 = vld [vmem:[%s11 + $0xc] sm:$0xf]
        %v1737 = vld [vmem:[%s12] sm:$0x1]
        %v1739 = vlaneseq
        %v1740 = vshrl.u32 %v1739, 7
        %v1741 = vsub.s32 0, %v1740
        %v1742 = vrot.slane %v1737, %v1741
        %v1748 = vunpack.c.l.b16 %v1733
        %v1749 = vunpack.c.l.b16 %v1734
        %v1750 = vunpack.c.l.b16 %v1735
        %v1751 = vunpack.c.l.b16 %v1736
        %v1752 = vpack.c.b16 %v1749, %v1748
        %v1753 = vpack.c.b16 %v1751, %v1750
        %v1757 = vsel %vm696, %v1731, 0
        %v1760 = vsel %vm696, %v1732, 0
        %1762 = vmatprep.subr.bf16.mxu0 0
        %1763 = vmatpush1.bf16.msra.mxu0 0
        %1764 = vmatprep.subr.bf16.mxu0 0
        %1765 = vmatpush1.bf16.msra.mxu0 0
        %1766 = vmatprep.subr.bf16.mxu0 0
        %1767 = vmatpush1.bf16.msra.mxu0 0
        %1768 = vmatprep.subr.bf16.mxu0 0
        %1769 = vmatpush1.bf16.msra.mxu0 0
        %1770 = vmatprep.subr.bf16.mxu0 0
        %1771 = vmatpush1.bf16.msra.mxu0 0
        %1772 = vmatprep.subr.bf16.mxu0 0
        %1773 = vmatpush1.bf16.msra.mxu0 0
        %1774 = vmatprep.subr.bf16.mxu0 0
        %1775 = vmatpush1.bf16.msra.mxu0 %v1753
        %1776 = vmatprep.subr.bf16.mxu0 0
        %1777 = vmatpush1.bf16.msra.mxu0 %v1752
        %1778 = vmatprep.subr.bf16.mxu0 0
        %1779 = vmatpush2.bf16.msra.mxu0 0
        %1780 = vmatprep.subr.bf16.mxu0 0
        %1781 = vmatpush2.bf16.msra.mxu0 0
        %1782 = vmatprep.subr.bf16.mxu0 0
        %1783 = vmatpush2.bf16.msra.mxu0 0
        %1784 = vmatprep.subr.bf16.mxu0 0
        %1785 = vmatpush2.bf16.msra.mxu0 0
        %1786 = vmatprep.subr.bf16.mxu0 0
        %1787 = vmatpush2.bf16.msra.mxu0 0
        %1788 = vmatprep.subr.bf16.mxu0 0
        %1789 = vmatpush2.bf16.msra.mxu0 0
        %1790 = vmatprep.subr.bf16.mxu0 0
        %1791 = vmatpush2.bf16.msra.mxu0 0
        %1792 = vmatprep.subr.bf16.mxu0 0
        %1793 = vmatpush2.bf16.msra.mxu0 0
        %1794 = vmatprep.mubr.bf16.mxu0 0
        %1795 = vmatmul.mubr.bf16.gmra.mxu0 %v1757
        %v1796 = vpop.f32.mrf.mxu0
        %v1797 = vadd.f32 %v1742, %v1796
        %v1798 = vpop.f32.mrf.mxu0
        %v1799 = vpop.f32.mrf.mxu0
        %v1800 = vadd.f32 %v1742, %v1799
        %v1801 = vpop.f32.mrf.mxu0
        %1802 = vmatprep.mubr.bf16.mxu0 0
        %1803 = vmatmul.mubr.bf16.gmra.mxu0 %v1760
        %v1804 = vpop.f32.mrf.mxu0
        %v1805 = vadd.f32 %v1742, %v1804
        %v1806 = vpop.f32.mrf.mxu0
        %v1807 = vpop.f32.mrf.mxu0
        %v1808 = vpop.f32.mrf.mxu0
        %1809 = vdwg.mxu0
        %v1810 = vmul.f32 %v1797, 0.5
        %v1811 = vmul.f32 %v1800, 0.5
        %v1812 = vmul.f32 %v1805, 0.5
        %v1813 = vmul.f32 %v1797, 0.044715
        %v1814 = vmul.f32 %v1800, 0.044715
        %v1815 = vmul.f32 %v1805, 0.044715
        %v1816 = vmul.f32 %v1813, %v1797
        %v1817 = vmul.f32 %v1814, %v1800
        %v1818 = vmul.f32 %v1815, %v1805
        %v1819 = vmul.f32 %v1816, %v1797
        %v1820 = vmul.f32 %v1817, %v1800
        %v1821 = vmul.f32 %v1818, %v1805
        %v1822 = vadd.f32 %v1797, %v1819
        %v1823 = vadd.f32 %v1800, %v1820
        %v1824 = vadd.f32 %v1805, %v1821
        %v1825 = vmul.f32 %v1822, 0.7978846
        %v1826 = vmul.f32 %v1823, 0.7978846
        %v1827 = vmul.f32 %v1824, 0.7978846
        %v1828 = vtanh.pop %v1825
        %v1829 = vtanh.pop %v1826
        %v1830 = vtanh.pop %v1827
        %v1831 = vadd.f32 %v1828, 1.0
        %v1832 = vadd.f32 %v1829, 1.0
        %v1833 = vadd.f32 %v1830, 1.0
        %v1834 = vmul.f32 %v1810, %v1831
        %v1835 = vmul.f32 %v1811, %v1832
        %v1836 = vmul.f32 %v1812, %v1833
        %v1837 = vpack.c.bf16 %v1835, %v1834
        %v1838 = vpack.c.bf16 %v1836, %v1836
        %v1839 = vld [vmem:[%s13] sm:$0xf]
        %v1840 = vld [vmem:[%s13 + $0x4] sm:$0xf]
        %v1841 = vld [vmem:[%s13 + $0x8] sm:$0xf]
        %v1842 = vld [vmem:[%s13 + $0xc] sm:$0xf]
        %v1843 = vld [vmem:[%s13 + $0x10] sm:$0xf]
        %v1844 = vld [vmem:[%s13 + $0x14] sm:$0xf]
        %v1845 = vld [vmem:[%s13 + $0x18] sm:$0xf]
        %v1846 = vld [vmem:[%s13 + $0x1c] sm:$0xf]
        %v1847 = vld [vmem:[%s14] sm:$0x1]
        %v1849 = vlaneseq
        %v1850 = vshrl.u32 %v1849, 7
        %v1851 = vsub.s32 0, %v1850
        %v1852 = vrot.slane %v1847, %v1851
        %v1862 = vunpack.c.l.b16 %v1839
        %v1863 = vunpack.c.l.b16 %v1840
        %v1864 = vunpack.c.l.b16 %v1841
        %v1865 = vunpack.c.l.b16 %v1842
        %v1866 = vunpack.c.l.b16 %v1843
        %v1867 = vunpack.c.l.b16 %v1844
        %v1868 = vunpack.c.l.b16 %v1845
        %v1869 = vunpack.c.l.b16 %v1846
        %v1870 = vpack.c.b16 %v1863, %v1862
        %v1871 = vpack.c.b16 %v1865, %v1864
        %v1872 = vpack.c.b16 %v1867, %v1866
        %v1873 = vpack.c.b16 %v1869, %v1868
        %vm1878 = vcmask 523264
        %v1880 = vsel %vm1878, %v1837, 0
        %v1883 = vsel %vm1878, %v1838, 0
        %1885 = vmatprep.subr.bf16.mxu0 0
        %1886 = vmatpush1.bf16.msra.mxu0 0
        %1887 = vmatprep.subr.bf16.mxu0 0
        %1888 = vmatpush1.bf16.msra.mxu0 0
        %1889 = vmatprep.subr.bf16.mxu0 0
        %1890 = vmatpush1.bf16.msra.mxu0 0
        %1891 = vmatprep.subr.bf16.mxu0 0
        %1892 = vmatpush1.bf16.msra.mxu0 0
        %1893 = vmatprep.subr.bf16.mxu0 0
        %1894 = vmatpush1.bf16.msra.mxu0 %v1873
        %1895 = vmatprep.subr.bf16.mxu0 0
        %1896 = vmatpush1.bf16.msra.mxu0 %v1872
        %1897 = vmatprep.subr.bf16.mxu0 0
        %1898 = vmatpush1.bf16.msra.mxu0 %v1871
        %1899 = vmatprep.subr.bf16.mxu0 0
        %1900 = vmatpush1.bf16.msra.mxu0 %v1870
        %1901 = vmatprep.subr.bf16.mxu0 0
        %1902 = vmatpush2.bf16.msra.mxu0 0
        %1903 = vmatprep.subr.bf16.mxu0 0
        %1904 = vmatpush2.bf16.msra.mxu0 0
        %1905 = vmatprep.subr.bf16.mxu0 0
        %1906 = vmatpush2.bf16.msra.mxu0 0
        %1907 = vmatprep.subr.bf16.mxu0 0
        %1908 = vmatpush2.bf16.msra.mxu0 0
        %1909 = vmatprep.subr.bf16.mxu0 0
        %1910 = vmatpush2.bf16.msra.mxu0 0
        %1911 = vmatprep.subr.bf16.mxu0 0
        %1912 = vmatpush2.bf16.msra.mxu0 0
        %1913 = vmatprep.subr.bf16.mxu0 0
        %1914 = vmatpush2.bf16.msra.mxu0 0
        %1915 = vmatprep.subr.bf16.mxu0 0
        %1916 = vmatpush2.bf16.msra.mxu0 0
        %1917 = vmatprep.mubr.bf16.mxu0 0
        %1918 = vmatmul.mubr.bf16.gmra.mxu0 %v1880
        %v1919 = vpop.f32.mrf.mxu0
        %v1920 = vadd.f32 %v1852, %v1919
        %v1921 = vpop.f32.mrf.mxu0
        %v1922 = vpop.f32.mrf.mxu0
        %v1923 = vadd.f32 %v1852, %v1922
        %v1924 = vpop.f32.mrf.mxu0
        %1925 = vmatprep.mubr.bf16.mxu0 0
        %1926 = vmatmul.mubr.bf16.gmra.mxu0 %v1883
        %v1927 = vpop.f32.mrf.mxu0
        %v1928 = vadd.f32 %v1852, %v1927
        %v1929 = vpop.f32.mrf.mxu0
        %v1930 = vpop.f32.mrf.mxu0
        %v1931 = vpop.f32.mrf.mxu0
        %1932 = vdwg.mxu0
        %v1933 = vadd.f32 %v1669, %v1920
        %v1934 = vadd.f32 %v1670, %v1923
        %v1935 = vadd.f32 %v1671, %v1928
        %s1936 = scalar_lea.vmem %s3, 1
        %v1937 = vld [vmem:[%s1936] sm:$0x1]
        %s1938 = scalar_lea.vmem %s4, 1
        %v1939 = vld [vmem:[%s1938] sm:$0x1]
        %v1940 = vsel %vm696, %v1933, 0.0
        %1941 = vadd.xlane.f32.xlu0 %v1940
        %v1942 = vpop.xlane.xlu0 %1941
        %v1943 = vsel %vm696, %v1934, 0.0
        %1944 = vadd.xlane.f32.xlu0 %v1943
        %v1945 = vpop.xlane.xlu0 %1944
        %v1946 = vsel %vm703, %v1935, 0.0
        %1947 = vadd.xlane.f32.xlu0 %v1946
        %v1948 = vpop.xlane.xlu0 %1947
        %v1949 = vmul.f32 %v1942, %v707
        %v1950 = vmul.f32 %v1945, %v707
        %v1951 = vmul.f32 %v1948, %v707
        %v1952 = vsub.f32 %v1933, %v1949
        %v1953 = vsub.f32 %v1934, %v1950
        %v1954 = vsub.f32 %v1935, %v1951
        %v1955 = vmul.f32 %v1952, %v1952
        %v1956 = vmul.f32 %v1953, %v1953
        %v1957 = vmul.f32 %v1954, %v1954
        %v1958 = vsel %vm696, %v1955, 0.0
        %1959 = vadd.xlane.f32.xlu0 %v1958
        %v1960 = vpop.xlane.xlu0 %1959
        %v1961 = vsel %vm696, %v1956, 0.0
        %1962 = vadd.xlane.f32.xlu0 %v1961
        %v1963 = vpop.xlane.xlu0 %1962
        %v1964 = vsel %vm703, %v1957, 0.0
        %1965 = vadd.xlane.f32.xlu0 %v1964
        %v1966 = vpop.xlane.xlu0 %1965
        %v1967 = vmul.f32 %v1960, %v707
        %v1968 = vmul.f32 %v1963, %v707
        %v1969 = vmul.f32 %v1966, %v707
        %v1970 = vadd.f32 %v1967, 1e-05
        %v1971 = vadd.f32 %v1968, 1e-05
        %v1972 = vadd.f32 %v1969, 1e-05
        %v1973 = vrsqrt.pop %v1970
        %v1974 = vrsqrt.pop %v1971
        %v1975 = vrsqrt.pop %v1972
        %v1976 = vmul.f32 %v1952, %v1973
        %v1977 = vmul.f32 %v1953, %v1974
        %v1978 = vmul.f32 %v1954, %v1975
        %v1980 = vlaneseq
        %v1981 = vshrl.u32 %v1980, 7
        %v1982 = vsub.s32 0, %v1981
        %v1983 = vrot.slane %v1937, %v1982
        %v1985 = vmul.f32 %v1976, %v1983
        %v1986 = vmul.f32 %v1977, %v1983
        %v1987 = vmul.f32 %v1978, %v1983
        %v1989 = vlaneseq
        %v1990 = vshrl.u32 %v1989, 7
        %v1991 = vsub.s32 0, %v1990
        %v1992 = vrot.slane %v1939, %v1991
        %v1994 = vadd.f32 %v1985, %v1992
        %v1995 = vadd.f32 %v1986, %v1992
        %v1996 = vadd.f32 %v1987, %v1992
        %v1997 = vpack.c.bf16 %v1995, %v1994
        %v1998 = vpack.c.bf16 %v1996, %v1996
        %s1999 = scalar_lea.vmem %s5, 16
        %v2000 = vld [vmem:[%s1999] sm:$0xf]
        %v2001 = vld [vmem:[%s1999 + $0x4] sm:$0xf]
        %v2002 = vld [vmem:[%s1999 + $0x8] sm:$0xf]
        %v2003 = vld [vmem:[%s1999 + $0xc] sm:$0xf]
        %s2004 = scalar_lea.vmem %s6, 1
        %v2005 = vld [vmem:[%s2004] sm:$0x1]
        %v2007 = vlaneseq
        %v2008 = vshrl.u32 %v2007, 7
        %v2009 = vsub.s32 0, %v2008
        %v2010 = vrot.slane %v2005, %v2009
        %v2016 = vunpack.c.l.b16 %v2000
        %v2017 = vunpack.c.l.b16 %v2001
        %v2018 = vunpack.c.l.b16 %v2002
        %v2019 = vunpack.c.l.b16 %v2003
        %v2020 = vpack.c.b16 %v2017, %v2016
        %v2021 = vpack.c.b16 %v2019, %v2018
        %v2025 = vsel %vm696, %v1997, 0
        %v2028 = vsel %vm696, %v1998, 0
        %2030 = vmatprep.subr.bf16.mxu0 0
        %2031 = vmatpush1.bf16.msra.mxu0 0
        %2032 = vmatprep.subr.bf16.mxu0 0
        %2033 = vmatpush1.bf16.msra.mxu0 0
        %2034 = vmatprep.subr.bf16.mxu0 0
        %2035 = vmatpush1.bf16.msra.mxu0 0
        %2036 = vmatprep.subr.bf16.mxu0 0
        %2037 = vmatpush1.bf16.msra.mxu0 0
        %2038 = vmatprep.subr.bf16.mxu0 0
        %2039 = vmatpush1.bf16.msra.mxu0 0
        %2040 = vmatprep.subr.bf16.mxu0 0
        %2041 = vmatpush1.bf16.msra.mxu0 0
        %2042 = vmatprep.subr.bf16.mxu0 0
        %2043 = vmatpush1.bf16.msra.mxu0 %v2021
        %2044 = vmatprep.subr.bf16.mxu0 0
        %2045 = vmatpush1.bf16.msra.mxu0 %v2020
        %2046 = vmatprep.subr.bf16.mxu0 0
        %2047 = vmatpush2.bf16.msra.mxu0 0
        %2048 = vmatprep.subr.bf16.mxu0 0
        %2049 = vmatpush2.bf16.msra.mxu0 0
        %2050 = vmatprep.subr.bf16.mxu0 0
        %2051 = vmatpush2.bf16.msra.mxu0 0
        %2052 = vmatprep.subr.bf16.mxu0 0
        %2053 = vmatpush2.bf16.msra.mxu0 0
        %2054 = vmatprep.subr.bf16.mxu0 0
        %2055 = vmatpush2.bf16.msra.mxu0 0
        %2056 = vmatprep.subr.bf16.mxu0 0
        %2057 = vmatpush2.bf16.msra.mxu0 0
        %2058 = vmatprep.subr.bf16.mxu0 0
        %2059 = vmatpush2.bf16.msra.mxu0 0
        %2060 = vmatprep.subr.bf16.mxu0 0
        %2061 = vmatpush2.bf16.msra.mxu0 0
        %2062 = vmatprep.mubr.bf16.mxu0 0
        %2063 = vmatmul.mubr.bf16.gmra.mxu0 %v2025
        %v2064 = vpop.f32.mrf.mxu0
        %v2065 = vadd.f32 %v2010, %v2064
        %v2066 = vpop.f32.mrf.mxu0
        %v2067 = vpop.f32.mrf.mxu0
        %v2068 = vadd.f32 %v2010, %v2067
        %v2069 = vpop.f32.mrf.mxu0
        %2070 = vmatprep.mubr.bf16.mxu0 0
        %2071 = vmatmul.mubr.bf16.gmra.mxu0 %v2028
        %v2072 = vpop.f32.mrf.mxu0
        %v2073 = vadd.f32 %v2010, %v2072
        %v2074 = vpop.f32.mrf.mxu0
        %v2075 = vpop.f32.mrf.mxu0
        %v2076 = vpop.f32.mrf.mxu0
        %2077 = vdwg.mxu0
        %2081 = vrot.lane.b32.xlu0 %v2065, 120
        %v2082 = vpop.permute.xlu0 %2081
        %2083 = vrot.lane.b32.xlu0 %v2068, 120
        %v2084 = vpop.permute.xlu0 %2083
        %2085 = vrot.lane.b32.xlu0 %v2073, 120
        %v2086 = vpop.permute.xlu0 %2085
        %2090 = vrot.lane.b32.xlu0 %v2065, 112
        %v2091 = vpop.permute.xlu0 %2090
        %2092 = vrot.lane.b32.xlu0 %v2068, 112
        %v2093 = vpop.permute.xlu0 %2092
        %2094 = vrot.lane.b32.xlu0 %v2073, 112
        %v2095 = vpop.permute.xlu0 %2094
        %2099 = vrot.lane.b32.xlu0 %v2065, 104
        %v2100 = vpop.permute.xlu0 %2099
        %2101 = vrot.lane.b32.xlu0 %v2068, 104
        %v2102 = vpop.permute.xlu0 %2101
        %2103 = vrot.lane.b32.xlu0 %v2073, 104
        %v2104 = vpop.permute.xlu0 %2103
        %v2108 = vpack.c.bf16 %v2068, %v2065
        %v2109 = vpack.c.bf16 %v2073, %v2073
        %v2110 = vpack.c.bf16 %v2084, %v2082
        %v2111 = vpack.c.bf16 %v2086, %v2086
        %v2112 = vpack.c.bf16 %v2093, %v2091
        %v2113 = vpack.c.bf16 %v2095, %v2095
        %v2114 = vpack.c.bf16 %v2102, %v2100
        %v2115 = vpack.c.bf16 %v2104, %v2104
        %2118 = vrot.lane.b32.xlu0 %v2108, 96
        %v2119 = vpop.permute.xlu0 %2118
        %2120 = vrot.lane.b32.xlu0 %v2109, 96
        %v2121 = vpop.permute.xlu0 %2120
        %v2123 = vsel %vm879, %v2108, 0
        %v2126 = vsel %vm879, %v2109, 0
        %v2129 = vsel %vm879, %v2119, 0
        %v2132 = vsel %vm879, %v2121, 0
        %2134 = vmatprep.subr.bf16.mxu0 0
        %2135 = vmatpush1.bf16.xpose.msra.mxu0 0
        %2136 = vmatprep.subr.bf16.mxu0 0
        %2137 = vmatpush1.bf16.xpose.msra.mxu0 0
        %2138 = vmatprep.subr.bf16.mxu0 0
        %2139 = vmatpush1.bf16.xpose.msra.mxu0 0
        %2140 = vmatprep.subr.bf16.mxu0 0
        %2141 = vmatpush1.bf16.xpose.msra.mxu0 0
        %2142 = vmatprep.subr.bf16.mxu0 0
        %2143 = vmatpush1.bf16.xpose.msra.mxu0 0
        %2144 = vmatprep.subr.bf16.mxu0 0
        %2145 = vmatpush1.bf16.xpose.msra.mxu0 0
        %2146 = vmatprep.subr.bf16.mxu0 0
        %2147 = vmatpush1.bf16.xpose.msra.mxu0 %v2132
        %2148 = vmatprep.subr.bf16.mxu0 0
        %2149 = vmatpush1.bf16.xpose.msra.mxu0 %v2129
        %2150 = vmatprep.subr.bf16.mxu0 0
        %2151 = vmatpush2.bf16.xpose.msra.mxu0 0
        %2152 = vmatprep.subr.bf16.mxu0 0
        %2153 = vmatpush2.bf16.xpose.msra.mxu0 0
        %2154 = vmatprep.subr.bf16.mxu0 0
        %2155 = vmatpush2.bf16.xpose.msra.mxu0 0
        %2156 = vmatprep.subr.bf16.mxu0 0
        %2157 = vmatpush2.bf16.xpose.msra.mxu0 0
        %2158 = vmatprep.subr.bf16.mxu0 0
        %2159 = vmatpush2.bf16.xpose.msra.mxu0 0
        %2160 = vmatprep.subr.bf16.mxu0 0
        %2161 = vmatpush2.bf16.xpose.msra.mxu0 0
        %2162 = vmatprep.subr.bf16.mxu0 0
        %2163 = vmatpush2.bf16.xpose.msra.mxu0 0
        %2164 = vmatprep.subr.bf16.mxu0 0
        %2165 = vmatpush2.bf16.xpose.msra.mxu0 0
        %2166 = vmatprep.mubr.bf16.mxu0 0
        %2167 = vmatmul.mubr.bf16.gmra.mxu0 %v2123
        %v2168 = vpop.f32.mrf.mxu0
        %v2169 = vadd.f32 0.0, %v2168
        %v2170 = vpop.f32.mrf.mxu0
        %v2171 = vpop.f32.mrf.mxu0
        %v2172 = vadd.f32 0.0, %v2171
        %v2173 = vpop.f32.mrf.mxu0
        %2174 = vmatprep.mubr.bf16.mxu0 0
        %2175 = vmatmul.mubr.bf16.gmra.mxu0 %v2126
        %v2176 = vpop.f32.mrf.mxu0
        %v2177 = vadd.f32 0.0, %v2176
        %v2178 = vpop.f32.mrf.mxu0
        %v2179 = vpop.f32.mrf.mxu0
        %v2180 = vpop.f32.mrf.mxu0
        %2181 = vdwg.mxu0
        %2184 = vrot.lane.b32.xlu0 %v2110, 96
        %v2185 = vpop.permute.xlu0 %2184
        %2186 = vrot.lane.b32.xlu0 %v2111, 96
        %v2187 = vpop.permute.xlu0 %2186
        %v2189 = vsel %vm879, %v2110, 0
        %v2192 = vsel %vm879, %v2111, 0
        %v2195 = vsel %vm879, %v2185, 0
        %v2198 = vsel %vm879, %v2187, 0
        %2200 = vmatprep.subr.bf16.mxu0 0
        %2201 = vmatpush1.bf16.xpose.msra.mxu0 0
        %2202 = vmatprep.subr.bf16.mxu0 0
        %2203 = vmatpush1.bf16.xpose.msra.mxu0 0
        %2204 = vmatprep.subr.bf16.mxu0 0
        %2205 = vmatpush1.bf16.xpose.msra.mxu0 0
        %2206 = vmatprep.subr.bf16.mxu0 0
        %2207 = vmatpush1.bf16.xpose.msra.mxu0 0
        %2208 = vmatprep.subr.bf16.mxu0 0
        %2209 = vmatpush1.bf16.xpose.msra.mxu0 0
        %2210 = vmatprep.subr.bf16.mxu0 0
        %2211 = vmatpush1.bf16.xpose.msra.mxu0 0
        %2212 = vmatprep.subr.bf16.mxu0 0
        %2213 = vmatpush1.bf16.xpose.msra.mxu0 %v2198
        %2214 = vmatprep.subr.bf16.mxu0 0
        %2215 = vmatpush1.bf16.xpose.msra.mxu0 %v2195
        %2216 = vmatprep.subr.bf16.mxu0 0
        %2217 = vmatpush2.bf16.xpose.msra.mxu0 0
        %2218 = vmatprep.subr.bf16.mxu0 0
        %2219 = vmatpush2.bf16.xpose.msra.mxu0 0
        %2220 = vmatprep.subr.bf16.mxu0 0
        %2221 = vmatpush2.bf16.xpose.msra.mxu0 0
        %2222 = vmatprep.subr.bf16.mxu0 0
        %2223 = vmatpush2.bf16.xpose.msra.mxu0 0
        %2224 = vmatprep.subr.bf16.mxu0 0
        %2225 = vmatpush2.bf16.xpose.msra.mxu0 0
        %2226 = vmatprep.subr.bf16.mxu0 0
        %2227 = vmatpush2.bf16.xpose.msra.mxu0 0
        %2228 = vmatprep.subr.bf16.mxu0 0
        %2229 = vmatpush2.bf16.xpose.msra.mxu0 0
        %2230 = vmatprep.subr.bf16.mxu0 0
        %2231 = vmatpush2.bf16.xpose.msra.mxu0 0
        %2232 = vmatprep.mubr.bf16.mxu0 0
        %2233 = vmatmul.mubr.bf16.gmra.mxu0 %v2189
        %v2234 = vpop.f32.mrf.mxu0
        %v2235 = vadd.f32 0.0, %v2234
        %v2236 = vpop.f32.mrf.mxu0
        %v2237 = vpop.f32.mrf.mxu0
        %v2238 = vadd.f32 0.0, %v2237
        %v2239 = vpop.f32.mrf.mxu0
        %2240 = vmatprep.mubr.bf16.mxu0 0
        %2241 = vmatmul.mubr.bf16.gmra.mxu0 %v2192
        %v2242 = vpop.f32.mrf.mxu0
        %v2243 = vadd.f32 0.0, %v2242
        %v2244 = vpop.f32.mrf.mxu0
        %v2245 = vpop.f32.mrf.mxu0
        %v2246 = vpop.f32.mrf.mxu0
        %2247 = vdwg.mxu0
        %2250 = vrot.lane.b32.xlu0 %v2112, 96
        %v2251 = vpop.permute.xlu0 %2250
        %2252 = vrot.lane.b32.xlu0 %v2113, 96
        %v2253 = vpop.permute.xlu0 %2252
        %v2255 = vsel %vm879, %v2112, 0
        %v2258 = vsel %vm879, %v2113, 0
        %v2261 = vsel %vm879, %v2251, 0
        %v2264 = vsel %vm879, %v2253, 0
        %2266 = vmatprep.subr.bf16.mxu0 0
        %2267 = vmatpush1.bf16.xpose.msra.mxu0 0
        %2268 = vmatprep.subr.bf16.mxu0 0
        %2269 = vmatpush1.bf16.xpose.msra.mxu0 0
        %2270 = vmatprep.subr.bf16.mxu0 0
        %2271 = vmatpush1.bf16.xpose.msra.mxu0 0
        %2272 = vmatprep.subr.bf16.mxu0 0
        %2273 = vmatpush1.bf16.xpose.msra.mxu0 0
        %2274 = vmatprep.subr.bf16.mxu0 0
        %2275 = vmatpush1.bf16.xpose.msra.mxu0 0
        %2276 = vmatprep.subr.bf16.mxu0 0
        %2277 = vmatpush1.bf16.xpose.msra.mxu0 0
        %2278 = vmatprep.subr.bf16.mxu0 0
        %2279 = vmatpush1.bf16.xpose.msra.mxu0 %v2264
        %2280 = vmatprep.subr.bf16.mxu0 0
        %2281 = vmatpush1.bf16.xpose.msra.mxu0 %v2261
        %2282 = vmatprep.subr.bf16.mxu0 0
        %2283 = vmatpush2.bf16.xpose.msra.mxu0 0
        %2284 = vmatprep.subr.bf16.mxu0 0
        %2285 = vmatpush2.bf16.xpose.msra.mxu0 0
        %2286 = vmatprep.subr.bf16.mxu0 0
        %2287 = vmatpush2.bf16.xpose.msra.mxu0 0
        %2288 = vmatprep.subr.bf16.mxu0 0
        %2289 = vmatpush2.bf16.xpose.msra.mxu0 0
        %2290 = vmatprep.subr.bf16.mxu0 0
        %2291 = vmatpush2.bf16.xpose.msra.mxu0 0
        %2292 = vmatprep.subr.bf16.mxu0 0
        %2293 = vmatpush2.bf16.xpose.msra.mxu0 0
        %2294 = vmatprep.subr.bf16.mxu0 0
        %2295 = vmatpush2.bf16.xpose.msra.mxu0 0
        %2296 = vmatprep.subr.bf16.mxu0 0
        %2297 = vmatpush2.bf16.xpose.msra.mxu0 0
        %2298 = vmatprep.mubr.bf16.mxu0 0
        %2299 = vmatmul.mubr.bf16.gmra.mxu0 %v2255
        %v2300 = vpop.f32.mrf.mxu0
        %v2301 = vadd.f32 0.0, %v2300
        %v2302 = vpop.f32.mrf.mxu0
        %v2303 = vpop.f32.mrf.mxu0
        %v2304 = vadd.f32 0.0, %v2303
        %v2305 = vpop.f32.mrf.mxu0
        %2306 = vmatprep.mubr.bf16.mxu0 0
        %2307 = vmatmul.mubr.bf16.gmra.mxu0 %v2258
        %v2308 = vpop.f32.mrf.mxu0
        %v2309 = vadd.f32 0.0, %v2308
        %v2310 = vpop.f32.mrf.mxu0
        %v2311 = vpop.f32.mrf.mxu0
        %v2312 = vpop.f32.mrf.mxu0
        %2313 = vdwg.mxu0
        %2316 = vrot.lane.b32.xlu0 %v2114, 96
        %v2317 = vpop.permute.xlu0 %2316
        %2318 = vrot.lane.b32.xlu0 %v2115, 96
        %v2319 = vpop.permute.xlu0 %2318
        %v2321 = vsel %vm879, %v2114, 0
        %v2324 = vsel %vm879, %v2115, 0
        %v2327 = vsel %vm879, %v2317, 0
        %v2330 = vsel %vm879, %v2319, 0
        %2332 = vmatprep.subr.bf16.mxu0 0
        %2333 = vmatpush1.bf16.xpose.msra.mxu0 0
        %2334 = vmatprep.subr.bf16.mxu0 0
        %2335 = vmatpush1.bf16.xpose.msra.mxu0 0
        %2336 = vmatprep.subr.bf16.mxu0 0
        %2337 = vmatpush1.bf16.xpose.msra.mxu0 0
        %2338 = vmatprep.subr.bf16.mxu0 0
        %2339 = vmatpush1.bf16.xpose.msra.mxu0 0
        %2340 = vmatprep.subr.bf16.mxu0 0
        %2341 = vmatpush1.bf16.xpose.msra.mxu0 0
        %2342 = vmatprep.subr.bf16.mxu0 0
        %2343 = vmatpush1.bf16.xpose.msra.mxu0 0
        %2344 = vmatprep.subr.bf16.mxu0 0
        %2345 = vmatpush1.bf16.xpose.msra.mxu0 %v2330
        %2346 = vmatprep.subr.bf16.mxu0 0
        %2347 = vmatpush1.bf16.xpose.msra.mxu0 %v2327
        %2348 = vmatprep.subr.bf16.mxu0 0
        %2349 = vmatpush2.bf16.xpose.msra.mxu0 0
        %2350 = vmatprep.subr.bf16.mxu0 0
        %2351 = vmatpush2.bf16.xpose.msra.mxu0 0
        %2352 = vmatprep.subr.bf16.mxu0 0
        %2353 = vmatpush2.bf16.xpose.msra.mxu0 0
        %2354 = vmatprep.subr.bf16.mxu0 0
        %2355 = vmatpush2.bf16.xpose.msra.mxu0 0
        %2356 = vmatprep.subr.bf16.mxu0 0
        %2357 = vmatpush2.bf16.xpose.msra.mxu0 0
        %2358 = vmatprep.subr.bf16.mxu0 0
        %2359 = vmatpush2.bf16.xpose.msra.mxu0 0
        %2360 = vmatprep.subr.bf16.mxu0 0
        %2361 = vmatpush2.bf16.xpose.msra.mxu0 0
        %2362 = vmatprep.subr.bf16.mxu0 0
        %2363 = vmatpush2.bf16.xpose.msra.mxu0 0
        %2364 = vmatprep.mubr.bf16.mxu0 0
        %2365 = vmatmul.mubr.bf16.gmra.mxu0 %v2321
        %v2366 = vpop.f32.mrf.mxu0
        %v2367 = vadd.f32 0.0, %v2366
        %v2368 = vpop.f32.mrf.mxu0
        %v2369 = vpop.f32.mrf.mxu0
        %v2370 = vadd.f32 0.0, %v2369
        %v2371 = vpop.f32.mrf.mxu0
        %2372 = vmatprep.mubr.bf16.mxu0 0
        %2373 = vmatmul.mubr.bf16.gmra.mxu0 %v2324
        %v2374 = vpop.f32.mrf.mxu0
        %v2375 = vadd.f32 0.0, %v2374
        %v2376 = vpop.f32.mrf.mxu0
        %v2377 = vpop.f32.mrf.mxu0
        %v2378 = vpop.f32.mrf.mxu0
        %2379 = vdwg.mxu0
        %v2380 = vmul.f32 %v2169, 0.17677669
        %v2381 = vmul.f32 %v2172, 0.17677669
        %v2382 = vmul.f32 %v2177, 0.17677669
        %v2383 = vmul.f32 %v2235, 0.17677669
        %v2384 = vmul.f32 %v2238, 0.17677669
        %v2385 = vmul.f32 %v2243, 0.17677669
        %v2386 = vmul.f32 %v2301, 0.17677669
        %v2387 = vmul.f32 %v2304, 0.17677669
        %v2388 = vmul.f32 %v2309, 0.17677669
        %v2389 = vmul.f32 %v2367, 0.17677669
        %v2390 = vmul.f32 %v2370, 0.17677669
        %v2391 = vmul.f32 %v2375, 0.17677669
        %v2392 = vsel %vm1150, %v2380, -inf
        %2393 = vmax.xlane.f32.xlu0 %v2392
        %v2394 = vpop.xlane.xlu0 %2393
        %v2395 = vsel %vm1150, %v2381, -inf
        %2396 = vmax.xlane.f32.xlu0 %v2395
        %v2397 = vpop.xlane.xlu0 %2396
        %v2398 = vsel %vm1157, %v2382, -inf
        %2399 = vmax.xlane.f32.xlu0 %v2398
        %v2400 = vpop.xlane.xlu0 %2399
        %v2401 = vsel %vm1150, %v2383, -inf
        %2402 = vmax.xlane.f32.xlu0 %v2401
        %v2403 = vpop.xlane.xlu0 %2402
        %v2404 = vsel %vm1150, %v2384, -inf
        %2405 = vmax.xlane.f32.xlu0 %v2404
        %v2406 = vpop.xlane.xlu0 %2405
        %v2407 = vsel %vm1157, %v2385, -inf
        %2408 = vmax.xlane.f32.xlu0 %v2407
        %v2409 = vpop.xlane.xlu0 %2408
        %v2410 = vsel %vm1150, %v2386, -inf
        %2411 = vmax.xlane.f32.xlu0 %v2410
        %v2412 = vpop.xlane.xlu0 %2411
        %v2413 = vsel %vm1150, %v2387, -inf
        %2414 = vmax.xlane.f32.xlu0 %v2413
        %v2415 = vpop.xlane.xlu0 %2414
        %v2416 = vsel %vm1157, %v2388, -inf
        %2417 = vmax.xlane.f32.xlu0 %v2416
        %v2418 = vpop.xlane.xlu0 %2417
        %v2419 = vsel %vm1150, %v2389, -inf
        %2420 = vmax.xlane.f32.xlu0 %v2419
        %v2421 = vpop.xlane.xlu0 %2420
        %v2422 = vsel %vm1150, %v2390, -inf
        %2423 = vmax.xlane.f32.xlu0 %v2422
        %v2424 = vpop.xlane.xlu0 %2423
        %v2425 = vsel %vm1157, %v2391, -inf
        %2426 = vmax.xlane.f32.xlu0 %v2425
        %v2427 = vpop.xlane.xlu0 %2426
        %v2428 = vsub.f32 %v2380, %v2394
        %v2429 = vsub.f32 %v2381, %v2397
        %v2430 = vsub.f32 %v2382, %v2400
        %v2431 = vsub.f32 %v2383, %v2403
        %v2432 = vsub.f32 %v2384, %v2406
        %v2433 = vsub.f32 %v2385, %v2409
        %v2434 = vsub.f32 %v2386, %v2412
        %v2435 = vsub.f32 %v2387, %v2415
        %v2436 = vsub.f32 %v2388, %v2418
        %v2437 = vsub.f32 %v2389, %v2421
        %v2438 = vsub.f32 %v2390, %v2424
        %v2439 = vsub.f32 %v2391, %v2427
        %v2440 = vmul.f32 %v2428, 1.442695
        %v2441 = vpow.pop %v2440
        %v2442 = vmul.f32 %v2429, 1.442695
        %v2443 = vpow.pop %v2442
        %v2444 = vmul.f32 %v2430, 1.442695
        %v2445 = vpow.pop %v2444
        %v2446 = vmul.f32 %v2431, 1.442695
        %v2447 = vpow.pop %v2446
        %v2448 = vmul.f32 %v2432, 1.442695
        %v2449 = vpow.pop %v2448
        %v2450 = vmul.f32 %v2433, 1.442695
        %v2451 = vpow.pop %v2450
        %v2452 = vmul.f32 %v2434, 1.442695
        %v2453 = vpow.pop %v2452
        %v2454 = vmul.f32 %v2435, 1.442695
        %v2455 = vpow.pop %v2454
        %v2456 = vmul.f32 %v2436, 1.442695
        %v2457 = vpow.pop %v2456
        %v2458 = vmul.f32 %v2437, 1.442695
        %v2459 = vpow.pop %v2458
        %v2460 = vmul.f32 %v2438, 1.442695
        %v2461 = vpow.pop %v2460
        %v2462 = vmul.f32 %v2439, 1.442695
        %v2463 = vpow.pop %v2462
        %v2464 = vsel %vm1150, %v2441, 0.0
        %2465 = vadd.xlane.f32.xlu0 %v2464
        %v2466 = vpop.xlane.xlu0 %2465
        %v2467 = vsel %vm1150, %v2443, 0.0
        %2468 = vadd.xlane.f32.xlu0 %v2467
        %v2469 = vpop.xlane.xlu0 %2468
        %v2470 = vsel %vm1157, %v2445, 0.0
        %2471 = vadd.xlane.f32.xlu0 %v2470
        %v2472 = vpop.xlane.xlu0 %2471
        %v2473 = vsel %vm1150, %v2447, 0.0
        %2474 = vadd.xlane.f32.xlu0 %v2473
        %v2475 = vpop.xlane.xlu0 %2474
        %v2476 = vsel %vm1150, %v2449, 0.0
        %2477 = vadd.xlane.f32.xlu0 %v2476
        %v2478 = vpop.xlane.xlu0 %2477
        %v2479 = vsel %vm1157, %v2451, 0.0
        %2480 = vadd.xlane.f32.xlu0 %v2479
        %v2481 = vpop.xlane.xlu0 %2480
        %v2482 = vsel %vm1150, %v2453, 0.0
        %2483 = vadd.xlane.f32.xlu0 %v2482
        %v2484 = vpop.xlane.xlu0 %2483
        %v2485 = vsel %vm1150, %v2455, 0.0
        %2486 = vadd.xlane.f32.xlu0 %v2485
        %v2487 = vpop.xlane.xlu0 %2486
        %v2488 = vsel %vm1157, %v2457, 0.0
        %2489 = vadd.xlane.f32.xlu0 %v2488
        %v2490 = vpop.xlane.xlu0 %2489
        %v2491 = vsel %vm1150, %v2459, 0.0
        %2492 = vadd.xlane.f32.xlu0 %v2491
        %v2493 = vpop.xlane.xlu0 %2492
        %v2494 = vsel %vm1150, %v2461, 0.0
        %2495 = vadd.xlane.f32.xlu0 %v2494
        %v2496 = vpop.xlane.xlu0 %2495
        %v2497 = vsel %vm1157, %v2463, 0.0
        %2498 = vadd.xlane.f32.xlu0 %v2497
        %v2499 = vpop.xlane.xlu0 %2498
        %v2500 = vrcp.pop %v2466
        %v2501 = vrcp.pop %v2469
        %v2502 = vrcp.pop %v2472
        %v2503 = vrcp.pop %v2475
        %v2504 = vrcp.pop %v2478
        %v2505 = vrcp.pop %v2481
        %v2506 = vrcp.pop %v2484
        %v2507 = vrcp.pop %v2487
        %v2508 = vrcp.pop %v2490
        %v2509 = vrcp.pop %v2493
        %v2510 = vrcp.pop %v2496
        %v2511 = vrcp.pop %v2499
        %v2512 = vmul.f32 %v2441, %v2500
        %v2513 = vmul.f32 %v2443, %v2501
        %v2514 = vmul.f32 %v2445, %v2502
        %v2515 = vmul.f32 %v2447, %v2503
        %v2516 = vmul.f32 %v2449, %v2504
        %v2517 = vmul.f32 %v2451, %v2505
        %v2518 = vmul.f32 %v2453, %v2506
        %v2519 = vmul.f32 %v2455, %v2507
        %v2520 = vmul.f32 %v2457, %v2508
        %v2521 = vmul.f32 %v2459, %v2509
        %v2522 = vmul.f32 %v2461, %v2510
        %v2523 = vmul.f32 %v2463, %v2511
        %v2524 = vpack.c.bf16 %v2513, %v2512
        %v2525 = vpack.c.bf16 %v2514, %v2514
        %v2526 = vpack.c.bf16 %v2516, %v2515
        %v2527 = vpack.c.bf16 %v2517, %v2517
        %v2528 = vpack.c.bf16 %v2519, %v2518
        %v2529 = vpack.c.bf16 %v2520, %v2520
        %v2530 = vpack.c.bf16 %v2522, %v2521
        %v2531 = vpack.c.bf16 %v2523, %v2523
        %2532 = vrot.lane.b32.xlu0 %v2108, 64
        %v2533 = vpop.permute.xlu0 %2532
        %2534 = vrot.lane.b32.xlu0 %v2109, 64
        %v2535 = vpop.permute.xlu0 %2534
        %v2538 = vsel %vm1150, %v2524, 0
        %v2541 = vsel %vm1150, %v2525, 0
        %v2544 = vand.u32 %v2535, %v1305
        %2546 = vmatprep.subr.bf16.mxu0 0
        %2547 = vmatpush1.bf16.msra.mxu0 0
        %2548 = vmatprep.subr.bf16.mxu0 0
        %2549 = vmatpush1.bf16.msra.mxu0 0
        %2550 = vmatprep.subr.bf16.mxu0 0
        %2551 = vmatpush1.bf16.msra.mxu0 0
        %2552 = vmatprep.subr.bf16.mxu0 0
        %2553 = vmatpush1.bf16.msra.mxu0 0
        %2554 = vmatprep.subr.bf16.mxu0 0
        %2555 = vmatpush1.bf16.msra.mxu0 0
        %2556 = vmatprep.subr.bf16.mxu0 0
        %2557 = vmatpush1.bf16.msra.mxu0 0
        %2558 = vmatprep.subr.bf16.mxu0 0
        %2559 = vmatpush1.bf16.msra.mxu0 %v2544
        %2560 = vmatprep.subr.bf16.mxu0 0
        %2561 = vmatpush1.bf16.msra.mxu0 %v2533
        %2562 = vmatprep.subr.bf16.mxu0 0
        %2563 = vmatpush2.bf16.msra.mxu0 0
        %2564 = vmatprep.subr.bf16.mxu0 0
        %2565 = vmatpush2.bf16.msra.mxu0 0
        %2566 = vmatprep.subr.bf16.mxu0 0
        %2567 = vmatpush2.bf16.msra.mxu0 0
        %2568 = vmatprep.subr.bf16.mxu0 0
        %2569 = vmatpush2.bf16.msra.mxu0 0
        %2570 = vmatprep.subr.bf16.mxu0 0
        %2571 = vmatpush2.bf16.msra.mxu0 0
        %2572 = vmatprep.subr.bf16.mxu0 0
        %2573 = vmatpush2.bf16.msra.mxu0 0
        %2574 = vmatprep.subr.bf16.mxu0 0
        %2575 = vmatpush2.bf16.msra.mxu0 0
        %2576 = vmatprep.subr.bf16.mxu0 0
        %2577 = vmatpush2.bf16.msra.mxu0 0
        %2578 = vmatprep.mubr.bf16.mxu0 0
        %2579 = vmatmul.mubr.bf16.gmra.mxu0 %v2538
        %v2580 = vpop.f32.mrf.mxu0
        %v2581 = vadd.f32 0.0, %v2580
        %v2582 = vpop.f32.mrf.mxu0
        %v2583 = vpop.f32.mrf.mxu0
        %v2584 = vadd.f32 0.0, %v2583
        %v2585 = vpop.f32.mrf.mxu0
        %2586 = vmatprep.mubr.bf16.mxu0 0
        %2587 = vmatmul.mubr.bf16.gmra.mxu0 %v2541
        %v2588 = vpop.f32.mrf.mxu0
        %v2589 = vadd.f32 0.0, %v2588
        %v2590 = vpop.f32.mrf.mxu0
        %v2591 = vpop.f32.mrf.mxu0
        %v2592 = vpop.f32.mrf.mxu0
        %2593 = vdwg.mxu0
        %2594 = vrot.lane.b32.xlu0 %v2110, 64
        %v2595 = vpop.permute.xlu0 %2594
        %2596 = vrot.lane.b32.xlu0 %v2111, 64
        %v2597 = vpop.permute.xlu0 %2596
        %v2600 = vsel %vm1150, %v2526, 0
        %v2603 = vsel %vm1150, %v2527, 0
        %v2606 = vand.u32 %v2597, %v1305
        %2608 = vmatprep.subr.bf16.mxu0 0
        %2609 = vmatpush1.bf16.msra.mxu0 0
        %2610 = vmatprep.subr.bf16.mxu0 0
        %2611 = vmatpush1.bf16.msra.mxu0 0
        %2612 = vmatprep.subr.bf16.mxu0 0
        %2613 = vmatpush1.bf16.msra.mxu0 0
        %2614 = vmatprep.subr.bf16.mxu0 0
        %2615 = vmatpush1.bf16.msra.mxu0 0
        %2616 = vmatprep.subr.bf16.mxu0 0
        %2617 = vmatpush1.bf16.msra.mxu0 0
        %2618 = vmatprep.subr.bf16.mxu0 0
        %2619 = vmatpush1.bf16.msra.mxu0 0
        %2620 = vmatprep.subr.bf16.mxu0 0
        %2621 = vmatpush1.bf16.msra.mxu0 %v2606
        %2622 = vmatprep.subr.bf16.mxu0 0
        %2623 = vmatpush1.bf16.msra.mxu0 %v2595
        %2624 = vmatprep.subr.bf16.mxu0 0
        %2625 = vmatpush2.bf16.msra.mxu0 0
        %2626 = vmatprep.subr.bf16.mxu0 0
        %2627 = vmatpush2.bf16.msra.mxu0 0
        %2628 = vmatprep.subr.bf16.mxu0 0
        %2629 = vmatpush2.bf16.msra.mxu0 0
        %2630 = vmatprep.subr.bf16.mxu0 0
        %2631 = vmatpush2.bf16.msra.mxu0 0
        %2632 = vmatprep.subr.bf16.mxu0 0
        %2633 = vmatpush2.bf16.msra.mxu0 0
        %2634 = vmatprep.subr.bf16.mxu0 0
        %2635 = vmatpush2.bf16.msra.mxu0 0
        %2636 = vmatprep.subr.bf16.mxu0 0
        %2637 = vmatpush2.bf16.msra.mxu0 0
        %2638 = vmatprep.subr.bf16.mxu0 0
        %2639 = vmatpush2.bf16.msra.mxu0 0
        %2640 = vmatprep.mubr.bf16.mxu0 0
        %2641 = vmatmul.mubr.bf16.gmra.mxu0 %v2600
        %v2642 = vpop.f32.mrf.mxu0
        %v2643 = vadd.f32 0.0, %v2642
        %v2644 = vpop.f32.mrf.mxu0
        %v2645 = vpop.f32.mrf.mxu0
        %v2646 = vadd.f32 0.0, %v2645
        %v2647 = vpop.f32.mrf.mxu0
        %2648 = vmatprep.mubr.bf16.mxu0 0
        %2649 = vmatmul.mubr.bf16.gmra.mxu0 %v2603
        %v2650 = vpop.f32.mrf.mxu0
        %v2651 = vadd.f32 0.0, %v2650
        %v2652 = vpop.f32.mrf.mxu0
        %v2653 = vpop.f32.mrf.mxu0
        %v2654 = vpop.f32.mrf.mxu0
        %2655 = vdwg.mxu0
        %2656 = vrot.lane.b32.xlu0 %v2112, 64
        %v2657 = vpop.permute.xlu0 %2656
        %2658 = vrot.lane.b32.xlu0 %v2113, 64
        %v2659 = vpop.permute.xlu0 %2658
        %v2662 = vsel %vm1150, %v2528, 0
        %v2665 = vsel %vm1150, %v2529, 0
        %v2668 = vand.u32 %v2659, %v1305
        %2670 = vmatprep.subr.bf16.mxu0 0
        %2671 = vmatpush1.bf16.msra.mxu0 0
        %2672 = vmatprep.subr.bf16.mxu0 0
        %2673 = vmatpush1.bf16.msra.mxu0 0
        %2674 = vmatprep.subr.bf16.mxu0 0
        %2675 = vmatpush1.bf16.msra.mxu0 0
        %2676 = vmatprep.subr.bf16.mxu0 0
        %2677 = vmatpush1.bf16.msra.mxu0 0
        %2678 = vmatprep.subr.bf16.mxu0 0
        %2679 = vmatpush1.bf16.msra.mxu0 0
        %2680 = vmatprep.subr.bf16.mxu0 0
        %2681 = vmatpush1.bf16.msra.mxu0 0
        %2682 = vmatprep.subr.bf16.mxu0 0
        %2683 = vmatpush1.bf16.msra.mxu0 %v2668
        %2684 = vmatprep.subr.bf16.mxu0 0
        %2685 = vmatpush1.bf16.msra.mxu0 %v2657
        %2686 = vmatprep.subr.bf16.mxu0 0
        %2687 = vmatpush2.bf16.msra.mxu0 0
        %2688 = vmatprep.subr.bf16.mxu0 0
        %2689 = vmatpush2.bf16.msra.mxu0 0
        %2690 = vmatprep.subr.bf16.mxu0 0
        %2691 = vmatpush2.bf16.msra.mxu0 0
        %2692 = vmatprep.subr.bf16.mxu0 0
        %2693 = vmatpush2.bf16.msra.mxu0 0
        %2694 = vmatprep.subr.bf16.mxu0 0
        %2695 = vmatpush2.bf16.msra.mxu0 0
        %2696 = vmatprep.subr.bf16.mxu0 0
        %2697 = vmatpush2.bf16.msra.mxu0 0
        %2698 = vmatprep.subr.bf16.mxu0 0
        %2699 = vmatpush2.bf16.msra.mxu0 0
        %2700 = vmatprep.subr.bf16.mxu0 0
        %2701 = vmatpush2.bf16.msra.mxu0 0
        %2702 = vmatprep.mubr.bf16.mxu0 0
        %2703 = vmatmul.mubr.bf16.gmra.mxu0 %v2662
        %v2704 = vpop.f32.mrf.mxu0
        %v2705 = vadd.f32 0.0, %v2704
        %v2706 = vpop.f32.mrf.mxu0
        %v2707 = vpop.f32.mrf.mxu0
        %v2708 = vadd.f32 0.0, %v2707
        %v2709 = vpop.f32.mrf.mxu0
        %2710 = vmatprep.mubr.bf16.mxu0 0
        %2711 = vmatmul.mubr.bf16.gmra.mxu0 %v2665
        %v2712 = vpop.f32.mrf.mxu0
        %v2713 = vadd.f32 0.0, %v2712
        %v2714 = vpop.f32.mrf.mxu0
        %v2715 = vpop.f32.mrf.mxu0
        %v2716 = vpop.f32.mrf.mxu0
        %2717 = vdwg.mxu0
        %2718 = vrot.lane.b32.xlu0 %v2114, 64
        %v2719 = vpop.permute.xlu0 %2718
        %2720 = vrot.lane.b32.xlu0 %v2115, 64
        %v2721 = vpop.permute.xlu0 %2720
        %v2724 = vsel %vm1150, %v2530, 0
        %v2727 = vsel %vm1150, %v2531, 0
        %v2730 = vand.u32 %v2721, %v1305
        %2732 = vmatprep.subr.bf16.mxu0 0
        %2733 = vmatpush1.bf16.msra.mxu0 0
        %2734 = vmatprep.subr.bf16.mxu0 0
        %2735 = vmatpush1.bf16.msra.mxu0 0
        %2736 = vmatprep.subr.bf16.mxu0 0
        %2737 = vmatpush1.bf16.msra.mxu0 0
        %2738 = vmatprep.subr.bf16.mxu0 0
        %2739 = vmatpush1.bf16.msra.mxu0 0
        %2740 = vmatprep.subr.bf16.mxu0 0
        %2741 = vmatpush1.bf16.msra.mxu0 0
        %2742 = vmatprep.subr.bf16.mxu0 0
        %2743 = vmatpush1.bf16.msra.mxu0 0
        %2744 = vmatprep.subr.bf16.mxu0 0
        %2745 = vmatpush1.bf16.msra.mxu0 %v2730
        %2746 = vmatprep.subr.bf16.mxu0 0
        %2747 = vmatpush1.bf16.msra.mxu0 %v2719
        %2748 = vmatprep.subr.bf16.mxu0 0
        %2749 = vmatpush2.bf16.msra.mxu0 0
        %2750 = vmatprep.subr.bf16.mxu0 0
        %2751 = vmatpush2.bf16.msra.mxu0 0
        %2752 = vmatprep.subr.bf16.mxu0 0
        %2753 = vmatpush2.bf16.msra.mxu0 0
        %2754 = vmatprep.subr.bf16.mxu0 0
        %2755 = vmatpush2.bf16.msra.mxu0 0
        %2756 = vmatprep.subr.bf16.mxu0 0
        %2757 = vmatpush2.bf16.msra.mxu0 0
        %2758 = vmatprep.subr.bf16.mxu0 0
        %2759 = vmatpush2.bf16.msra.mxu0 0
        %2760 = vmatprep.subr.bf16.mxu0 0
        %2761 = vmatpush2.bf16.msra.mxu0 0
        %2762 = vmatprep.subr.bf16.mxu0 0
        %2763 = vmatpush2.bf16.msra.mxu0 0
        %2764 = vmatprep.mubr.bf16.mxu0 0
        %2765 = vmatmul.mubr.bf16.gmra.mxu0 %v2724
        %v2766 = vpop.f32.mrf.mxu0
        %v2767 = vadd.f32 0.0, %v2766
        %v2768 = vpop.f32.mrf.mxu0
        %v2769 = vpop.f32.mrf.mxu0
        %v2770 = vadd.f32 0.0, %v2769
        %v2771 = vpop.f32.mrf.mxu0
        %2772 = vmatprep.mubr.bf16.mxu0 0
        %2773 = vmatmul.mubr.bf16.gmra.mxu0 %v2727
        %v2774 = vpop.f32.mrf.mxu0
        %v2775 = vadd.f32 0.0, %v2774
        %v2776 = vpop.f32.mrf.mxu0
        %v2777 = vpop.f32.mrf.mxu0
        %v2778 = vpop.f32.mrf.mxu0
        %2779 = vdwg.mxu0
        %2783 = vrot.lane.b32.xlu0 %v2643, 8
        %v2784 = vpop.permute.xlu0 %2783
        %2785 = vrot.lane.b32.xlu0 %v2646, 8
        %v2786 = vpop.permute.xlu0 %2785
        %2787 = vrot.lane.b32.xlu0 %v2651, 8
        %v2788 = vpop.permute.xlu0 %2787
        %2795 = vrot.lane.b32.xlu0 %v2705, 16
        %v2796 = vpop.permute.xlu0 %2795
        %2797 = vrot.lane.b32.xlu0 %v2708, 16
        %v2798 = vpop.permute.xlu0 %2797
        %2799 = vrot.lane.b32.xlu0 %v2713, 16
        %v2800 = vpop.permute.xlu0 %2799
        %2807 = vrot.lane.b32.xlu0 %v2767, 24
        %v2808 = vpop.permute.xlu0 %2807
        %2809 = vrot.lane.b32.xlu0 %v2770, 24
        %v2810 = vpop.permute.xlu0 %2809
        %2811 = vrot.lane.b32.xlu0 %v2775, 24
        %v2812 = vpop.permute.xlu0 %2811
        %v2816 = vsel %vm879, %v2581, %v2784
        %v2817 = vsel %vm879, %v2584, %v2786
        %v2818 = vsel %vm879, %v2589, %v2788
        %v2819 = vsel %vm1582, %v2816, %v2796
        %v2820 = vsel %vm1582, %v2817, %v2798
        %v2821 = vsel %vm1582, %v2818, %v2800
        %v2822 = vsel %vm1586, %v2819, %v2808
        %v2823 = vsel %vm1586, %v2820, %v2810
        %v2824 = vsel %vm1586, %v2821, %v2812
        %v2825 = vpack.c.bf16 %v2823, %v2822
        %v2826 = vpack.c.bf16 %v2824, %v2824
        %s2827 = scalar_lea.vmem %s7, 16
        %v2828 = vld [vmem:[%s2827] sm:$0xf]
        %v2829 = vld [vmem:[%s2827 + $0x4] sm:$0xf]
        %v2830 = vld [vmem:[%s2827 + $0x8] sm:$0xf]
        %v2831 = vld [vmem:[%s2827 + $0xc] sm:$0xf]
        %s2832 = scalar_lea.vmem %s8, 1
        %v2833 = vld [vmem:[%s2832] sm:$0x1]
        %v2835 = vlaneseq
        %v2836 = vshrl.u32 %v2835, 7
        %v2837 = vsub.s32 0, %v2836
        %v2838 = vrot.slane %v2833, %v2837
        %v2844 = vunpack.c.l.b16 %v2828
        %v2845 = vunpack.c.l.b16 %v2829
        %v2846 = vunpack.c.l.b16 %v2830
        %v2847 = vunpack.c.l.b16 %v2831
        %v2848 = vpack.c.b16 %v2845, %v2844
        %v2849 = vpack.c.b16 %v2847, %v2846
        %v2853 = vsel %vm696, %v2825, 0
        %v2856 = vsel %vm696, %v2826, 0
        %2858 = vmatprep.subr.bf16.mxu0 0
        %2859 = vmatpush1.bf16.msra.mxu0 0
        %2860 = vmatprep.subr.bf16.mxu0 0
        %2861 = vmatpush1.bf16.msra.mxu0 0
        %2862 = vmatprep.subr.bf16.mxu0 0
        %2863 = vmatpush1.bf16.msra.mxu0 0
        %2864 = vmatprep.subr.bf16.mxu0 0
        %2865 = vmatpush1.bf16.msra.mxu0 0
        %2866 = vmatprep.subr.bf16.mxu0 0
        %2867 = vmatpush1.bf16.msra.mxu0 0
        %2868 = vmatprep.subr.bf16.mxu0 0
        %2869 = vmatpush1.bf16.msra.mxu0 0
        %2870 = vmatprep.subr.bf16.mxu0 0
        %2871 = vmatpush1.bf16.msra.mxu0 %v2849
        %2872 = vmatprep.subr.bf16.mxu0 0
        %2873 = vmatpush1.bf16.msra.mxu0 %v2848
        %2874 = vmatprep.subr.bf16.mxu0 0
        %2875 = vmatpush2.bf16.msra.mxu0 0
        %2876 = vmatprep.subr.bf16.mxu0 0
        %2877 = vmatpush2.bf16.msra.mxu0 0
        %2878 = vmatprep.subr.bf16.mxu0 0
        %2879 = vmatpush2.bf16.msra.mxu0 0
        %2880 = vmatprep.subr.bf16.mxu0 0
        %2881 = vmatpush2.bf16.msra.mxu0 0
        %2882 = vmatprep.subr.bf16.mxu0 0
        %2883 = vmatpush2.bf16.msra.mxu0 0
        %2884 = vmatprep.subr.bf16.mxu0 0
        %2885 = vmatpush2.bf16.msra.mxu0 0
        %2886 = vmatprep.subr.bf16.mxu0 0
        %2887 = vmatpush2.bf16.msra.mxu0 0
        %2888 = vmatprep.subr.bf16.mxu0 0
        %2889 = vmatpush2.bf16.msra.mxu0 0
        %2890 = vmatprep.mubr.bf16.mxu0 0
        %2891 = vmatmul.mubr.bf16.gmra.mxu0 %v2853
        %v2892 = vpop.f32.mrf.mxu0
        %v2893 = vadd.f32 %v2838, %v2892
        %v2894 = vpop.f32.mrf.mxu0
        %v2895 = vpop.f32.mrf.mxu0
        %v2896 = vadd.f32 %v2838, %v2895
        %v2897 = vpop.f32.mrf.mxu0
        %2898 = vmatprep.mubr.bf16.mxu0 0
        %2899 = vmatmul.mubr.bf16.gmra.mxu0 %v2856
        %v2900 = vpop.f32.mrf.mxu0
        %v2901 = vadd.f32 %v2838, %v2900
        %v2902 = vpop.f32.mrf.mxu0
        %v2903 = vpop.f32.mrf.mxu0
        %v2904 = vpop.f32.mrf.mxu0
        %2905 = vdwg.mxu0
        %v2906 = vadd.f32 %v1933, %v2893
        %v2907 = vadd.f32 %v1934, %v2896
        %v2908 = vadd.f32 %v1935, %v2901
        %s2909 = scalar_lea.vmem %s9, 1
        %v2910 = vld [vmem:[%s2909] sm:$0x1]
        %s2911 = scalar_lea.vmem %s10, 1
        %v2912 = vld [vmem:[%s2911] sm:$0x1]
        %v2913 = vsel %vm696, %v2906, 0.0
        %2914 = vadd.xlane.f32.xlu0 %v2913
        %v2915 = vpop.xlane.xlu0 %2914
        %v2916 = vsel %vm696, %v2907, 0.0
        %2917 = vadd.xlane.f32.xlu0 %v2916
        %v2918 = vpop.xlane.xlu0 %2917
        %v2919 = vsel %vm703, %v2908, 0.0
        %2920 = vadd.xlane.f32.xlu0 %v2919
        %v2921 = vpop.xlane.xlu0 %2920
        %v2922 = vmul.f32 %v2915, %v707
        %v2923 = vmul.f32 %v2918, %v707
        %v2924 = vmul.f32 %v2921, %v707
        %v2925 = vsub.f32 %v2906, %v2922
        %v2926 = vsub.f32 %v2907, %v2923
        %v2927 = vsub.f32 %v2908, %v2924
        %v2928 = vmul.f32 %v2925, %v2925
        %v2929 = vmul.f32 %v2926, %v2926
        %v2930 = vmul.f32 %v2927, %v2927
        %v2931 = vsel %vm696, %v2928, 0.0
        %2932 = vadd.xlane.f32.xlu0 %v2931
        %v2933 = vpop.xlane.xlu0 %2932
        %v2934 = vsel %vm696, %v2929, 0.0
        %2935 = vadd.xlane.f32.xlu0 %v2934
        %v2936 = vpop.xlane.xlu0 %2935
        %v2937 = vsel %vm703, %v2930, 0.0
        %2938 = vadd.xlane.f32.xlu0 %v2937
        %v2939 = vpop.xlane.xlu0 %2938
        %v2940 = vmul.f32 %v2933, %v707
        %v2941 = vmul.f32 %v2936, %v707
        %v2942 = vmul.f32 %v2939, %v707
        %v2943 = vadd.f32 %v2940, 1e-05
        %v2944 = vadd.f32 %v2941, 1e-05
        %v2945 = vadd.f32 %v2942, 1e-05
        %v2946 = vrsqrt.pop %v2943
        %v2947 = vrsqrt.pop %v2944
        %v2948 = vrsqrt.pop %v2945
        %v2949 = vmul.f32 %v2925, %v2946
        %v2950 = vmul.f32 %v2926, %v2947
        %v2951 = vmul.f32 %v2927, %v2948
        %v2953 = vlaneseq
        %v2954 = vshrl.u32 %v2953, 7
        %v2955 = vsub.s32 0, %v2954
        %v2956 = vrot.slane %v2910, %v2955
        %v2958 = vmul.f32 %v2949, %v2956
        %v2959 = vmul.f32 %v2950, %v2956
        %v2960 = vmul.f32 %v2951, %v2956
        %v2962 = vlaneseq
        %v2963 = vshrl.u32 %v2962, 7
        %v2964 = vsub.s32 0, %v2963
        %v2965 = vrot.slane %v2912, %v2964
        %v2967 = vadd.f32 %v2958, %v2965
        %v2968 = vadd.f32 %v2959, %v2965
        %v2969 = vadd.f32 %v2960, %v2965
        %v2970 = vpack.c.bf16 %v2968, %v2967
        %v2971 = vpack.c.bf16 %v2969, %v2969
        %s2972 = scalar_lea.vmem %s11, 16
        %v2973 = vld [vmem:[%s2972] sm:$0xf]
        %v2974 = vld [vmem:[%s2972 + $0x4] sm:$0xf]
        %v2975 = vld [vmem:[%s2972 + $0x8] sm:$0xf]
        %v2976 = vld [vmem:[%s2972 + $0xc] sm:$0xf]
        %s2977 = scalar_lea.vmem %s12, 1
        %v2978 = vld [vmem:[%s2977] sm:$0x1]
        %v2980 = vlaneseq
        %v2981 = vshrl.u32 %v2980, 7
        %v2982 = vsub.s32 0, %v2981
        %v2983 = vrot.slane %v2978, %v2982
        %v2989 = vunpack.c.l.b16 %v2973
        %v2990 = vunpack.c.l.b16 %v2974
        %v2991 = vunpack.c.l.b16 %v2975
        %v2992 = vunpack.c.l.b16 %v2976
        %v2993 = vpack.c.b16 %v2990, %v2989
        %v2994 = vpack.c.b16 %v2992, %v2991
        %v2998 = vsel %vm696, %v2970, 0
        %v3001 = vsel %vm696, %v2971, 0
        %3003 = vmatprep.subr.bf16.mxu0 0
        %3004 = vmatpush1.bf16.msra.mxu0 0
        %3005 = vmatprep.subr.bf16.mxu0 0
        %3006 = vmatpush1.bf16.msra.mxu0 0
        %3007 = vmatprep.subr.bf16.mxu0 0
        %3008 = vmatpush1.bf16.msra.mxu0 0
        %3009 = vmatprep.subr.bf16.mxu0 0
        %3010 = vmatpush1.bf16.msra.mxu0 0
        %3011 = vmatprep.subr.bf16.mxu0 0
        %3012 = vmatpush1.bf16.msra.mxu0 0
        %3013 = vmatprep.subr.bf16.mxu0 0
        %3014 = vmatpush1.bf16.msra.mxu0 0
        %3015 = vmatprep.subr.bf16.mxu0 0
        %3016 = vmatpush1.bf16.msra.mxu0 %v2994
        %3017 = vmatprep.subr.bf16.mxu0 0
        %3018 = vmatpush1.bf16.msra.mxu0 %v2993
        %3019 = vmatprep.subr.bf16.mxu0 0
        %3020 = vmatpush2.bf16.msra.mxu0 0
        %3021 = vmatprep.subr.bf16.mxu0 0
        %3022 = vmatpush2.bf16.msra.mxu0 0
        %3023 = vmatprep.subr.bf16.mxu0 0
        %3024 = vmatpush2.bf16.msra.mxu0 0
        %3025 = vmatprep.subr.bf16.mxu0 0
        %3026 = vmatpush2.bf16.msra.mxu0 0
        %3027 = vmatprep.subr.bf16.mxu0 0
        %3028 = vmatpush2.bf16.msra.mxu0 0
        %3029 = vmatprep.subr.bf16.mxu0 0
        %3030 = vmatpush2.bf16.msra.mxu0 0
        %3031 = vmatprep.subr.bf16.mxu0 0
        %3032 = vmatpush2.bf16.msra.mxu0 0
        %3033 = vmatprep.subr.bf16.mxu0 0
        %3034 = vmatpush2.bf16.msra.mxu0 0
        %3035 = vmatprep.mubr.bf16.mxu0 0
        %3036 = vmatmul.mubr.bf16.gmra.mxu0 %v2998
        %v3037 = vpop.f32.mrf.mxu0
        %v3038 = vadd.f32 %v2983, %v3037
        %v3039 = vpop.f32.mrf.mxu0
        %v3040 = vpop.f32.mrf.mxu0
        %v3041 = vadd.f32 %v2983, %v3040
        %v3042 = vpop.f32.mrf.mxu0
        %3043 = vmatprep.mubr.bf16.mxu0 0
        %3044 = vmatmul.mubr.bf16.gmra.mxu0 %v3001
        %v3045 = vpop.f32.mrf.mxu0
        %v3046 = vadd.f32 %v2983, %v3045
        %v3047 = vpop.f32.mrf.mxu0
        %v3048 = vpop.f32.mrf.mxu0
        %v3049 = vpop.f32.mrf.mxu0
        %3050 = vdwg.mxu0
        %v3051 = vmul.f32 %v3038, 0.5
        %v3052 = vmul.f32 %v3041, 0.5
        %v3053 = vmul.f32 %v3046, 0.5
        %v3054 = vmul.f32 %v3038, 0.044715
        %v3055 = vmul.f32 %v3041, 0.044715
        %v3056 = vmul.f32 %v3046, 0.044715
        %v3057 = vmul.f32 %v3054, %v3038
        %v3058 = vmul.f32 %v3055, %v3041
        %v3059 = vmul.f32 %v3056, %v3046
        %v3060 = vmul.f32 %v3057, %v3038
        %v3061 = vmul.f32 %v3058, %v3041
        %v3062 = vmul.f32 %v3059, %v3046
        %v3063 = vadd.f32 %v3038, %v3060
        %v3064 = vadd.f32 %v3041, %v3061
        %v3065 = vadd.f32 %v3046, %v3062
        %v3066 = vmul.f32 %v3063, 0.7978846
        %v3067 = vmul.f32 %v3064, 0.7978846
        %v3068 = vmul.f32 %v3065, 0.7978846
        %v3069 = vtanh.pop %v3066
        %v3070 = vtanh.pop %v3067
        %v3071 = vtanh.pop %v3068
        %v3072 = vadd.f32 %v3069, 1.0
        %v3073 = vadd.f32 %v3070, 1.0
        %v3074 = vadd.f32 %v3071, 1.0
        %v3075 = vmul.f32 %v3051, %v3072
        %v3076 = vmul.f32 %v3052, %v3073
        %v3077 = vmul.f32 %v3053, %v3074
        %v3078 = vpack.c.bf16 %v3076, %v3075
        %v3079 = vpack.c.bf16 %v3077, %v3077
        %s3080 = scalar_lea.vmem %s13, 32
        %v3081 = vld [vmem:[%s3080] sm:$0xf]
        %v3082 = vld [vmem:[%s3080 + $0x4] sm:$0xf]
        %v3083 = vld [vmem:[%s3080 + $0x8] sm:$0xf]
        %v3084 = vld [vmem:[%s3080 + $0xc] sm:$0xf]
        %v3085 = vld [vmem:[%s3080 + $0x10] sm:$0xf]
        %v3086 = vld [vmem:[%s3080 + $0x14] sm:$0xf]
        %v3087 = vld [vmem:[%s3080 + $0x18] sm:$0xf]
        %v3088 = vld [vmem:[%s3080 + $0x1c] sm:$0xf]
        %s3089 = scalar_lea.vmem %s14, 1
        %v3090 = vld [vmem:[%s3089] sm:$0x1]
        %v3092 = vlaneseq
        %v3093 = vshrl.u32 %v3092, 7
        %v3094 = vsub.s32 0, %v3093
        %v3095 = vrot.slane %v3090, %v3094
        %v3105 = vunpack.c.l.b16 %v3081
        %v3106 = vunpack.c.l.b16 %v3082
        %v3107 = vunpack.c.l.b16 %v3083
        %v3108 = vunpack.c.l.b16 %v3084
        %v3109 = vunpack.c.l.b16 %v3085
        %v3110 = vunpack.c.l.b16 %v3086
        %v3111 = vunpack.c.l.b16 %v3087
        %v3112 = vunpack.c.l.b16 %v3088
        %v3113 = vpack.c.b16 %v3106, %v3105
        %v3114 = vpack.c.b16 %v3108, %v3107
        %v3115 = vpack.c.b16 %v3110, %v3109
        %v3116 = vpack.c.b16 %v3112, %v3111
        %v3122 = vsel %vm1878, %v3078, 0
        %v3125 = vsel %vm1878, %v3079, 0
        %3127 = vmatprep.subr.bf16.mxu0 0
        %3128 = vmatpush1.bf16.msra.mxu0 0
        %3129 = vmatprep.subr.bf16.mxu0 0
        %3130 = vmatpush1.bf16.msra.mxu0 0
        %3131 = vmatprep.subr.bf16.mxu0 0
        %3132 = vmatpush1.bf16.msra.mxu0 0
        %3133 = vmatprep.subr.bf16.mxu0 0
        %3134 = vmatpush1.bf16.msra.mxu0 0
        %3135 = vmatprep.subr.bf16.mxu0 0
        %3136 = vmatpush1.bf16.msra.mxu0 %v3116
        %3137 = vmatprep.subr.bf16.mxu0 0
        %3138 = vmatpush1.bf16.msra.mxu0 %v3115
        %3139 = vmatprep.subr.bf16.mxu0 0
        %3140 = vmatpush1.bf16.msra.mxu0 %v3114
        %3141 = vmatprep.subr.bf16.mxu0 0
        %3142 = vmatpush1.bf16.msra.mxu0 %v3113
        %3143 = vmatprep.subr.bf16.mxu0 0
        %3144 = vmatpush2.bf16.msra.mxu0 0
        %3145 = vmatprep.subr.bf16.mxu0 0
        %3146 = vmatpush2.bf16.msra.mxu0 0
        %3147 = vmatprep.subr.bf16.mxu0 0
        %3148 = vmatpush2.bf16.msra.mxu0 0
        %3149 = vmatprep.subr.bf16.mxu0 0
        %3150 = vmatpush2.bf16.msra.mxu0 0
        %3151 = vmatprep.subr.bf16.mxu0 0
        %3152 = vmatpush2.bf16.msra.mxu0 0
        %3153 = vmatprep.subr.bf16.mxu0 0
        %3154 = vmatpush2.bf16.msra.mxu0 0
        %3155 = vmatprep.subr.bf16.mxu0 0
        %3156 = vmatpush2.bf16.msra.mxu0 0
        %3157 = vmatprep.subr.bf16.mxu0 0
        %3158 = vmatpush2.bf16.msra.mxu0 0
        %3159 = vmatprep.mubr.bf16.mxu0 0
        %3160 = vmatmul.mubr.bf16.gmra.mxu0 %v3122
        %v3161 = vpop.f32.mrf.mxu0
        %v3162 = vadd.f32 %v3095, %v3161
        %v3163 = vpop.f32.mrf.mxu0
        %v3164 = vpop.f32.mrf.mxu0
        %v3165 = vpop.f32.mrf.mxu0
        %3166 = vmatprep.mubr.bf16.mxu0 0
        %3167 = vmatmul.mubr.bf16.gmra.mxu0 %v3125
        %v3168 = vpop.f32.mrf.mxu0
        %v3169 = vpop.f32.mrf.mxu0
        %v3170 = vpop.f32.mrf.mxu0
        %v3171 = vpop.f32.mrf.mxu0
        %3172 = vdwg.mxu0
        %v3173 = vadd.f32 %v2906, %v3162
        %v3174 = vld [vmem:[%s15] sm:$0x1]
        %v3175 = vld [vmem:[%s16] sm:$0x1]
        %v3176 = vsel %vm703, %v3173, 0.0
        %3177 = vadd.xlane.f32.xlu0 %v3176
        %v3178 = vpop.xlane.xlu0 %3177
        %v3179 = vmul.f32 %v3178, %v707
        %v3180 = vsub.f32 %v3173, %v3179
        %v3181 = vmul.f32 %v3180, %v3180
        %v3182 = vsel %vm703, %v3181, 0.0
        %3183 = vadd.xlane.f32.xlu0 %v3182
        %v3184 = vpop.xlane.xlu0 %3183
        %v3185 = vmul.f32 %v3184, %v707
        %v3186 = vadd.f32 %v3185, 1e-05
        %v3187 = vrsqrt.pop %v3186
        %v3188 = vmul.f32 %v3180, %v3187
        %v3189 = vmul.f32 %v3188, %v3174
        %v3190 = vadd.f32 %v3189, %v3175
        %v3191 = vpack.c.bf16 %v3190, %v3190
        %v3192 = vld [vmem:[%s17] sm:$0xf]
        %v3193 = vld [vmem:[%s17 + $0x4] sm:$0xf]
        %v3194 = vld [vmem:[%s17 + $0x8] sm:$0xf]
        %v3195 = vld [vmem:[%s17 + $0xc] sm:$0xf]
        %v3196 = vld [vmem:[%s18] sm:$0x1]
        %v3201 = vunpack.c.l.b16 %v3192
        %v3202 = vunpack.c.l.b16 %v3193
        %v3203 = vunpack.c.l.b16 %v3194
        %v3204 = vunpack.c.l.b16 %v3195
        %v3205 = vpack.c.b16 %v3202, %v3201
        %v3206 = vpack.c.b16 %v3204, %v3203
        %v3210 = vsel %vm696, %v3191, 0
        %3212 = vmatprep.subr.bf16.mxu0 0
        %3213 = vmatpush1.bf16.msra.mxu0 0
        %3214 = vmatprep.subr.bf16.mxu0 0
        %3215 = vmatpush1.bf16.msra.mxu0 0
        %3216 = vmatprep.subr.bf16.mxu0 0
        %3217 = vmatpush1.bf16.msra.mxu0 0
        %3218 = vmatprep.subr.bf16.mxu0 0
        %3219 = vmatpush1.bf16.msra.mxu0 0
        %3220 = vmatprep.subr.bf16.mxu0 0
        %3221 = vmatpush1.bf16.msra.mxu0 0
        %3222 = vmatprep.subr.bf16.mxu0 0
        %3223 = vmatpush1.bf16.msra.mxu0 0
        %3224 = vmatprep.subr.bf16.mxu0 0
        %3225 = vmatpush1.bf16.msra.mxu0 %v3206
        %3226 = vmatprep.subr.bf16.mxu0 0
        %3227 = vmatpush1.bf16.msra.mxu0 %v3205
        %3228 = vmatprep.subr.bf16.mxu0 0
        %3229 = vmatpush2.bf16.msra.mxu0 0
        %3230 = vmatprep.subr.bf16.mxu0 0
        %3231 = vmatpush2.bf16.msra.mxu0 0
        %3232 = vmatprep.subr.bf16.mxu0 0
        %3233 = vmatpush2.bf16.msra.mxu0 0
        %3234 = vmatprep.subr.bf16.mxu0 0
        %3235 = vmatpush2.bf16.msra.mxu0 0
        %3236 = vmatprep.subr.bf16.mxu0 0
        %3237 = vmatpush2.bf16.msra.mxu0 0
        %3238 = vmatprep.subr.bf16.mxu0 0
        %3239 = vmatpush2.bf16.msra.mxu0 0
        %3240 = vmatprep.subr.bf16.mxu0 0
        %3241 = vmatpush2.bf16.msra.mxu0 0
        %3242 = vmatprep.subr.bf16.mxu0 0
        %3243 = vmatpush2.bf16.msra.mxu0 0
        %3244 = vmatprep.mubr.bf16.mxu0 0
        %3245 = vmatmul.mubr.bf16.gmra.mxu0 %v3210
        %v3246 = vpop.f32.mrf.mxu0
        %v3247 = vadd.f32 %v3196, %v3246
        %v3248 = vpop.f32.mrf.mxu0
        %v3249 = vpop.f32.mrf.mxu0
        %v3250 = vpop.f32.mrf.mxu0
        %3251 = vdwg.mxu0
        %vm3252 = vcmask 73728
        %3253 = vst.msk [vmem:[%s594] sm:$0x1] %vm3252, %v3247
        %s3254 = sand.u32 %s445, 1
        %s3255 = scalar_lea.sflag [#allocation3], %s3254
        %s3256 = sand.u32 %s445, 1
        %s3257 = scalar_lea.vmem [#allocation2], %s3256
        // Predicated region
        $region97: #{vit_forward.1} parent=95 // pred_check
          %p3258 = pneg %p455
        $region98: #{vit_forward.1} parent=95 // pred_check_branch
          %3260 = sbr.rel (%p3258) target = $region100
        $region99: #{vit_forward.1} parent=95 // pred_region
          %s3262 = ssub.s32 16, 16
          %3263 = vsyncadd %s3255, %s3262
          %s3264 = smul.addr %s33, 16
          %s3265 = scalar_lea.hbm %s19, %s3264
          %s3267 = sshll.u32 %s3257, 4
          %s3268 = int_to_ptr.vmem [resolvable:$true] %s3267
          %3270 = dma.vmem_to_hbm [thread:$0]  %s3268, 16, %s3265, %s3255
        $region100: #{vit_forward.1} parent=95 // pred_fallthru
          _
      $region96: #{vit_forward.1} parent=5 // pred_fallthru
        _
      %p3271 = scmp.le.s32.totalorder 2, %s28
      // Predicated region
      $region101: #{vit_forward.1} parent=5 // pred_check
        %p3272 = pneg %p3271
      $region102: #{vit_forward.1} parent=5 // pred_check_branch
        %3274 = sbr.rel (%p3272) target = $region104
      $region103: #{vit_forward.1} parent=5 // pred_region
        %s3275 = ssub.s32 %s28, 2
        // Predicated region
        $region105: #{vit_forward.1} parent=103 // pred_check
          %p3276 = pneg %p461
        $region106: #{vit_forward.1} parent=103 // pred_check_branch
          %3278 = sbr.rel (%p3276) target = $region108
        $region107: #{vit_forward.1} parent=103 // pred_region
          %s3279 = sand.u32 %s446, 1
          %s3280 = scalar_lea.sflag [#allocation3], %s3279
          %s3281 = sand.u32 %s446, 1
          %s3282 = scalar_lea.vmem [#allocation2], %s3281
          %3283 = dma.done %s3280, 16
        $region108: #{vit_forward.1} parent=103 // pred_fallthru
          _
      $region104: #{vit_forward.1} parent=5 // pred_fallthru
        _
    $region6: #{vit_forward.1} parent=1 // loop_footer
      %s32 = sadd.s32 1, %s28
    $region7: #{vit_forward.1} parent=1 // loop_footer_branch
      %27 = sbr.rel target = $region3
    $region8: #{vit_forward.1} parent=1 // loop_exit
      _
    %3284 = vsyncpa [#allocation3], 1
    %s3285 = scalar_lea.sflag [#allocation3], 1
    %3286 = vsyncpa %s3285, 1

</llo_original>
